<compile_context>
chip_gen: v6e
topology: v6e:2x2x1
jax: 0.10.0
libtpu: 0.0.40
codegen_flags: <defaults>
</compile_context>

<pallas_src>
import functools

import jax
import jax.numpy as jnp
from jax.experimental import pallas as pl
from jax.experimental.pallas import tpu as pltpu


# -----------------------------------------------------------------------------
# Kernel: conv3x3 -> +b1 -> LeakyReLU -> conv3x3 (+ fused 1x1 downsample) -> +b2
#         -> (+ identity) -> LeakyReLU       (all BN scales pre-folded into W)
# -----------------------------------------------------------------------------
def _basic_block_kernel(x_ref, mask_ref, w1_ref, b1_ref, w2_ref, b2_ref, *rest,
                        Mc, Wp, OUT0, planes, alpha, has_downsample):
    """One batch-chunk (batch_tile images packed along the flat pixel axis) per step.

    x_ref   : (1, Cin_p, Nx)  bf16 channel-first, zero-bordered, padded-flat images
    mask_ref: (1, Mc)         f32, 1.0 at valid output pixels, 0.0 at halo/junk cols
    w1_ref  : (9*P, Cin_p)    bf16, conv1 taps stacked on sublanes, BN1 scale folded
    b1_ref  : (P, 1)          f32, BN1 shift
    w2_ref  : (9*P, P)        bf16, conv2 taps, BN2 scale folded
    b2_ref  : (P, 1)          f32, BN2 shift (+ BNd shift when the downsample is fused)
    rest    : [wd_ref (P, Cin_p),]  o_ref (1, P, Mc),  ybuf (P, Nx) scratch
    """
    if has_downsample:
        wd_ref, o_ref, ybuf = rest
    else:
        o_ref, ybuf = rest

    nbuf = ybuf.shape[1]
    base = OUT0 - Wp - 1              # flat offset of the (dy=0, dx=0) tap window
    f32 = jnp.float32

    def conv3x3(w_ref, load):
        # 3x3 conv as 9 shifted-slice matmuls accumulated in f32 registers: no im2col
        # scratch, no unaligned vector-store traffic (slices feed the MXU directly).
        acc = None
        for dy in range(3):
            for dx in range(3):
                t = dy * 3 + dx
                part = jnp.dot(w_ref[t * planes:(t + 1) * planes, :],
                               load(base + dy * Wp + dx),
                               preferred_element_type=f32)
                acc = part if acc is None else acc + part
        return acc

    # ---- conv1 + BN1 (scale folded, bias here) + LeakyReLU ----------------------
    y = conv3x3(w1_ref, lambda off: x_ref[0, :, off:off + Mc]) + b1_ref[...]
    y = jnp.maximum(y, alpha * y) * mask_ref[...]   # mask zeroes halo / junk columns

    # Re-embed into the zero-bordered padded-flat layout so conv2 sees a clean halo.
    # Only the two 128-lane halos are (re)zeroed each step (cheap, megacore-safe).
    ybuf[:, :OUT0] = jnp.zeros((planes, OUT0), ybuf.dtype)
    ybuf[:, OUT0 + Mc:] = jnp.zeros((planes, nbuf - OUT0 - Mc), ybuf.dtype)
    ybuf[:, OUT0:OUT0 + Mc] = y.astype(ybuf.dtype)  # aligned, lane-dense store

    # ---- conv2 + BN2 (scale folded) + fused 1x1 downsample / identity -----------
    out = conv3x3(w2_ref, lambda off: ybuf[:, off:off + Mc])
    if has_downsample:   # 1x1 conv fused as a 10th accumulate into the same f32 acc
        out = out + jnp.dot(wd_ref[...], x_ref[0, :, OUT0:OUT0 + Mc],
                            preferred_element_type=f32)
        out = out + b2_ref[...]                      # b2 + bd combined on the host
    else:
        out = out + b2_ref[...]
        out = out + x_ref[0, :planes, OUT0:OUT0 + Mc].astype(f32)   # identity (aligned)
    o_ref[0] = jnp.maximum(out, alpha * out).astype(o_ref.dtype)


# -----------------------------------------------------------------------------
# Wrapper: layout plumbing (pad / flatten / fold BN) + pallas_call
# -----------------------------------------------------------------------------
def _fold_bn(bn, eps=1e-5):
    gamma, beta, mean, var = bn
    scale = gamma * jax.lax.rsqrt(var + eps)
    return scale, beta - mean * scale


def basic_block_pallas(x, params, *, alpha=0.2, eps=1e-5, batch_tile=None,
                       compute_dtype=jnp.bfloat16):
    """BasicBlock_github.forward (stride=1, eval-mode BN), NCHW in / NCHW out."""
    B, cin, H, W = x.shape
    planes = params["w1"].shape[0]
    has_ds = "wd" in params
    if planes % 8 != 0:
        raise NotImplementedError("planes must be a multiple of 8")
    if not has_ds and cin != planes:
        raise ValueError("identity shortcut requires inplanes == planes")
    if W > 125:
        raise NotImplementedError("W must be <= 125 for the aligned flat layout")

    f32 = jnp.float32
    bt = batch_tile if batch_tile is not None else min(B, 4)   # images per grid step
    nchunks = -(-B // bt)
    Bpad = nchunks * bt

    cin_p = ((cin + 15) // 16) * 16          # bf16 sublane tile = 16
    Hp, Wp = H + 2, W + 2                    # 1-px zero halo on every side
    HpWp = Hp * Wp
    OUT0 = 128                               # lane-aligned flat offset of output col 0
    PRE = OUT0 - (Wp + 1)                    # front padding before image 0
    Mc = ((bt * HpWp + 127) // 128) * 128    # lane-dense compute / output width
    Nx = ((OUT0 + Mc + Wp + 1 + 127) // 128) * 128   # padded-flat input width

    # --- padded-flat, channel-first input: (nchunks, cin_p, Nx), bf16 -------------
    xp = jnp.pad(x.astype(f32), ((0, Bpad - B), (0, cin_p - cin), (1, 1), (1, 1)))
    xp = xp.reshape(nchunks, bt, cin_p, HpWp).transpose(0, 2, 1, 3)
    xp = xp.reshape(nchunks, cin_p, bt * HpWp)
    xflat = jnp.pad(xp, ((0, 0), (0, 0), (PRE, Nx - PRE - bt * HpWp)))
    xflat = xflat.astype(compute_dtype)

    # Valid-pixel mask over the Mc output columns (identical for every chunk).
    q = jnp.arange(Mc)
    r = q % HpWp
    valid = (q < bt * HpWp) & (r // Wp < H) & (r % Wp < W)
    mask = valid.astype(f32).reshape(1, Mc)

    # --- BN folded into the conv weights; only biases go to the kernel ------------
    s1, b1 = _fold_bn(params["bn1"], eps)
    s2, b2 = _fold_bn(params["bn2"], eps)

    def w3x3(w, scale, ci_pad):
        # OIHW (P,Ci,3,3) * scale[p]  ->  (9*P, ci_pad), tap-major along sublanes.
        w = w * scale[:, None, None, None]
        w = jnp.pad(w, ((0, 0), (0, ci_pad - w.shape[1]), (0, 0), (0, 0)))
        return (jnp.transpose(w, (2, 3, 0, 1))
                .reshape(9 * planes, ci_pad).astype(compute_dtype))

    col = lambda v: v.reshape(planes, 1).astype(f32)

    inputs = [xflat, mask,
              w3x3(params["w1"], s1, cin_p), col(b1),
              w3x3(params["w2"], s2, planes)]
    in_specs = [
        pl.BlockSpec((1, cin_p, Nx), lambda i: (i, 0, 0)),
        pl.BlockSpec((1, Mc), lambda i: (0, 0)),
        pl.BlockSpec((9 * planes, cin_p), lambda i: (0, 0)),
        pl.BlockSpec((planes, 1), lambda i: (0, 0)),
        pl.BlockSpec((9 * planes, planes), lambda i: (0, 0)),
    ]
    if has_ds:
        sd, bd = _fold_bn(params["bnd"], eps)
        wd = params["wd"].reshape(planes, cin) * sd[:, None]
        wd = jnp.pad(wd, ((0, 0), (0, cin_p - cin))).astype(compute_dtype)
        inputs += [col(b2 + bd), wd]            # combined bias; scale-folded 1x1 weight
        in_specs += [pl.BlockSpec((planes, 1), lambda i: (0, 0)),
                     pl.BlockSpec((planes, cin_p), lambda i: (0, 0))]
    else:
        inputs += [col(b2)]
        in_specs += [pl.BlockSpec((planes, 1), lambda i: (0, 0))]

    flops = 2 * nchunks * Mc * planes * (9 * cin_p + 9 * planes
                                         + (cin_p if has_ds else 0))
    bytes_accessed = (sum(int(a.size) * a.dtype.itemsize for a in inputs)
                      + nchunks * planes * Mc * 4)

    kernel = functools.partial(_basic_block_kernel, Mc=Mc, Wp=Wp, OUT0=OUT0,
                               planes=planes, alpha=alpha, has_downsample=has_ds)
    out_s = pl.pallas_call(
        kernel,
        out_shape=jax.ShapeDtypeStruct((nchunks, planes, Mc), f32),
        grid=(nchunks,),
        in_specs=in_specs,
        out_specs=pl.BlockSpec((1, planes, Mc), lambda i: (i, 0, 0)),
        scratch_shapes=[pltpu.VMEM((planes, Nx), compute_dtype)],   # conv1 act, re-padded
        compiler_params=pltpu.CompilerParams(
            dimension_semantics=("parallel",)),
        cost_estimate=pl.CostEstimate(flops=flops, transcendentals=0,
                                      bytes_accessed=bytes_accessed),
    )(*inputs)

    # (nchunks, P, Mc) -> NCHW (B, P, H, W)
    out = out_s[:, :, :bt * HpWp].reshape(nchunks, planes, bt, Hp, Wp)
    out = out[:, :, :, :H, :W].transpose(0, 2, 1, 3, 4)
    return out.reshape(Bpad, planes, H, W)[:B]


# -----------------------------------------------------------------------------
# Pure-JAX reference (XLA, f32) and deterministic parameter construction
# -----------------------------------------------------------------------------
def basic_block_reference(x, params, *, alpha=0.2, eps=1e-5):
    def conv(t, w):
        return jax.lax.conv_general_dilated(
            t, w, window_strides=(1, 1), padding="SAME",
            dimension_numbers=("NCHW", "OIHW", "NCHW"),
            precision=jax.lax.Precision.HIGHEST)

    def affine(t, sb):
        s, b = sb
        return t * s[None, :, None, None] + b[None, :, None, None]

    lrelu = lambda t: jnp.where(t >= 0.0, t, alpha * t)
    out = lrelu(affine(conv(x, params["w1"]), _fold_bn(params["bn1"], eps)))
    out = affine(conv(out, params["w2"]), _fold_bn(params["bn2"], eps))
    identity = (affine(conv(x, params["wd"]), _fold_bn(params["bnd"], eps))
                if "wd" in params else x)
    return lrelu(out + identity)


def make_params(key, inplanes, planes):
    """PyTorch-default-style conv init (bias=False) + non-trivial eval-mode BN stats."""
    ks = jax.random.split(key, 6)

    def conv_w(k, cout, cin, ksize):
        bound = float(cin * ksize * ksize) ** -0.5
        return jax.random.uniform(k, (cout, cin, ksize, ksize), jnp.float32,
                                  -bound, bound)

    def bn_p(k, c):
        k1, k2, k3, k4 = jax.random.split(k, 4)
        return (jax.random.uniform(k1, (c,), jnp.float32, 0.5, 1.5),   # gamma
                0.1 * jax.random.normal(k2, (c,), jnp.float32),        # beta
                0.1 * jax.random.normal(k3, (c,), jnp.float32),        # running_mean
                jax.random.uniform(k4, (c,), jnp.float32, 0.5, 1.5))   # running_var

    params = {"w1": conv_w(ks[0], planes, inplanes, 3), "bn1": bn_p(ks[1], planes),
              "w2": conv_w(ks[2], planes, planes, 3), "bn2": bn_p(ks[3], planes)}
    if inplanes != planes:   # module attaches a 1x1-conv + BN downsample in this case
        params["wd"] = conv_w(ks[4], planes, inplanes, 1)
        params["bnd"] = bn_p(ks[5], planes)
    return params


if __name__ == "__main__":
    key = jax.random.PRNGKey(0)
    kx1, kx2, kp1, kp2 = jax.random.split(key, 4)
    B, H, W = 2, 16, 16

    # Case 1: inplanes != planes -> fused 1x1-conv + BN downsample on the shortcut.
    x1 = jax.random.normal(kx1, (B, 4, H, W), jnp.float32)
    p1 = make_params(kp1, 4, 16)
    out1 = jax.jit(basic_block_pallas)(x1, p1)
    jax.block_until_ready(out1)
    ref1 = basic_block_reference(x1, p1)
    err1 = float(jnp.max(jnp.abs(out1 - ref1)) / (jnp.max(jnp.abs(ref1)) + 1e-6))
    assert out1.shape == (B, 16, H, W), out1.shape
    assert err1 < 2e-2, f"downsample path mismatch: rel err {err1}"   # bf16 matmuls

    # Case 2: inplanes == planes -> plain identity shortcut.
    x2 = jax.random.normal(kx2, (B, 16, H, W), jnp.float32)
    p2 = make_params(kp2, 16, 16)
    out2 = jax.jit(basic_block_pallas)(x2, p2)
    jax.block_until_ready(out2)
    ref2 = basic_block_reference(x2, p2)
    err2 = float(jnp.max(jnp.abs(out2 - ref2)) / (jnp.max(jnp.abs(ref2)) + 1e-6))
    assert out2.shape == (B, 16, H, W), out2.shape
    assert err2 < 2e-2, f"identity path mismatch: rel err {err2}"

    print("KERNEL_OK")
</pallas_src>

<mosaic_0001>
module attributes {stable_mosaic.version = 11 : i64} {
  func.func @_basic_block_kernel(%arg0: i32, %arg1: memref<1x16x1024xbf16, #tpu.memory_space<vmem>>, %arg2: memref<1x768xf32, #tpu.memory_space<vmem>>, %arg3: memref<144x16xbf16, #tpu.memory_space<vmem>>, %arg4: memref<16x1xf32, #tpu.memory_space<vmem>>, %arg5: memref<144x16xbf16, #tpu.memory_space<vmem>>, %arg6: memref<16x1xf32, #tpu.memory_space<vmem>>, %arg7: memref<16x16xbf16, #tpu.memory_space<vmem>>, %arg8: memref<1x16x768xf32, #tpu.memory_space<vmem>>, %arg9: memref<16x1024xbf16, #tpu.memory_space<vmem>>) attributes {dimension_semantics = [#tpu.dimension_semantics<parallel>], iteration_bounds = array<i64: 1>, scalar_prefetch = 0 : i64, scratch_operands = 1 : i64, tpu.core_type = #tpu.core_type<tc>, window_params = [{transform_indices = @transform_0, window_bounds = array<i64: 1, 16, 1024>}, {pipeline_mode = #tpu.pipeline_mode<synchronous>, transform_indices = @transform_1, window_bounds = array<i64: 1, 768>}, {pipeline_mode = #tpu.pipeline_mode<synchronous>, transform_indices = @transform_2, window_bounds = array<i64: 144, 16>}, {pipeline_mode = #tpu.pipeline_mode<synchronous>, transform_indices = @transform_3, window_bounds = array<i64: 16, 1>}, {pipeline_mode = #tpu.pipeline_mode<synchronous>, transform_indices = @transform_4, window_bounds = array<i64: 144, 16>}, {pipeline_mode = #tpu.pipeline_mode<synchronous>, transform_indices = @transform_5, window_bounds = array<i64: 16, 1>}, {pipeline_mode = #tpu.pipeline_mode<synchronous>, transform_indices = @transform_6, window_bounds = array<i64: 16, 16>}, {transform_indices = @transform_7, window_bounds = array<i64: 1, 16, 768>}]} {
    %c0 = arith.constant 0 : index
    %c0_0 = arith.constant 0 : index
    %0 = vector.load %arg3[%c0, %c0_0] : memref<144x16xbf16, #tpu.memory_space<vmem>>, vector<16x16xbf16>
    %c0_1 = arith.constant 0 : index
    %c0_2 = arith.constant 0 : index
    %c109 = arith.constant 109 : index
    %1 = vector.load %arg1[%c0_1, %c0_2, %c109] : memref<1x16x1024xbf16, #tpu.memory_space<vmem>>, vector<1x16x768xbf16>
    %2 = vector.shape_cast %1 : vector<1x16x768xbf16> to vector<16x768xbf16>
    %cst = arith.constant dense<0.000000e+00> : vector<16x768xf32>
    %3 = tpu.matmul %0, %2, %cst {dimension_numbers = #tpu.dot_dimension_numbers<[1], [0], [0], [1], [0, 0, 1, 1], [], []>} : vector<16x16xbf16>, vector<16x768xbf16>, vector<16x768xf32> -> vector<16x768xf32>
    %c16 = arith.constant 16 : index
    %c0_3 = arith.constant 0 : index
    %4 = vector.load %arg3[%c16, %c0_3] : memref<144x16xbf16, #tpu.memory_space<vmem>>, vector<16x16xbf16>
    %c0_4 = arith.constant 0 : index
    %c0_5 = arith.constant 0 : index
    %c110 = arith.constant 110 : index
    %5 = vector.load %arg1[%c0_4, %c0_5, %c110] : memref<1x16x1024xbf16, #tpu.memory_space<vmem>>, vector<1x16x768xbf16>
    %6 = vector.shape_cast %5 : vector<1x16x768xbf16> to vector<16x768xbf16>
    %cst_6 = arith.constant dense<0.000000e+00> : vector<16x768xf32>
    %7 = tpu.matmul %4, %6, %cst_6 {dimension_numbers = #tpu.dot_dimension_numbers<[1], [0], [0], [1], [0, 0, 1, 1], [], []>} : vector<16x16xbf16>, vector<16x768xbf16>, vector<16x768xf32> -> vector<16x768xf32>
    %8 = arith.addf %3, %7 : vector<16x768xf32>
    %c32 = arith.constant 32 : index
    %c0_7 = arith.constant 0 : index
    %9 = vector.load %arg3[%c32, %c0_7] : memref<144x16xbf16, #tpu.memory_space<vmem>>, vector<16x16xbf16>
    %c0_8 = arith.constant 0 : index
    %c0_9 = arith.constant 0 : index
    %c111 = arith.constant 111 : index
    %10 = vector.load %arg1[%c0_8, %c0_9, %c111] : memref<1x16x1024xbf16, #tpu.memory_space<vmem>>, vector<1x16x768xbf16>
    %11 = vector.shape_cast %10 : vector<1x16x768xbf16> to vector<16x768xbf16>
    %cst_10 = arith.constant dense<0.000000e+00> : vector<16x768xf32>
    %12 = tpu.matmul %9, %11, %cst_10 {dimension_numbers = #tpu.dot_dimension_numbers<[1], [0], [0], [1], [0, 0, 1, 1], [], []>} : vector<16x16xbf16>, vector<16x768xbf16>, vector<16x768xf32> -> vector<16x768xf32>
    %13 = arith.addf %8, %12 : vector<16x768xf32>
    %c48 = arith.constant 48 : index
    %c0_11 = arith.constant 0 : index
    %14 = vector.load %arg3[%c48, %c0_11] : memref<144x16xbf16, #tpu.memory_space<vmem>>, vector<16x16xbf16>
    %c0_12 = arith.constant 0 : index
    %c0_13 = arith.constant 0 : index
    %c127 = arith.constant 127 : index
    %15 = vector.load %arg1[%c0_12, %c0_13, %c127] : memref<1x16x1024xbf16, #tpu.memory_space<vmem>>, vector<1x16x768xbf16>
    %16 = vector.shape_cast %15 : vector<1x16x768xbf16> to vector<16x768xbf16>
    %cst_14 = arith.constant dense<0.000000e+00> : vector<16x768xf32>
    %17 = tpu.matmul %14, %16, %cst_14 {dimension_numbers = #tpu.dot_dimension_numbers<[1], [0], [0], [1], [0, 0, 1, 1], [], []>} : vector<16x16xbf16>, vector<16x768xbf16>, vector<16x768xf32> -> vector<16x768xf32>
    %18 = arith.addf %13, %17 : vector<16x768xf32>
    %c64 = arith.constant 64 : index
    %c0_15 = arith.constant 0 : index
    %19 = vector.load %arg3[%c64, %c0_15] : memref<144x16xbf16, #tpu.memory_space<vmem>>, vector<16x16xbf16>
    %c0_16 = arith.constant 0 : index
    %c0_17 = arith.constant 0 : index
    %c128 = arith.constant 128 : index
    %20 = vector.load %arg1[%c0_16, %c0_17, %c128] : memref<1x16x1024xbf16, #tpu.memory_space<vmem>>, vector<1x16x768xbf16>
    %21 = vector.shape_cast %20 : vector<1x16x768xbf16> to vector<16x768xbf16>
    %cst_18 = arith.constant dense<0.000000e+00> : vector<16x768xf32>
    %22 = tpu.matmul %19, %21, %cst_18 {dimension_numbers = #tpu.dot_dimension_numbers<[1], [0], [0], [1], [0, 0, 1, 1], [], []>} : vector<16x16xbf16>, vector<16x768xbf16>, vector<16x768xf32> -> vector<16x768xf32>
    %23 = arith.addf %18, %22 : vector<16x768xf32>
    %c80 = arith.constant 80 : index
    %c0_19 = arith.constant 0 : index
    %24 = vector.load %arg3[%c80, %c0_19] : memref<144x16xbf16, #tpu.memory_space<vmem>>, vector<16x16xbf16>
    %c0_20 = arith.constant 0 : index
    %c0_21 = arith.constant 0 : index
    %c129 = arith.constant 129 : index
    %25 = vector.load %arg1[%c0_20, %c0_21, %c129] : memref<1x16x1024xbf16, #tpu.memory_space<vmem>>, vector<1x16x768xbf16>
    %26 = vector.shape_cast %25 : vector<1x16x768xbf16> to vector<16x768xbf16>
    %cst_22 = arith.constant dense<0.000000e+00> : vector<16x768xf32>
    %27 = tpu.matmul %24, %26, %cst_22 {dimension_numbers = #tpu.dot_dimension_numbers<[1], [0], [0], [1], [0, 0, 1, 1], [], []>} : vector<16x16xbf16>, vector<16x768xbf16>, vector<16x768xf32> -> vector<16x768xf32>
    %28 = arith.addf %23, %27 : vector<16x768xf32>
    %c96 = arith.constant 96 : index
    %c0_23 = arith.constant 0 : index
    %29 = vector.load %arg3[%c96, %c0_23] : memref<144x16xbf16, #tpu.memory_space<vmem>>, vector<16x16xbf16>
    %c0_24 = arith.constant 0 : index
    %c0_25 = arith.constant 0 : index
    %c145 = arith.constant 145 : index
    %30 = vector.load %arg1[%c0_24, %c0_25, %c145] : memref<1x16x1024xbf16, #tpu.memory_space<vmem>>, vector<1x16x768xbf16>
    %31 = vector.shape_cast %30 : vector<1x16x768xbf16> to vector<16x768xbf16>
    %cst_26 = arith.constant dense<0.000000e+00> : vector<16x768xf32>
    %32 = tpu.matmul %29, %31, %cst_26 {dimension_numbers = #tpu.dot_dimension_numbers<[1], [0], [0], [1], [0, 0, 1, 1], [], []>} : vector<16x16xbf16>, vector<16x768xbf16>, vector<16x768xf32> -> vector<16x768xf32>
    %33 = arith.addf %28, %32 : vector<16x768xf32>
    %c112 = arith.constant 112 : index
    %c0_27 = arith.constant 0 : index
    %34 = vector.load %arg3[%c112, %c0_27] : memref<144x16xbf16, #tpu.memory_space<vmem>>, vector<16x16xbf16>
    %c0_28 = arith.constant 0 : index
    %c0_29 = arith.constant 0 : index
    %c146 = arith.constant 146 : index
    %35 = vector.load %arg1[%c0_28, %c0_29, %c146] : memref<1x16x1024xbf16, #tpu.memory_space<vmem>>, vector<1x16x768xbf16>
    %36 = vector.shape_cast %35 : vector<1x16x768xbf16> to vector<16x768xbf16>
    %cst_30 = arith.constant dense<0.000000e+00> : vector<16x768xf32>
    %37 = tpu.matmul %34, %36, %cst_30 {dimension_numbers = #tpu.dot_dimension_numbers<[1], [0], [0], [1], [0, 0, 1, 1], [], []>} : vector<16x16xbf16>, vector<16x768xbf16>, vector<16x768xf32> -> vector<16x768xf32>
    %38 = arith.addf %33, %37 : vector<16x768xf32>
    %c128_31 = arith.constant 128 : index
    %c0_32 = arith.constant 0 : index
    %39 = vector.load %arg3[%c128_31, %c0_32] : memref<144x16xbf16, #tpu.memory_space<vmem>>, vector<16x16xbf16>
    %c0_33 = arith.constant 0 : index
    %c0_34 = arith.constant 0 : index
    %c147 = arith.constant 147 : index
    %40 = vector.load %arg1[%c0_33, %c0_34, %c147] : memref<1x16x1024xbf16, #tpu.memory_space<vmem>>, vector<1x16x768xbf16>
    %41 = vector.shape_cast %40 : vector<1x16x768xbf16> to vector<16x768xbf16>
    %cst_35 = arith.constant dense<0.000000e+00> : vector<16x768xf32>
    %42 = tpu.matmul %39, %41, %cst_35 {dimension_numbers = #tpu.dot_dimension_numbers<[1], [0], [0], [1], [0, 0, 1, 1], [], []>} : vector<16x16xbf16>, vector<16x768xbf16>, vector<16x768xf32> -> vector<16x768xf32>
    %43 = arith.addf %38, %42 : vector<16x768xf32>
    %c0_36 = arith.constant 0 : index
    %c0_37 = arith.constant 0 : index
    %44 = vector.load %arg4[%c0_36, %c0_37] : memref<16x1xf32, #tpu.memory_space<vmem>>, vector<16x1xf32>
    %45 = vector.broadcast %44 : vector<16x1xf32> to vector<16x768xf32>
    %46 = arith.addf %43, %45 : vector<16x768xf32>
    %cst_38 = arith.constant 2.000000e-01 : f32
    %47 = vector.broadcast %cst_38 : f32 to vector<16x768xf32>
    %48 = arith.mulf %47, %46 : vector<16x768xf32>
    %49 = arith.maximumf %46, %48 : vector<16x768xf32>
    %c0_39 = arith.constant 0 : index
    %c0_40 = arith.constant 0 : index
    %50 = vector.load %arg2[%c0_39, %c0_40] : memref<1x768xf32, #tpu.memory_space<vmem>>, vector<1x768xf32>
    %51 = vector.broadcast %50 : vector<1x768xf32> to vector<16x768xf32>
    %52 = arith.mulf %49, %51 : vector<16x768xf32>
    %cst_41 = arith.constant 0.000000e+00 : bf16
    %53 = vector.broadcast %cst_41 : bf16 to vector<16x128xbf16>
    %c0_42 = arith.constant 0 : index
    %c0_43 = arith.constant 0 : index
    %54 = vector.load %arg9[%c0_42, %c0_43] : memref<16x1024xbf16, #tpu.memory_space<vmem>>, vector<16x128xbf16>
    tpu.vector_store %arg9[%c0_42, %c0_43], %53 {strides = array<i32>} : memref<16x1024xbf16, #tpu.memory_space<vmem>>, vector<16x128xbf16>,
    %cst_44 = arith.constant 0.000000e+00 : bf16
    %55 = vector.broadcast %cst_44 : bf16 to vector<16x128xbf16>
    %c0_45 = arith.constant 0 : index
    %c896 = arith.constant 896 : index
    %56 = vector.load %arg9[%c0_45, %c896] : memref<16x1024xbf16, #tpu.memory_space<vmem>>, vector<16x128xbf16>
    tpu.vector_store %arg9[%c0_45, %c896], %55 {strides = array<i32>} : memref<16x1024xbf16, #tpu.memory_space<vmem>>, vector<16x128xbf16>,
    %57 = arith.truncf %52 : vector<16x768xf32> to vector<16x768xbf16>
    %c0_46 = arith.constant 0 : index
    %c128_47 = arith.constant 128 : index
    %58 = vector.load %arg9[%c0_46, %c128_47] : memref<16x1024xbf16, #tpu.memory_space<vmem>>, vector<16x768xbf16>
    tpu.vector_store %arg9[%c0_46, %c128_47], %57 {strides = array<i32>} : memref<16x1024xbf16, #tpu.memory_space<vmem>>, vector<16x768xbf16>,
    %c0_48 = arith.constant 0 : index
    %c0_49 = arith.constant 0 : index
    %59 = vector.load %arg5[%c0_48, %c0_49] : memref<144x16xbf16, #tpu.memory_space<vmem>>, vector<16x16xbf16>
    %c0_50 = arith.constant 0 : index
    %c109_51 = arith.constant 109 : index
    %60 = vector.load %arg9[%c0_50, %c109_51] : memref<16x1024xbf16, #tpu.memory_space<vmem>>, vector<16x768xbf16>
    %cst_52 = arith.constant dense<0.000000e+00> : vector<16x768xf32>
    %61 = tpu.matmul %59, %60, %cst_52 {dimension_numbers = #tpu.dot_dimension_numbers<[1], [0], [0], [1], [0, 0, 1, 1], [], []>} : vector<16x16xbf16>, vector<16x768xbf16>, vector<16x768xf32> -> vector<16x768xf32>
    %c16_53 = arith.constant 16 : index
    %c0_54 = arith.constant 0 : index
    %62 = vector.load %arg5[%c16_53, %c0_54] : memref<144x16xbf16, #tpu.memory_space<vmem>>, vector<16x16xbf16>
    %c0_55 = arith.constant 0 : index
    %c110_56 = arith.constant 110 : index
    %63 = vector.load %arg9[%c0_55, %c110_56] : memref<16x1024xbf16, #tpu.memory_space<vmem>>, vector<16x768xbf16>
    %cst_57 = arith.constant dense<0.000000e+00> : vector<16x768xf32>
    %64 = tpu.matmul %62, %63, %cst_57 {dimension_numbers = #tpu.dot_dimension_numbers<[1], [0], [0], [1], [0, 0, 1, 1], [], []>} : vector<16x16xbf16>, vector<16x768xbf16>, vector<16x768xf32> -> vector<16x768xf32>
    %65 = arith.addf %61, %64 : vector<16x768xf32>
    %c32_58 = arith.constant 32 : index
    %c0_59 = arith.constant 0 : index
    %66 = vector.load %arg5[%c32_58, %c0_59] : memref<144x16xbf16, #tpu.memory_space<vmem>>, vector<16x16xbf16>
    %c0_60 = arith.constant 0 : index
    %c111_61 = arith.constant 111 : index
    %67 = vector.load %arg9[%c0_60, %c111_61] : memref<16x1024xbf16, #tpu.memory_space<vmem>>, vector<16x768xbf16>
    %cst_62 = arith.constant dense<0.000000e+00> : vector<16x768xf32>
    %68 = tpu.matmul %66, %67, %cst_62 {dimension_numbers = #tpu.dot_dimension_numbers<[1], [0], [0], [1], [0, 0, 1, 1], [], []>} : vector<16x16xbf16>, vector<16x768xbf16>, vector<16x768xf32> -> vector<16x768xf32>
    %69 = arith.addf %65, %68 : vector<16x768xf32>
    %c48_63 = arith.constant 48 : index
    %c0_64 = arith.constant 0 : index
    %70 = vector.load %arg5[%c48_63, %c0_64] : memref<144x16xbf16, #tpu.memory_space<vmem>>, vector<16x16xbf16>
    %c0_65 = arith.constant 0 : index
    %c127_66 = arith.constant 127 : index
    %71 = vector.load %arg9[%c0_65, %c127_66] : memref<16x1024xbf16, #tpu.memory_space<vmem>>, vector<16x768xbf16>
    %cst_67 = arith.constant dense<0.000000e+00> : vector<16x768xf32>
    %72 = tpu.matmul %70, %71, %cst_67 {dimension_numbers = #tpu.dot_dimension_numbers<[1], [0], [0], [1], [0, 0, 1, 1], [], []>} : vector<16x16xbf16>, vector<16x768xbf16>, vector<16x768xf32> -> vector<16x768xf32>
    %73 = arith.addf %69, %72 : vector<16x768xf32>
    %c64_68 = arith.constant 64 : index
    %c0_69 = arith.constant 0 : index
    %74 = vector.load %arg5[%c64_68, %c0_69] : memref<144x16xbf16, #tpu.memory_space<vmem>>, vector<16x16xbf16>
    %c0_70 = arith.constant 0 : index
    %c128_71 = arith.constant 128 : index
    %75 = vector.load %arg9[%c0_70, %c128_71] : memref<16x1024xbf16, #tpu.memory_space<vmem>>, vector<16x768xbf16>
    %cst_72 = arith.constant dense<0.000000e+00> : vector<16x768xf32>
    %76 = tpu.matmul %74, %75, %cst_72 {dimension_numbers = #tpu.dot_dimension_numbers<[1], [0], [0], [1], [0, 0, 1, 1], [], []>} : vector<16x16xbf16>, vector<16x768xbf16>, vector<16x768xf32> -> vector<16x768xf32>
    %77 = arith.addf %73, %76 : vector<16x768xf32>
    %c80_73 = arith.constant 80 : index
    %c0_74 = arith.constant 0 : index
    %78 = vector.load %arg5[%c80_73, %c0_74] : memref<144x16xbf16, #tpu.memory_space<vmem>>, vector<16x16xbf16>
    %c0_75 = arith.constant 0 : index
    %c129_76 = arith.constant 129 : index
    %79 = vector.load %arg9[%c0_75, %c129_76] : memref<16x1024xbf16, #tpu.memory_space<vmem>>, vector<16x768xbf16>
    %cst_77 = arith.constant dense<0.000000e+00> : vector<16x768xf32>
    %80 = tpu.matmul %78, %79, %cst_77 {dimension_numbers = #tpu.dot_dimension_numbers<[1], [0], [0], [1], [0, 0, 1, 1], [], []>} : vector<16x16xbf16>, vector<16x768xbf16>, vector<16x768xf32> -> vector<16x768xf32>
    %81 = arith.addf %77, %80 : vector<16x768xf32>
    %c96_78 = arith.constant 96 : index
    %c0_79 = arith.constant 0 : index
    %82 = vector.load %arg5[%c96_78, %c0_79] : memref<144x16xbf16, #tpu.memory_space<vmem>>, vector<16x16xbf16>
    %c0_80 = arith.constant 0 : index
    %c145_81 = arith.constant 145 : index
    %83 = vector.load %arg9[%c0_80, %c145_81] : memref<16x1024xbf16, #tpu.memory_space<vmem>>, vector<16x768xbf16>
    %cst_82 = arith.constant dense<0.000000e+00> : vector<16x768xf32>
    %84 = tpu.matmul %82, %83, %cst_82 {dimension_numbers = #tpu.dot_dimension_numbers<[1], [0], [0], [1], [0, 0, 1, 1], [], []>} : vector<16x16xbf16>, vector<16x768xbf16>, vector<16x768xf32> -> vector<16x768xf32>
    %85 = arith.addf %81, %84 : vector<16x768xf32>
    %c112_83 = arith.constant 112 : index
    %c0_84 = arith.constant 0 : index
    %86 = vector.load %arg5[%c112_83, %c0_84] : memref<144x16xbf16, #tpu.memory_space<vmem>>, vector<16x16xbf16>
    %c0_85 = arith.constant 0 : index
    %c146_86 = arith.constant 146 : index
    %87 = vector.load %arg9[%c0_85, %c146_86] : memref<16x1024xbf16, #tpu.memory_space<vmem>>, vector<16x768xbf16>
    %cst_87 = arith.constant dense<0.000000e+00> : vector<16x768xf32>
    %88 = tpu.matmul %86, %87, %cst_87 {dimension_numbers = #tpu.dot_dimension_numbers<[1], [0], [0], [1], [0, 0, 1, 1], [], []>} : vector<16x16xbf16>, vector<16x768xbf16>, vector<16x768xf32> -> vector<16x768xf32>
    %89 = arith.addf %85, %88 : vector<16x768xf32>
    %c128_88 = arith.constant 128 : index
    %c0_89 = arith.constant 0 : index
    %90 = vector.load %arg5[%c128_88, %c0_89] : memref<144x16xbf16, #tpu.memory_space<vmem>>, vector<16x16xbf16>
    %c0_90 = arith.constant 0 : index
    %c147_91 = arith.constant 147 : index
    %91 = vector.load %arg9[%c0_90, %c147_91] : memref<16x1024xbf16, #tpu.memory_space<vmem>>, vector<16x768xbf16>
    %cst_92 = arith.constant dense<0.000000e+00> : vector<16x768xf32>
    %92 = tpu.matmul %90, %91, %cst_92 {dimension_numbers = #tpu.dot_dimension_numbers<[1], [0], [0], [1], [0, 0, 1, 1], [], []>} : vector<16x16xbf16>, vector<16x768xbf16>, vector<16x768xf32> -> vector<16x768xf32>
    %93 = arith.addf %89, %92 : vector<16x768xf32>
    %c0_93 = arith.constant 0 : index
    %c0_94 = arith.constant 0 : index
    %94 = vector.load %arg7[%c0_93, %c0_94] : memref<16x16xbf16, #tpu.memory_space<vmem>>, vector<16x16xbf16>
    %c0_95 = arith.constant 0 : index
    %c0_96 = arith.constant 0 : index
    %c128_97 = arith.constant 128 : index
    %95 = vector.load %arg1[%c0_95, %c0_96, %c128_97] : memref<1x16x1024xbf16, #tpu.memory_space<vmem>>, vector<1x16x768xbf16>
    %96 = vector.shape_cast %95 : vector<1x16x768xbf16> to vector<16x768xbf16>
    %cst_98 = arith.constant dense<0.000000e+00> : vector<16x768xf32>
    %97 = tpu.matmul %94, %96, %cst_98 {dimension_numbers = #tpu.dot_dimension_numbers<[1], [0], [0], [1], [0, 0, 1, 1], [], []>} : vector<16x16xbf16>, vector<16x768xbf16>, vector<16x768xf32> -> vector<16x768xf32>
    %98 = arith.addf %93, %97 : vector<16x768xf32>
    %c0_99 = arith.constant 0 : index
    %c0_100 = arith.constant 0 : index
    %99 = vector.load %arg6[%c0_99, %c0_100] : memref<16x1xf32, #tpu.memory_space<vmem>>, vector<16x1xf32>
    %100 = vector.broadcast %99 : vector<16x1xf32> to vector<16x768xf32>
    %101 = arith.addf %98, %100 : vector<16x768xf32>
    %cst_101 = arith.constant 2.000000e-01 : f32
    %102 = vector.broadcast %cst_101 : f32 to vector<16x768xf32>
    %103 = arith.mulf %102, %101 : vector<16x768xf32>
    %104 = arith.maximumf %101, %103 : vector<16x768xf32>
    %c0_102 = arith.constant 0 : index
    %c0_103 = arith.constant 0 : index
    %c0_104 = arith.constant 0 : index
    %105 = vector.load %arg8[%c0_102, %c0_103, %c0_104] : memref<1x16x768xf32, #tpu.memory_space<vmem>>, vector<1x16x768xf32>
    %106 = vector.shape_cast %105 : vector<1x16x768xf32> to vector<16x768xf32>
    %107 = vector.shape_cast %104 : vector<16x768xf32> to vector<1x16x768xf32>
    tpu.vector_store %arg8[%c0_102, %c0_103, %c0_104], %107 {strides = array<i32>} : memref<1x16x768xf32, #tpu.memory_space<vmem>>, vector<1x16x768xf32>,
    return
  }
  func.func @transform_0(%arg0: i32) -> (i32, i32, i32) {
    %c0_i32 = arith.constant 0 : i32
    %c0_i32_0 = arith.constant 0 : i32
    %c0_i32_1 = arith.constant 0 : i32
    return %arg0, %c0_i32, %c0_i32_0 : i32, i32, i32
  }
  func.func @transform_1(%arg0: i32) -> (i32, i32) {
    %c0_i32 = arith.constant 0 : i32
    %c0_i32_0 = arith.constant 0 : i32
    %c0_i32_1 = arith.constant 0 : i32
    return %c0_i32, %c0_i32_0 : i32, i32
  }
  func.func @transform_2(%arg0: i32) -> (i32, i32) {
    %c0_i32 = arith.constant 0 : i32
    %c0_i32_0 = arith.constant 0 : i32
    %c0_i32_1 = arith.constant 0 : i32
    return %c0_i32, %c0_i32_0 : i32, i32
  }
  func.func @transform_3(%arg0: i32) -> (i32, i32) {
    %c0_i32 = arith.constant 0 : i32
    %c0_i32_0 = arith.constant 0 : i32
    %c0_i32_1 = arith.constant 0 : i32
    return %c0_i32, %c0_i32_0 : i32, i32
  }
  func.func @transform_4(%arg0: i32) -> (i32, i32) {
    %c0_i32 = arith.constant 0 : i32
    %c0_i32_0 = arith.constant 0 : i32
    %c0_i32_1 = arith.constant 0 : i32
    return %c0_i32, %c0_i32_0 : i32, i32
  }
  func.func @transform_5(%arg0: i32) -> (i32, i32) {
    %c0_i32 = arith.constant 0 : i32
    %c0_i32_0 = arith.constant 0 : i32
    %c0_i32_1 = arith.constant 0 : i32
    return %c0_i32, %c0_i32_0 : i32, i32
  }
  func.func @transform_6(%arg0: i32) -> (i32, i32) {
    %c0_i32 = arith.constant 0 : i32
    %c0_i32_0 = arith.constant 0 : i32
    %c0_i32_1 = arith.constant 0 : i32
    return %c0_i32, %c0_i32_0 : i32, i32
  }
  func.func @transform_7(%arg0: i32) -> (i32, i32, i32) {
    %c0_i32 = arith.constant 0 : i32
    %c0_i32_0 = arith.constant 0 : i32
    %c0_i32_1 = arith.constant 0 : i32
    return %arg0, %c0_i32, %c0_i32_0 : i32, i32, i32
  }
}

</mosaic_0001>

<llo_original>
// kernel: basic_block_pallas.1
$region0: #{basic_block_pallas.1}
  #allocation0 [shape = 'u32[]', space=smem, size = 0x4, offset = 0x4, fixed_abs, tag = 'smem constant byte address 0x4 - core index']
  #allocation1 [shape = 'u32[144,128]{1,0:T(1,128)}', space=vmem, size = 0x12000, scoped, tag = 'internal scratch']
  #allocation2 [shape = 'bf16[16,1024]{1,0:T(8,128)(2,1)}', space=vmem, size = 0x8000, scoped, tag = 'scratch operand']
  %s0 = inlined_call_operand.vmem [shape: bf16[1,16,1024], index: 0, kind: input, shape index: {}]
  %s1 = inlined_call_operand.vmem [shape: f32[1,768], index: 1, kind: input, shape index: {}]
  %s2 = inlined_call_operand.vmem [shape: bf16[144,16], index: 2, kind: input, shape index: {}]
  %s3 = inlined_call_operand.vmem [shape: f32[16,1], index: 3, kind: input, shape index: {}]
  %s4 = inlined_call_operand.vmem [shape: bf16[144,16], index: 4, kind: input, shape index: {}]
  %s5 = inlined_call_operand.vmem [shape: f32[16,1], index: 5, kind: input, shape index: {}]
  %s6 = inlined_call_operand.vmem [shape: bf16[16,16], index: 6, kind: input, shape index: {}]
  %s7 = inlined_call_operand.vmem [shape: f32[1,16,768], index: 7, kind: output, shape index: {}]
  %s8 = sld [smem:[#allocation0]]
  $region38: #{basic_block_pallas.1} parent=0
    _
  %s10 = ssub.s32 1, %s8
  %s11 = scalar_select 0, %s10, %s8
  // Predicated region
  $region2: #{basic_block_pallas.1} parent=0 // pred_check
    _
  $region3: #{basic_block_pallas.1} parent=0 // pred_check_branch
    %13 = sbr.rel (0) target = $region5
  $region4: #{basic_block_pallas.1} parent=0 // pred_region
    _
  $region5: #{basic_block_pallas.1} parent=0 // pred_fallthru
    _
  // Predicated region
  $region6: #{basic_block_pallas.1} parent=0 // pred_check
    _
  $region7: #{basic_block_pallas.1} parent=0 // pred_check_branch
    %15 = sbr.rel (0) target = $region9
  $region8: #{basic_block_pallas.1} parent=0 // pred_region
    _
  $region9: #{basic_block_pallas.1} parent=0 // pred_fallthru
    _
  // Predicated region
  $region10: #{basic_block_pallas.1} parent=0 // pred_check
    _
  $region11: #{basic_block_pallas.1} parent=0 // pred_check_branch
    %17 = sbr.rel (0) target = $region13
  $region12: #{basic_block_pallas.1} parent=0 // pred_region
    _
  $region13: #{basic_block_pallas.1} parent=0 // pred_fallthru
    _
  // Predicated region
  $region14: #{basic_block_pallas.1} parent=0 // pred_check
    _
  $region15: #{basic_block_pallas.1} parent=0 // pred_check_branch
    %19 = sbr.rel (0) target = $region17
  $region16: #{basic_block_pallas.1} parent=0 // pred_region
    _
  $region17: #{basic_block_pallas.1} parent=0 // pred_fallthru
    _
  // Predicated region
  $region18: #{basic_block_pallas.1} parent=0 // pred_check
    _
  $region19: #{basic_block_pallas.1} parent=0 // pred_check_branch
    %21 = sbr.rel (0) target = $region21
  $region20: #{basic_block_pallas.1} parent=0 // pred_region
    _
  $region21: #{basic_block_pallas.1} parent=0 // pred_fallthru
    _
  // Predicated region
  $region22: #{basic_block_pallas.1} parent=0 // pred_check
    _
  $region23: #{basic_block_pallas.1} parent=0 // pred_check_branch
    %23 = sbr.rel (0) target = $region25
  $region24: #{basic_block_pallas.1} parent=0 // pred_region
    _
  $region25: #{basic_block_pallas.1} parent=0 // pred_fallthru
    _
  // Predicated region
  $region26: #{basic_block_pallas.1} parent=0 // pred_check
    _
  $region27: #{basic_block_pallas.1} parent=0 // pred_check_branch
    %25 = sbr.rel (0) target = $region29
  $region28: #{basic_block_pallas.1} parent=0 // pred_region
    _
  $region29: #{basic_block_pallas.1} parent=0 // pred_fallthru
    _
  %v27 = vld [vmem:[%s2] sm:$0xf]
  %v28 = vld [vmem:[%s2 + $0x4] sm:$0xf]
  %v29 = vld [vmem:[%s0] sm:$0xff]
  %v30 = vld [vmem:[%s0 + $0x8] sm:$0xff]
  %v31 = vld [vmem:[%s0 + $0x10] sm:$0xff]
  %v32 = vld [vmem:[%s0 + $0x18] sm:$0xf]
  %v33 = vld [vmem:[%s0 + $0x20] sm:$0xff]
  %v34 = vld [vmem:[%s0 + $0x28] sm:$0xff]
  %v35 = vld [vmem:[%s0 + $0x30] sm:$0xff]
  %v36 = vld [vmem:[%s0 + $0x38] sm:$0xf]
  %v37 = vld [vmem:[%s2 + $0x8] sm:$0xf]
  %v38 = vld [vmem:[%s2 + $0xc] sm:$0xf]
  %v41 = vunpack.c.l.b16 %v37
  %v42 = vunpack.c.l.b16 %v38
  %v43 = vpack.c.b16 %v42, %v41
  %v52 = vunpack.c.l.b16 %v29
  %v53 = vunpack.c.h.b16 %v29
  %v54 = vunpack.c.l.b16 %v30
  %v55 = vunpack.c.h.b16 %v30
  %v56 = vunpack.c.l.b16 %v31
  %v57 = vunpack.c.h.b16 %v31
  %v58 = vunpack.c.l.b16 %v32
  %v59 = vunpack.c.l.b16 %v33
  %v60 = vunpack.c.h.b16 %v33
  %v61 = vunpack.c.l.b16 %v34
  %v62 = vunpack.c.h.b16 %v34
  %v63 = vunpack.c.l.b16 %v35
  %v64 = vunpack.c.h.b16 %v35
  %v65 = vunpack.c.l.b16 %v36
  %v66 = vpack.c.b16 %v59, %v52
  %v67 = vpack.c.b16 %v60, %v53
  %v68 = vpack.c.b16 %v61, %v54
  %v69 = vpack.c.b16 %v62, %v55
  %v70 = vpack.c.b16 %v63, %v56
  %v71 = vpack.c.b16 %v64, %v57
  %v72 = vpack.c.b16 %v65, %v58
  %73 = vrot.lane.b32.xlu0 %v66, 18
  %v74 = vpop.permute.xlu0 %73
  %75 = vrot.lane.b32.xlu0 %v67, 18
  %v76 = vpop.permute.xlu0 %75
  %77 = vrot.lane.b32.xlu0 %v68, 18
  %v78 = vpop.permute.xlu0 %77
  %79 = vrot.lane.b32.xlu0 %v69, 18
  %v80 = vpop.permute.xlu0 %79
  %81 = vrot.lane.b32.xlu0 %v70, 18
  %v82 = vpop.permute.xlu0 %81
  %83 = vrot.lane.b32.xlu0 %v71, 18
  %v84 = vpop.permute.xlu0 %83
  %85 = vrot.lane.b32.xlu0 %v72, 18
  %v86 = vpop.permute.xlu0 %85
  %vm87 = vcmask 146432
  %v88 = vsel %vm87, %v74, %v76
  %v89 = vsel %vm87, %v76, %v78
  %v90 = vsel %vm87, %v78, %v80
  %v91 = vsel %vm87, %v80, %v82
  %v92 = vsel %vm87, %v82, %v84
  %v93 = vsel %vm87, %v84, %v86
  %vm100 = vcmask 130048
  %v102 = vsel %vm100, %v43, 0
  %104 = vmatprep.subr.bf16.mxu0 0
  %105 = vmatpush1.bf16.msra.mxu0 0
  %106 = vmatprep.subr.bf16.mxu0 0
  %107 = vmatpush1.bf16.msra.mxu0 0
  %108 = vmatprep.subr.bf16.mxu0 0
  %109 = vmatpush1.bf16.msra.mxu0 0
  %110 = vmatprep.subr.bf16.mxu0 0
  %111 = vmatpush1.bf16.msra.mxu0 0
  %112 = vmatprep.subr.bf16.mxu0 0
  %113 = vmatpush1.bf16.msra.mxu0 0
  %114 = vmatprep.subr.bf16.mxu0 0
  %115 = vmatpush1.bf16.msra.mxu0 0
  %116 = vmatprep.subr.bf16.mxu0 0
  %117 = vmatpush1.bf16.msra.mxu0 0
  %118 = vmatprep.subr.bf16.mxu0 %v89
  %119 = vmatpush1.bf16.msra.mxu0 %v88
  %120 = vmatprep.subr.bf16.mxu0 0
  %121 = vmatpush2.bf16.msra.mxu0 0
  %122 = vmatprep.subr.bf16.mxu0 0
  %123 = vmatpush2.bf16.msra.mxu0 0
  %124 = vmatprep.subr.bf16.mxu0 0
  %125 = vmatpush2.bf16.msra.mxu0 0
  %126 = vmatprep.subr.bf16.mxu0 0
  %127 = vmatpush2.bf16.msra.mxu0 0
  %128 = vmatprep.subr.bf16.mxu0 0
  %129 = vmatpush2.bf16.msra.mxu0 0
  %130 = vmatprep.subr.bf16.mxu0 0
  %131 = vmatpush2.bf16.msra.mxu0 0
  %132 = vmatprep.subr.bf16.mxu0 0
  %133 = vmatpush2.bf16.msra.mxu0 0
  %134 = vmatprep.subr.bf16.mxu0 0
  %135 = vmatpush2.bf16.msra.mxu0 0
  %136 = vmatprep.mubr.bf16.mxu0 0
  %137 = vmatmul.mubr.bf16.gmra.mxu0 %v102
  %v138 = vpop.f32.mrf.mxu0
  %v139 = vadd.f32 0.0, %v138
  %v140 = vpop.f32.mrf.mxu0
  %v141 = vadd.f32 0.0, %v140
  %v142 = vpop.f32.mrf.mxu0
  %v143 = vadd.f32 0.0, %v142
  %v144 = vpop.f32.mrf.mxu0
  %v145 = vadd.f32 0.0, %v144
  %146 = vdwg.mxu0
  %147 = vmatprep.subr.bf16.mxu0 0
  %148 = vmatpush1.bf16.msra.mxu0 0
  %149 = vmatprep.subr.bf16.mxu0 0
  %150 = vmatpush1.bf16.msra.mxu0 0
  %151 = vmatprep.subr.bf16.mxu0 0
  %152 = vmatpush1.bf16.msra.mxu0 0
  %153 = vmatprep.subr.bf16.mxu0 0
  %154 = vmatpush1.bf16.msra.mxu0 0
  %155 = vmatprep.subr.bf16.mxu0 0
  %156 = vmatpush1.bf16.msra.mxu0 0
  %157 = vmatprep.subr.bf16.mxu0 0
  %158 = vmatpush1.bf16.msra.mxu0 0
  %159 = vmatprep.subr.bf16.mxu0 0
  %160 = vmatpush1.bf16.msra.mxu0 0
  %161 = vmatprep.subr.bf16.mxu0 %v91
  %162 = vmatpush1.bf16.msra.mxu0 %v90
  %163 = vmatprep.subr.bf16.mxu0 0
  %164 = vmatpush2.bf16.msra.mxu0 0
  %165 = vmatprep.subr.bf16.mxu0 0
  %166 = vmatpush2.bf16.msra.mxu0 0
  %167 = vmatprep.subr.bf16.mxu0 0
  %168 = vmatpush2.bf16.msra.mxu0 0
  %169 = vmatprep.subr.bf16.mxu0 0
  %170 = vmatpush2.bf16.msra.mxu0 0
  %171 = vmatprep.subr.bf16.mxu0 0
  %172 = vmatpush2.bf16.msra.mxu0 0
  %173 = vmatprep.subr.bf16.mxu0 0
  %174 = vmatpush2.bf16.msra.mxu0 0
  %175 = vmatprep.subr.bf16.mxu0 0
  %176 = vmatpush2.bf16.msra.mxu0 0
  %177 = vmatprep.subr.bf16.mxu0 0
  %178 = vmatpush2.bf16.msra.mxu0 0
  %179 = vmatprep.mubr.bf16.mxu0 0
  %180 = vmatmul.mubr.bf16.gmra.mxu0 %v102
  %v181 = vpop.f32.mrf.mxu0
  %v182 = vadd.f32 0.0, %v181
  %v183 = vpop.f32.mrf.mxu0
  %v184 = vadd.f32 0.0, %v183
  %v185 = vpop.f32.mrf.mxu0
  %v186 = vadd.f32 0.0, %v185
  %v187 = vpop.f32.mrf.mxu0
  %v188 = vadd.f32 0.0, %v187
  %189 = vdwg.mxu0
  %190 = vmatprep.subr.bf16.mxu0 0
  %191 = vmatpush1.bf16.msra.mxu0 0
  %192 = vmatprep.subr.bf16.mxu0 0
  %193 = vmatpush1.bf16.msra.mxu0 0
  %194 = vmatprep.subr.bf16.mxu0 0
  %195 = vmatpush1.bf16.msra.mxu0 0
  %196 = vmatprep.subr.bf16.mxu0 0
  %197 = vmatpush1.bf16.msra.mxu0 0
  %198 = vmatprep.subr.bf16.mxu0 0
  %199 = vmatpush1.bf16.msra.mxu0 0
  %200 = vmatprep.subr.bf16.mxu0 0
  %201 = vmatpush1.bf16.msra.mxu0 0
  %202 = vmatprep.subr.bf16.mxu0 0
  %203 = vmatpush1.bf16.msra.mxu0 0
  %204 = vmatprep.subr.bf16.mxu0 %v93
  %205 = vmatpush1.bf16.msra.mxu0 %v92
  %206 = vmatprep.subr.bf16.mxu0 0
  %207 = vmatpush2.bf16.msra.mxu0 0
  %208 = vmatprep.subr.bf16.mxu0 0
  %209 = vmatpush2.bf16.msra.mxu0 0
  %210 = vmatprep.subr.bf16.mxu0 0
  %211 = vmatpush2.bf16.msra.mxu0 0
  %212 = vmatprep.subr.bf16.mxu0 0
  %213 = vmatpush2.bf16.msra.mxu0 0
  %214 = vmatprep.subr.bf16.mxu0 0
  %215 = vmatpush2.bf16.msra.mxu0 0
  %216 = vmatprep.subr.bf16.mxu0 0
  %217 = vmatpush2.bf16.msra.mxu0 0
  %218 = vmatprep.subr.bf16.mxu0 0
  %219 = vmatpush2.bf16.msra.mxu0 0
  %220 = vmatprep.subr.bf16.mxu0 0
  %221 = vmatpush2.bf16.msra.mxu0 0
  %222 = vmatprep.mubr.bf16.mxu0 0
  %223 = vmatmul.mubr.bf16.gmra.mxu0 %v102
  %v224 = vpop.f32.mrf.mxu0
  %v225 = vadd.f32 0.0, %v224
  %v226 = vpop.f32.mrf.mxu0
  %v227 = vadd.f32 0.0, %v226
  %v228 = vpop.f32.mrf.mxu0
  %v229 = vadd.f32 0.0, %v228
  %v230 = vpop.f32.mrf.mxu0
  %v231 = vadd.f32 0.0, %v230
  %232 = vdwg.mxu0
  %v235 = vunpack.c.l.b16 %v27
  %v236 = vunpack.c.l.b16 %v28
  %v237 = vpack.c.b16 %v236, %v235
  %238 = vrot.lane.b32.xlu0 %v66, 19
  %v239 = vpop.permute.xlu0 %238
  %240 = vrot.lane.b32.xlu0 %v67, 19
  %v241 = vpop.permute.xlu0 %240
  %242 = vrot.lane.b32.xlu0 %v68, 19
  %v243 = vpop.permute.xlu0 %242
  %244 = vrot.lane.b32.xlu0 %v69, 19
  %v245 = vpop.permute.xlu0 %244
  %246 = vrot.lane.b32.xlu0 %v70, 19
  %v247 = vpop.permute.xlu0 %246
  %248 = vrot.lane.b32.xlu0 %v71, 19
  %v249 = vpop.permute.xlu0 %248
  %250 = vrot.lane.b32.xlu0 %v72, 19
  %v251 = vpop.permute.xlu0 %250
  %vm252 = vcmask 154624
  %v253 = vsel %vm252, %v239, %v241
  %v254 = vsel %vm252, %v241, %v243
  %v255 = vsel %vm252, %v243, %v245
  %v256 = vsel %vm252, %v245, %v247
  %v257 = vsel %vm252, %v247, %v249
  %v258 = vsel %vm252, %v249, %v251
  %v266 = vsel %vm100, %v237, 0
  %268 = vmatprep.subr.bf16.mxu0 0
  %269 = vmatpush1.bf16.msra.mxu0 0
  %270 = vmatprep.subr.bf16.mxu0 0
  %271 = vmatpush1.bf16.msra.mxu0 0
  %272 = vmatprep.subr.bf16.mxu0 0
  %273 = vmatpush1.bf16.msra.mxu0 0
  %274 = vmatprep.subr.bf16.mxu0 0
  %275 = vmatpush1.bf16.msra.mxu0 0
  %276 = vmatprep.subr.bf16.mxu0 0
  %277 = vmatpush1.bf16.msra.mxu0 0
  %278 = vmatprep.subr.bf16.mxu0 0
  %279 = vmatpush1.bf16.msra.mxu0 0
  %280 = vmatprep.subr.bf16.mxu0 0
  %281 = vmatpush1.bf16.msra.mxu0 0
  %282 = vmatprep.subr.bf16.mxu0 %v254
  %283 = vmatpush1.bf16.msra.mxu0 %v253
  %284 = vmatprep.subr.bf16.mxu0 0
  %285 = vmatpush2.bf16.msra.mxu0 0
  %286 = vmatprep.subr.bf16.mxu0 0
  %287 = vmatpush2.bf16.msra.mxu0 0
  %288 = vmatprep.subr.bf16.mxu0 0
  %289 = vmatpush2.bf16.msra.mxu0 0
  %290 = vmatprep.subr.bf16.mxu0 0
  %291 = vmatpush2.bf16.msra.mxu0 0
  %292 = vmatprep.subr.bf16.mxu0 0
  %293 = vmatpush2.bf16.msra.mxu0 0
  %294 = vmatprep.subr.bf16.mxu0 0
  %295 = vmatpush2.bf16.msra.mxu0 0
  %296 = vmatprep.subr.bf16.mxu0 0
  %297 = vmatpush2.bf16.msra.mxu0 0
  %298 = vmatprep.subr.bf16.mxu0 0
  %299 = vmatpush2.bf16.msra.mxu0 0
  %300 = vmatprep.mubr.bf16.mxu0 0
  %301 = vmatmul.mubr.bf16.gmra.mxu0 %v266
  %v302 = vpop.f32.mrf.mxu0
  %v303 = vadd.f32 %v139, %v302
  %v304 = vpop.f32.mrf.mxu0
  %v305 = vadd.f32 %v141, %v304
  %v306 = vpop.f32.mrf.mxu0
  %v307 = vadd.f32 %v143, %v306
  %v308 = vpop.f32.mrf.mxu0
  %v309 = vadd.f32 %v145, %v308
  %310 = vdwg.mxu0
  %311 = vmatprep.subr.bf16.mxu0 0
  %312 = vmatpush1.bf16.msra.mxu0 0
  %313 = vmatprep.subr.bf16.mxu0 0
  %314 = vmatpush1.bf16.msra.mxu0 0
  %315 = vmatprep.subr.bf16.mxu0 0
  %316 = vmatpush1.bf16.msra.mxu0 0
  %317 = vmatprep.subr.bf16.mxu0 0
  %318 = vmatpush1.bf16.msra.mxu0 0
  %319 = vmatprep.subr.bf16.mxu0 0
  %320 = vmatpush1.bf16.msra.mxu0 0
  %321 = vmatprep.subr.bf16.mxu0 0
  %322 = vmatpush1.bf16.msra.mxu0 0
  %323 = vmatprep.subr.bf16.mxu0 0
  %324 = vmatpush1.bf16.msra.mxu0 0
  %325 = vmatprep.subr.bf16.mxu0 %v256
  %326 = vmatpush1.bf16.msra.mxu0 %v255
  %327 = vmatprep.subr.bf16.mxu0 0
  %328 = vmatpush2.bf16.msra.mxu0 0
  %329 = vmatprep.subr.bf16.mxu0 0
  %330 = vmatpush2.bf16.msra.mxu0 0
  %331 = vmatprep.subr.bf16.mxu0 0
  %332 = vmatpush2.bf16.msra.mxu0 0
  %333 = vmatprep.subr.bf16.mxu0 0
  %334 = vmatpush2.bf16.msra.mxu0 0
  %335 = vmatprep.subr.bf16.mxu0 0
  %336 = vmatpush2.bf16.msra.mxu0 0
  %337 = vmatprep.subr.bf16.mxu0 0
  %338 = vmatpush2.bf16.msra.mxu0 0
  %339 = vmatprep.subr.bf16.mxu0 0
  %340 = vmatpush2.bf16.msra.mxu0 0
  %341 = vmatprep.subr.bf16.mxu0 0
  %342 = vmatpush2.bf16.msra.mxu0 0
  %343 = vmatprep.mubr.bf16.mxu0 0
  %344 = vmatmul.mubr.bf16.gmra.mxu0 %v266
  %v345 = vpop.f32.mrf.mxu0
  %v346 = vadd.f32 %v182, %v345
  %v347 = vpop.f32.mrf.mxu0
  %v348 = vadd.f32 %v184, %v347
  %v349 = vpop.f32.mrf.mxu0
  %v350 = vadd.f32 %v186, %v349
  %v351 = vpop.f32.mrf.mxu0
  %v352 = vadd.f32 %v188, %v351
  %353 = vdwg.mxu0
  %354 = vmatprep.subr.bf16.mxu0 0
  %355 = vmatpush1.bf16.msra.mxu0 0
  %356 = vmatprep.subr.bf16.mxu0 0
  %357 = vmatpush1.bf16.msra.mxu0 0
  %358 = vmatprep.subr.bf16.mxu0 0
  %359 = vmatpush1.bf16.msra.mxu0 0
  %360 = vmatprep.subr.bf16.mxu0 0
  %361 = vmatpush1.bf16.msra.mxu0 0
  %362 = vmatprep.subr.bf16.mxu0 0
  %363 = vmatpush1.bf16.msra.mxu0 0
  %364 = vmatprep.subr.bf16.mxu0 0
  %365 = vmatpush1.bf16.msra.mxu0 0
  %366 = vmatprep.subr.bf16.mxu0 0
  %367 = vmatpush1.bf16.msra.mxu0 0
  %368 = vmatprep.subr.bf16.mxu0 %v258
  %369 = vmatpush1.bf16.msra.mxu0 %v257
  %370 = vmatprep.subr.bf16.mxu0 0
  %371 = vmatpush2.bf16.msra.mxu0 0
  %372 = vmatprep.subr.bf16.mxu0 0
  %373 = vmatpush2.bf16.msra.mxu0 0
  %374 = vmatprep.subr.bf16.mxu0 0
  %375 = vmatpush2.bf16.msra.mxu0 0
  %376 = vmatprep.subr.bf16.mxu0 0
  %377 = vmatpush2.bf16.msra.mxu0 0
  %378 = vmatprep.subr.bf16.mxu0 0
  %379 = vmatpush2.bf16.msra.mxu0 0
  %380 = vmatprep.subr.bf16.mxu0 0
  %381 = vmatpush2.bf16.msra.mxu0 0
  %382 = vmatprep.subr.bf16.mxu0 0
  %383 = vmatpush2.bf16.msra.mxu0 0
  %384 = vmatprep.subr.bf16.mxu0 0
  %385 = vmatpush2.bf16.msra.mxu0 0
  %386 = vmatprep.mubr.bf16.mxu0 0
  %387 = vmatmul.mubr.bf16.gmra.mxu0 %v266
  %v388 = vpop.f32.mrf.mxu0
  %v389 = vadd.f32 %v225, %v388
  %v390 = vpop.f32.mrf.mxu0
  %v391 = vadd.f32 %v227, %v390
  %v392 = vpop.f32.mrf.mxu0
  %v393 = vadd.f32 %v229, %v392
  %v394 = vpop.f32.mrf.mxu0
  %v395 = vadd.f32 %v231, %v394
  %396 = vdwg.mxu0
  %v397 = vld [vmem:[%s2 + $0x10] sm:$0xf]
  %v398 = vld [vmem:[%s2 + $0x14] sm:$0xf]
  %v401 = vunpack.c.l.b16 %v397
  %v402 = vunpack.c.l.b16 %v398
  %v403 = vpack.c.b16 %v402, %v401
  %404 = vrot.lane.b32.xlu0 %v66, 17
  %v405 = vpop.permute.xlu0 %404
  %406 = vrot.lane.b32.xlu0 %v67, 17
  %v407 = vpop.permute.xlu0 %406
  %408 = vrot.lane.b32.xlu0 %v68, 17
  %v409 = vpop.permute.xlu0 %408
  %410 = vrot.lane.b32.xlu0 %v69, 17
  %v411 = vpop.permute.xlu0 %410
  %412 = vrot.lane.b32.xlu0 %v70, 17
  %v413 = vpop.permute.xlu0 %412
  %414 = vrot.lane.b32.xlu0 %v71, 17
  %v415 = vpop.permute.xlu0 %414
  %416 = vrot.lane.b32.xlu0 %v72, 17
  %v417 = vpop.permute.xlu0 %416
  %vm418 = vcmask 138240
  %v419 = vsel %vm418, %v405, %v407
  %v420 = vsel %vm418, %v407, %v409
  %v421 = vsel %vm418, %v409, %v411
  %v422 = vsel %vm418, %v411, %v413
  %v423 = vsel %vm418, %v413, %v415
  %v424 = vsel %vm418, %v415, %v417
  %v432 = vsel %vm100, %v403, 0
  %434 = vmatprep.subr.bf16.mxu0 0
  %435 = vmatpush1.bf16.msra.mxu0 0
  %436 = vmatprep.subr.bf16.mxu0 0
  %437 = vmatpush1.bf16.msra.mxu0 0
  %438 = vmatprep.subr.bf16.mxu0 0
  %439 = vmatpush1.bf16.msra.mxu0 0
  %440 = vmatprep.subr.bf16.mxu0 0
  %441 = vmatpush1.bf16.msra.mxu0 0
  %442 = vmatprep.subr.bf16.mxu0 0
  %443 = vmatpush1.bf16.msra.mxu0 0
  %444 = vmatprep.subr.bf16.mxu0 0
  %445 = vmatpush1.bf16.msra.mxu0 0
  %446 = vmatprep.subr.bf16.mxu0 0
  %447 = vmatpush1.bf16.msra.mxu0 0
  %448 = vmatprep.subr.bf16.mxu0 %v420
  %449 = vmatpush1.bf16.msra.mxu0 %v419
  %450 = vmatprep.subr.bf16.mxu0 0
  %451 = vmatpush2.bf16.msra.mxu0 0
  %452 = vmatprep.subr.bf16.mxu0 0
  %453 = vmatpush2.bf16.msra.mxu0 0
  %454 = vmatprep.subr.bf16.mxu0 0
  %455 = vmatpush2.bf16.msra.mxu0 0
  %456 = vmatprep.subr.bf16.mxu0 0
  %457 = vmatpush2.bf16.msra.mxu0 0
  %458 = vmatprep.subr.bf16.mxu0 0
  %459 = vmatpush2.bf16.msra.mxu0 0
  %460 = vmatprep.subr.bf16.mxu0 0
  %461 = vmatpush2.bf16.msra.mxu0 0
  %462 = vmatprep.subr.bf16.mxu0 0
  %463 = vmatpush2.bf16.msra.mxu0 0
  %464 = vmatprep.subr.bf16.mxu0 0
  %465 = vmatpush2.bf16.msra.mxu0 0
  %466 = vmatprep.mubr.bf16.mxu0 0
  %467 = vmatmul.mubr.bf16.gmra.mxu0 %v432
  %v468 = vpop.f32.mrf.mxu0
  %v469 = vadd.f32 0.0, %v468
  %v470 = vpop.f32.mrf.mxu0
  %v471 = vadd.f32 0.0, %v470
  %v472 = vpop.f32.mrf.mxu0
  %v473 = vadd.f32 0.0, %v472
  %v474 = vpop.f32.mrf.mxu0
  %v475 = vadd.f32 0.0, %v474
  %476 = vdwg.mxu0
  %477 = vmatprep.subr.bf16.mxu0 0
  %478 = vmatpush1.bf16.msra.mxu0 0
  %479 = vmatprep.subr.bf16.mxu0 0
  %480 = vmatpush1.bf16.msra.mxu0 0
  %481 = vmatprep.subr.bf16.mxu0 0
  %482 = vmatpush1.bf16.msra.mxu0 0
  %483 = vmatprep.subr.bf16.mxu0 0
  %484 = vmatpush1.bf16.msra.mxu0 0
  %485 = vmatprep.subr.bf16.mxu0 0
  %486 = vmatpush1.bf16.msra.mxu0 0
  %487 = vmatprep.subr.bf16.mxu0 0
  %488 = vmatpush1.bf16.msra.mxu0 0
  %489 = vmatprep.subr.bf16.mxu0 0
  %490 = vmatpush1.bf16.msra.mxu0 0
  %491 = vmatprep.subr.bf16.mxu0 %v422
  %492 = vmatpush1.bf16.msra.mxu0 %v421
  %493 = vmatprep.subr.bf16.mxu0 0
  %494 = vmatpush2.bf16.msra.mxu0 0
  %495 = vmatprep.subr.bf16.mxu0 0
  %496 = vmatpush2.bf16.msra.mxu0 0
  %497 = vmatprep.subr.bf16.mxu0 0
  %498 = vmatpush2.bf16.msra.mxu0 0
  %499 = vmatprep.subr.bf16.mxu0 0
  %500 = vmatpush2.bf16.msra.mxu0 0
  %501 = vmatprep.subr.bf16.mxu0 0
  %502 = vmatpush2.bf16.msra.mxu0 0
  %503 = vmatprep.subr.bf16.mxu0 0
  %504 = vmatpush2.bf16.msra.mxu0 0
  %505 = vmatprep.subr.bf16.mxu0 0
  %506 = vmatpush2.bf16.msra.mxu0 0
  %507 = vmatprep.subr.bf16.mxu0 0
  %508 = vmatpush2.bf16.msra.mxu0 0
  %509 = vmatprep.mubr.bf16.mxu0 0
  %510 = vmatmul.mubr.bf16.gmra.mxu0 %v432
  %v511 = vpop.f32.mrf.mxu0
  %v512 = vadd.f32 0.0, %v511
  %v513 = vpop.f32.mrf.mxu0
  %v514 = vadd.f32 0.0, %v513
  %v515 = vpop.f32.mrf.mxu0
  %v516 = vadd.f32 0.0, %v515
  %v517 = vpop.f32.mrf.mxu0
  %v518 = vadd.f32 0.0, %v517
  %519 = vdwg.mxu0
  %520 = vmatprep.subr.bf16.mxu0 0
  %521 = vmatpush1.bf16.msra.mxu0 0
  %522 = vmatprep.subr.bf16.mxu0 0
  %523 = vmatpush1.bf16.msra.mxu0 0
  %524 = vmatprep.subr.bf16.mxu0 0
  %525 = vmatpush1.bf16.msra.mxu0 0
  %526 = vmatprep.subr.bf16.mxu0 0
  %527 = vmatpush1.bf16.msra.mxu0 0
  %528 = vmatprep.subr.bf16.mxu0 0
  %529 = vmatpush1.bf16.msra.mxu0 0
  %530 = vmatprep.subr.bf16.mxu0 0
  %531 = vmatpush1.bf16.msra.mxu0 0
  %532 = vmatprep.subr.bf16.mxu0 0
  %533 = vmatpush1.bf16.msra.mxu0 0
  %534 = vmatprep.subr.bf16.mxu0 %v424
  %535 = vmatpush1.bf16.msra.mxu0 %v423
  %536 = vmatprep.subr.bf16.mxu0 0
  %537 = vmatpush2.bf16.msra.mxu0 0
  %538 = vmatprep.subr.bf16.mxu0 0
  %539 = vmatpush2.bf16.msra.mxu0 0
  %540 = vmatprep.subr.bf16.mxu0 0
  %541 = vmatpush2.bf16.msra.mxu0 0
  %542 = vmatprep.subr.bf16.mxu0 0
  %543 = vmatpush2.bf16.msra.mxu0 0
  %544 = vmatprep.subr.bf16.mxu0 0
  %545 = vmatpush2.bf16.msra.mxu0 0
  %546 = vmatprep.subr.bf16.mxu0 0
  %547 = vmatpush2.bf16.msra.mxu0 0
  %548 = vmatprep.subr.bf16.mxu0 0
  %549 = vmatpush2.bf16.msra.mxu0 0
  %550 = vmatprep.subr.bf16.mxu0 0
  %551 = vmatpush2.bf16.msra.mxu0 0
  %552 = vmatprep.mubr.bf16.mxu0 0
  %553 = vmatmul.mubr.bf16.gmra.mxu0 %v432
  %v554 = vpop.f32.mrf.mxu0
  %v555 = vadd.f32 0.0, %v554
  %v556 = vpop.f32.mrf.mxu0
  %v557 = vadd.f32 0.0, %v556
  %v558 = vpop.f32.mrf.mxu0
  %v559 = vadd.f32 0.0, %v558
  %v560 = vpop.f32.mrf.mxu0
  %v561 = vadd.f32 0.0, %v560
  %562 = vdwg.mxu0
  %v563 = vadd.f32 %v303, %v469
  %v564 = vadd.f32 %v305, %v471
  %v565 = vadd.f32 %v346, %v512
  %v566 = vadd.f32 %v348, %v514
  %v567 = vadd.f32 %v389, %v555
  %v568 = vadd.f32 %v391, %v557
  %v569 = vadd.f32 %v307, %v473
  %v570 = vadd.f32 %v309, %v475
  %v571 = vadd.f32 %v350, %v516
  %v572 = vadd.f32 %v352, %v518
  %v573 = vadd.f32 %v393, %v559
  %v574 = vadd.f32 %v395, %v561
  %v575 = vld [vmem:[%s2 + $0x18] sm:$0xf]
  %v576 = vld [vmem:[%s2 + $0x1c] sm:$0xf]
  %v579 = vunpack.c.l.b16 %v575
  %v580 = vunpack.c.l.b16 %v576
  %v581 = vpack.c.b16 %v580, %v579
  %582 = vrot.lane.b32.xlu0 %v66, 1
  %v583 = vpop.permute.xlu0 %582
  %584 = vrot.lane.b32.xlu0 %v67, 1
  %v585 = vpop.permute.xlu0 %584
  %586 = vrot.lane.b32.xlu0 %v68, 1
  %v587 = vpop.permute.xlu0 %586
  %588 = vrot.lane.b32.xlu0 %v69, 1
  %v589 = vpop.permute.xlu0 %588
  %590 = vrot.lane.b32.xlu0 %v70, 1
  %v591 = vpop.permute.xlu0 %590
  %592 = vrot.lane.b32.xlu0 %v71, 1
  %v593 = vpop.permute.xlu0 %592
  %594 = vrot.lane.b32.xlu0 %v72, 1
  %v595 = vpop.permute.xlu0 %594
  %vm596 = vcmask 7168
  %v597 = vsel %vm596, %v583, %v585
  %v598 = vsel %vm596, %v585, %v587
  %v599 = vsel %vm596, %v587, %v589
  %v600 = vsel %vm596, %v589, %v591
  %v601 = vsel %vm596, %v591, %v593
  %v602 = vsel %vm596, %v593, %v595
  %v610 = vsel %vm100, %v581, 0
  %612 = vmatprep.subr.bf16.mxu0 0
  %613 = vmatpush1.bf16.msra.mxu0 0
  %614 = vmatprep.subr.bf16.mxu0 0
  %615 = vmatpush1.bf16.msra.mxu0 0
  %616 = vmatprep.subr.bf16.mxu0 0
  %617 = vmatpush1.bf16.msra.mxu0 0
  %618 = vmatprep.subr.bf16.mxu0 0
  %619 = vmatpush1.bf16.msra.mxu0 0
  %620 = vmatprep.subr.bf16.mxu0 0
  %621 = vmatpush1.bf16.msra.mxu0 0
  %622 = vmatprep.subr.bf16.mxu0 0
  %623 = vmatpush1.bf16.msra.mxu0 0
  %624 = vmatprep.subr.bf16.mxu0 0
  %625 = vmatpush1.bf16.msra.mxu0 0
  %626 = vmatprep.subr.bf16.mxu0 %v598
  %627 = vmatpush1.bf16.msra.mxu0 %v597
  %628 = vmatprep.subr.bf16.mxu0 0
  %629 = vmatpush2.bf16.msra.mxu0 0
  %630 = vmatprep.subr.bf16.mxu0 0
  %631 = vmatpush2.bf16.msra.mxu0 0
  %632 = vmatprep.subr.bf16.mxu0 0
  %633 = vmatpush2.bf16.msra.mxu0 0
  %634 = vmatprep.subr.bf16.mxu0 0
  %635 = vmatpush2.bf16.msra.mxu0 0
  %636 = vmatprep.subr.bf16.mxu0 0
  %637 = vmatpush2.bf16.msra.mxu0 0
  %638 = vmatprep.subr.bf16.mxu0 0
  %639 = vmatpush2.bf16.msra.mxu0 0
  %640 = vmatprep.subr.bf16.mxu0 0
  %641 = vmatpush2.bf16.msra.mxu0 0
  %642 = vmatprep.subr.bf16.mxu0 0
  %643 = vmatpush2.bf16.msra.mxu0 0
  %644 = vmatprep.mubr.bf16.mxu0 0
  %645 = vmatmul.mubr.bf16.gmra.mxu0 %v610
  %v646 = vpop.f32.mrf.mxu0
  %v647 = vadd.f32 0.0, %v646
  %v648 = vpop.f32.mrf.mxu0
  %v649 = vadd.f32 0.0, %v648
  %v650 = vpop.f32.mrf.mxu0
  %v651 = vadd.f32 0.0, %v650
  %v652 = vpop.f32.mrf.mxu0
  %v653 = vadd.f32 0.0, %v652
  %654 = vdwg.mxu0
  %655 = vmatprep.subr.bf16.mxu0 0
  %656 = vmatpush1.bf16.msra.mxu0 0
  %657 = vmatprep.subr.bf16.mxu0 0
  %658 = vmatpush1.bf16.msra.mxu0 0
  %659 = vmatprep.subr.bf16.mxu0 0
  %660 = vmatpush1.bf16.msra.mxu0 0
  %661 = vmatprep.subr.bf16.mxu0 0
  %662 = vmatpush1.bf16.msra.mxu0 0
  %663 = vmatprep.subr.bf16.mxu0 0
  %664 = vmatpush1.bf16.msra.mxu0 0
  %665 = vmatprep.subr.bf16.mxu0 0
  %666 = vmatpush1.bf16.msra.mxu0 0
  %667 = vmatprep.subr.bf16.mxu0 0
  %668 = vmatpush1.bf16.msra.mxu0 0
  %669 = vmatprep.subr.bf16.mxu0 %v600
  %670 = vmatpush1.bf16.msra.mxu0 %v599
  %671 = vmatprep.subr.bf16.mxu0 0
  %672 = vmatpush2.bf16.msra.mxu0 0
  %673 = vmatprep.subr.bf16.mxu0 0
  %674 = vmatpush2.bf16.msra.mxu0 0
  %675 = vmatprep.subr.bf16.mxu0 0
  %676 = vmatpush2.bf16.msra.mxu0 0
  %677 = vmatprep.subr.bf16.mxu0 0
  %678 = vmatpush2.bf16.msra.mxu0 0
  %679 = vmatprep.subr.bf16.mxu0 0
  %680 = vmatpush2.bf16.msra.mxu0 0
  %681 = vmatprep.subr.bf16.mxu0 0
  %682 = vmatpush2.bf16.msra.mxu0 0
  %683 = vmatprep.subr.bf16.mxu0 0
  %684 = vmatpush2.bf16.msra.mxu0 0
  %685 = vmatprep.subr.bf16.mxu0 0
  %686 = vmatpush2.bf16.msra.mxu0 0
  %687 = vmatprep.mubr.bf16.mxu0 0
  %688 = vmatmul.mubr.bf16.gmra.mxu0 %v610
  %v689 = vpop.f32.mrf.mxu0
  %v690 = vadd.f32 0.0, %v689
  %v691 = vpop.f32.mrf.mxu0
  %v692 = vadd.f32 0.0, %v691
  %v693 = vpop.f32.mrf.mxu0
  %v694 = vadd.f32 0.0, %v693
  %v695 = vpop.f32.mrf.mxu0
  %v696 = vadd.f32 0.0, %v695
  %697 = vdwg.mxu0
  %698 = vmatprep.subr.bf16.mxu0 0
  %699 = vmatpush1.bf16.msra.mxu0 0
  %700 = vmatprep.subr.bf16.mxu0 0
  %701 = vmatpush1.bf16.msra.mxu0 0
  %702 = vmatprep.subr.bf16.mxu0 0
  %703 = vmatpush1.bf16.msra.mxu0 0
  %704 = vmatprep.subr.bf16.mxu0 0
  %705 = vmatpush1.bf16.msra.mxu0 0
  %706 = vmatprep.subr.bf16.mxu0 0
  %707 = vmatpush1.bf16.msra.mxu0 0
  %708 = vmatprep.subr.bf16.mxu0 0
  %709 = vmatpush1.bf16.msra.mxu0 0
  %710 = vmatprep.subr.bf16.mxu0 0
  %711 = vmatpush1.bf16.msra.mxu0 0
  %712 = vmatprep.subr.bf16.mxu0 %v602
  %713 = vmatpush1.bf16.msra.mxu0 %v601
  %714 = vmatprep.subr.bf16.mxu0 0
  %715 = vmatpush2.bf16.msra.mxu0 0
  %716 = vmatprep.subr.bf16.mxu0 0
  %717 = vmatpush2.bf16.msra.mxu0 0
  %718 = vmatprep.subr.bf16.mxu0 0
  %719 = vmatpush2.bf16.msra.mxu0 0
  %720 = vmatprep.subr.bf16.mxu0 0
  %721 = vmatpush2.bf16.msra.mxu0 0
  %722 = vmatprep.subr.bf16.mxu0 0
  %723 = vmatpush2.bf16.msra.mxu0 0
  %724 = vmatprep.subr.bf16.mxu0 0
  %725 = vmatpush2.bf16.msra.mxu0 0
  %726 = vmatprep.subr.bf16.mxu0 0
  %727 = vmatpush2.bf16.msra.mxu0 0
  %728 = vmatprep.subr.bf16.mxu0 0
  %729 = vmatpush2.bf16.msra.mxu0 0
  %730 = vmatprep.mubr.bf16.mxu0 0
  %731 = vmatmul.mubr.bf16.gmra.mxu0 %v610
  %v732 = vpop.f32.mrf.mxu0
  %v733 = vadd.f32 0.0, %v732
  %v734 = vpop.f32.mrf.mxu0
  %v735 = vadd.f32 0.0, %v734
  %v736 = vpop.f32.mrf.mxu0
  %v737 = vadd.f32 0.0, %v736
  %v738 = vpop.f32.mrf.mxu0
  %v739 = vadd.f32 0.0, %v738
  %740 = vdwg.mxu0
  %v741 = vadd.f32 %v563, %v647
  %v742 = vadd.f32 %v564, %v649
  %v743 = vadd.f32 %v565, %v690
  %v744 = vadd.f32 %v566, %v692
  %v745 = vadd.f32 %v567, %v733
  %v746 = vadd.f32 %v568, %v735
  %v747 = vadd.f32 %v569, %v651
  %v748 = vadd.f32 %v570, %v653
  %v749 = vadd.f32 %v571, %v694
  %v750 = vadd.f32 %v572, %v696
  %v751 = vadd.f32 %v573, %v737
  %v752 = vadd.f32 %v574, %v739
  %v753 = vld [vmem:[%s2 + $0x20] sm:$0xf]
  %v754 = vld [vmem:[%s2 + $0x24] sm:$0xf]
  %v755 = vld [vmem:[%s0 + $0x4] sm:$0xff]
  %v756 = vld [vmem:[%s0 + $0xc] sm:$0xff]
  %v757 = vld [vmem:[%s0 + $0x14] sm:$0xff]
  %v758 = vld [vmem:[%s0 + $0x24] sm:$0xff]
  %v759 = vld [vmem:[%s0 + $0x2c] sm:$0xff]
  %v760 = vld [vmem:[%s0 + $0x34] sm:$0xff]
  %v763 = vunpack.c.l.b16 %v753
  %v764 = vunpack.c.l.b16 %v754
  %v765 = vpack.c.b16 %v764, %v763
  %v772 = vunpack.c.l.b16 %v755
  %v773 = vunpack.c.h.b16 %v755
  %v774 = vunpack.c.l.b16 %v756
  %v775 = vunpack.c.h.b16 %v756
  %v776 = vunpack.c.l.b16 %v757
  %v777 = vunpack.c.h.b16 %v757
  %v778 = vunpack.c.l.b16 %v758
  %v779 = vunpack.c.h.b16 %v758
  %v780 = vunpack.c.l.b16 %v759
  %v781 = vunpack.c.h.b16 %v759
  %v782 = vunpack.c.l.b16 %v760
  %v783 = vunpack.c.h.b16 %v760
  %v784 = vpack.c.b16 %v778, %v772
  %v785 = vpack.c.b16 %v779, %v773
  %v786 = vpack.c.b16 %v780, %v774
  %v787 = vpack.c.b16 %v781, %v775
  %v788 = vpack.c.b16 %v782, %v776
  %v789 = vpack.c.b16 %v783, %v777
  %v797 = vsel %vm100, %v765, 0
  %799 = vmatprep.subr.bf16.mxu0 0
  %800 = vmatpush1.bf16.msra.mxu0 0
  %801 = vmatprep.subr.bf16.mxu0 0
  %802 = vmatpush1.bf16.msra.mxu0 0
  %803 = vmatprep.subr.bf16.mxu0 0
  %804 = vmatpush1.bf16.msra.mxu0 0
  %805 = vmatprep.subr.bf16.mxu0 0
  %806 = vmatpush1.bf16.msra.mxu0 0
  %807 = vmatprep.subr.bf16.mxu0 0
  %808 = vmatpush1.bf16.msra.mxu0 0
  %809 = vmatprep.subr.bf16.mxu0 0
  %810 = vmatpush1.bf16.msra.mxu0 0
  %811 = vmatprep.subr.bf16.mxu0 0
  %812 = vmatpush1.bf16.msra.mxu0 0
  %813 = vmatprep.subr.bf16.mxu0 %v785
  %814 = vmatpush1.bf16.msra.mxu0 %v784
  %815 = vmatprep.subr.bf16.mxu0 0
  %816 = vmatpush2.bf16.msra.mxu0 0
  %817 = vmatprep.subr.bf16.mxu0 0
  %818 = vmatpush2.bf16.msra.mxu0 0
  %819 = vmatprep.subr.bf16.mxu0 0
  %820 = vmatpush2.bf16.msra.mxu0 0
  %821 = vmatprep.subr.bf16.mxu0 0
  %822 = vmatpush2.bf16.msra.mxu0 0
  %823 = vmatprep.subr.bf16.mxu0 0
  %824 = vmatpush2.bf16.msra.mxu0 0
  %825 = vmatprep.subr.bf16.mxu0 0
  %826 = vmatpush2.bf16.msra.mxu0 0
  %827 = vmatprep.subr.bf16.mxu0 0
  %828 = vmatpush2.bf16.msra.mxu0 0
  %829 = vmatprep.subr.bf16.mxu0 0
  %830 = vmatpush2.bf16.msra.mxu0 0
  %831 = vmatprep.mubr.bf16.mxu0 0
  %832 = vmatmul.mubr.bf16.gmra.mxu0 %v797
  %v833 = vpop.f32.mrf.mxu0
  %v834 = vadd.f32 0.0, %v833
  %v835 = vpop.f32.mrf.mxu0
  %v836 = vadd.f32 0.0, %v835
  %v837 = vpop.f32.mrf.mxu0
  %v838 = vadd.f32 0.0, %v837
  %v839 = vpop.f32.mrf.mxu0
  %v840 = vadd.f32 0.0, %v839
  %841 = vdwg.mxu0
  %842 = vmatprep.subr.bf16.mxu0 0
  %843 = vmatpush1.bf16.msra.mxu0 0
  %844 = vmatprep.subr.bf16.mxu0 0
  %845 = vmatpush1.bf16.msra.mxu0 0
  %846 = vmatprep.subr.bf16.mxu0 0
  %847 = vmatpush1.bf16.msra.mxu0 0
  %848 = vmatprep.subr.bf16.mxu0 0
  %849 = vmatpush1.bf16.msra.mxu0 0
  %850 = vmatprep.subr.bf16.mxu0 0
  %851 = vmatpush1.bf16.msra.mxu0 0
  %852 = vmatprep.subr.bf16.mxu0 0
  %853 = vmatpush1.bf16.msra.mxu0 0
  %854 = vmatprep.subr.bf16.mxu0 0
  %855 = vmatpush1.bf16.msra.mxu0 0
  %856 = vmatprep.subr.bf16.mxu0 %v787
  %857 = vmatpush1.bf16.msra.mxu0 %v786
  %858 = vmatprep.subr.bf16.mxu0 0
  %859 = vmatpush2.bf16.msra.mxu0 0
  %860 = vmatprep.subr.bf16.mxu0 0
  %861 = vmatpush2.bf16.msra.mxu0 0
  %862 = vmatprep.subr.bf16.mxu0 0
  %863 = vmatpush2.bf16.msra.mxu0 0
  %864 = vmatprep.subr.bf16.mxu0 0
  %865 = vmatpush2.bf16.msra.mxu0 0
  %866 = vmatprep.subr.bf16.mxu0 0
  %867 = vmatpush2.bf16.msra.mxu0 0
  %868 = vmatprep.subr.bf16.mxu0 0
  %869 = vmatpush2.bf16.msra.mxu0 0
  %870 = vmatprep.subr.bf16.mxu0 0
  %871 = vmatpush2.bf16.msra.mxu0 0
  %872 = vmatprep.subr.bf16.mxu0 0
  %873 = vmatpush2.bf16.msra.mxu0 0
  %874 = vmatprep.mubr.bf16.mxu0 0
  %875 = vmatmul.mubr.bf16.gmra.mxu0 %v797
  %v876 = vpop.f32.mrf.mxu0
  %v877 = vadd.f32 0.0, %v876
  %v878 = vpop.f32.mrf.mxu0
  %v879 = vadd.f32 0.0, %v878
  %v880 = vpop.f32.mrf.mxu0
  %v881 = vadd.f32 0.0, %v880
  %v882 = vpop.f32.mrf.mxu0
  %v883 = vadd.f32 0.0, %v882
  %884 = vdwg.mxu0
  %885 = vmatprep.subr.bf16.mxu0 0
  %886 = vmatpush1.bf16.msra.mxu0 0
  %887 = vmatprep.subr.bf16.mxu0 0
  %888 = vmatpush1.bf16.msra.mxu0 0
  %889 = vmatprep.subr.bf16.mxu0 0
  %890 = vmatpush1.bf16.msra.mxu0 0
  %891 = vmatprep.subr.bf16.mxu0 0
  %892 = vmatpush1.bf16.msra.mxu0 0
  %893 = vmatprep.subr.bf16.mxu0 0
  %894 = vmatpush1.bf16.msra.mxu0 0
  %895 = vmatprep.subr.bf16.mxu0 0
  %896 = vmatpush1.bf16.msra.mxu0 0
  %897 = vmatprep.subr.bf16.mxu0 0
  %898 = vmatpush1.bf16.msra.mxu0 0
  %899 = vmatprep.subr.bf16.mxu0 %v789
  %900 = vmatpush1.bf16.msra.mxu0 %v788
  %901 = vmatprep.subr.bf16.mxu0 0
  %902 = vmatpush2.bf16.msra.mxu0 0
  %903 = vmatprep.subr.bf16.mxu0 0
  %904 = vmatpush2.bf16.msra.mxu0 0
  %905 = vmatprep.subr.bf16.mxu0 0
  %906 = vmatpush2.bf16.msra.mxu0 0
  %907 = vmatprep.subr.bf16.mxu0 0
  %908 = vmatpush2.bf16.msra.mxu0 0
  %909 = vmatprep.subr.bf16.mxu0 0
  %910 = vmatpush2.bf16.msra.mxu0 0
  %911 = vmatprep.subr.bf16.mxu0 0
  %912 = vmatpush2.bf16.msra.mxu0 0
  %913 = vmatprep.subr.bf16.mxu0 0
  %914 = vmatpush2.bf16.msra.mxu0 0
  %915 = vmatprep.subr.bf16.mxu0 0
  %916 = vmatpush2.bf16.msra.mxu0 0
  %917 = vmatprep.mubr.bf16.mxu0 0
  %918 = vmatmul.mubr.bf16.gmra.mxu0 %v797
  %v919 = vpop.f32.mrf.mxu0
  %v920 = vadd.f32 0.0, %v919
  %v921 = vpop.f32.mrf.mxu0
  %v922 = vadd.f32 0.0, %v921
  %v923 = vpop.f32.mrf.mxu0
  %v924 = vadd.f32 0.0, %v923
  %v925 = vpop.f32.mrf.mxu0
  %v926 = vadd.f32 0.0, %v925
  %927 = vdwg.mxu0
  %v928 = vadd.f32 %v741, %v834
  %v929 = vadd.f32 %v742, %v836
  %v930 = vadd.f32 %v743, %v877
  %v931 = vadd.f32 %v744, %v879
  %v932 = vadd.f32 %v745, %v920
  %v933 = vadd.f32 %v746, %v922
  %v934 = vadd.f32 %v747, %v838
  %v935 = vadd.f32 %v748, %v840
  %v936 = vadd.f32 %v749, %v881
  %v937 = vadd.f32 %v750, %v883
  %v938 = vadd.f32 %v751, %v924
  %v939 = vadd.f32 %v752, %v926
  %v940 = vld [vmem:[%s2 + $0x28] sm:$0xf]
  %v941 = vld [vmem:[%s2 + $0x2c] sm:$0xf]
  %v942 = vld [vmem:[%s0 + $0x4] sm:$0xff]
  %v943 = vld [vmem:[%s0 + $0xc] sm:$0xff]
  %v944 = vld [vmem:[%s0 + $0x14] sm:$0xff]
  %v945 = vld [vmem:[%s0 + $0x1c] sm:$0xf]
  %v946 = vld [vmem:[%s0 + $0x24] sm:$0xff]
  %v947 = vld [vmem:[%s0 + $0x2c] sm:$0xff]
  %v948 = vld [vmem:[%s0 + $0x34] sm:$0xff]
  %v949 = vld [vmem:[%s0 + $0x3c] sm:$0xf]
  %v952 = vunpack.c.l.b16 %v940
  %v953 = vunpack.c.l.b16 %v941
  %v954 = vpack.c.b16 %v953, %v952
  %v963 = vunpack.c.l.b16 %v942
  %v964 = vunpack.c.h.b16 %v942
  %v965 = vunpack.c.l.b16 %v943
  %v966 = vunpack.c.h.b16 %v943
  %v967 = vunpack.c.l.b16 %v944
  %v968 = vunpack.c.h.b16 %v944
  %v969 = vunpack.c.l.b16 %v945
  %v970 = vunpack.c.l.b16 %v946
  %v971 = vunpack.c.h.b16 %v946
  %v972 = vunpack.c.l.b16 %v947
  %v973 = vunpack.c.h.b16 %v947
  %v974 = vunpack.c.l.b16 %v948
  %v975 = vunpack.c.h.b16 %v948
  %v976 = vunpack.c.l.b16 %v949
  %v977 = vpack.c.b16 %v970, %v963
  %v978 = vpack.c.b16 %v971, %v964
  %v979 = vpack.c.b16 %v972, %v965
  %v980 = vpack.c.b16 %v973, %v966
  %v981 = vpack.c.b16 %v974, %v967
  %v982 = vpack.c.b16 %v975, %v968
  %v983 = vpack.c.b16 %v976, %v969
  %984 = vrot.lane.b32.xlu0 %v977, 127
  %v985 = vpop.permute.xlu0 %984
  %986 = vrot.lane.b32.xlu0 %v978, 127
  %v987 = vpop.permute.xlu0 %986
  %988 = vrot.lane.b32.xlu0 %v979, 127
  %v989 = vpop.permute.xlu0 %988
  %990 = vrot.lane.b32.xlu0 %v980, 127
  %v991 = vpop.permute.xlu0 %990
  %992 = vrot.lane.b32.xlu0 %v981, 127
  %v993 = vpop.permute.xlu0 %992
  %994 = vrot.lane.b32.xlu0 %v982, 127
  %v995 = vpop.permute.xlu0 %994
  %996 = vrot.lane.b32.xlu0 %v983, 127
  %v997 = vpop.permute.xlu0 %996
  %vm998 = vcmask 1039360
  %v999 = vsel %vm998, %v985, %v987
  %v1000 = vsel %vm998, %v987, %v989
  %v1001 = vsel %vm998, %v989, %v991
  %v1002 = vsel %vm998, %v991, %v993
  %v1003 = vsel %vm998, %v993, %v995
  %v1004 = vsel %vm998, %v995, %v997
  %v1012 = vsel %vm100, %v954, 0
  %1014 = vmatprep.subr.bf16.mxu0 0
  %1015 = vmatpush1.bf16.msra.mxu0 0
  %1016 = vmatprep.subr.bf16.mxu0 0
  %1017 = vmatpush1.bf16.msra.mxu0 0
  %1018 = vmatprep.subr.bf16.mxu0 0
  %1019 = vmatpush1.bf16.msra.mxu0 0
  %1020 = vmatprep.subr.bf16.mxu0 0
  %1021 = vmatpush1.bf16.msra.mxu0 0
  %1022 = vmatprep.subr.bf16.mxu0 0
  %1023 = vmatpush1.bf16.msra.mxu0 0
  %1024 = vmatprep.subr.bf16.mxu0 0
  %1025 = vmatpush1.bf16.msra.mxu0 0
  %1026 = vmatprep.subr.bf16.mxu0 0
  %1027 = vmatpush1.bf16.msra.mxu0 0
  %1028 = vmatprep.subr.bf16.mxu0 %v1000
  %1029 = vmatpush1.bf16.msra.mxu0 %v999
  %1030 = vmatprep.subr.bf16.mxu0 0
  %1031 = vmatpush2.bf16.msra.mxu0 0
  %1032 = vmatprep.subr.bf16.mxu0 0
  %1033 = vmatpush2.bf16.msra.mxu0 0
  %1034 = vmatprep.subr.bf16.mxu0 0
  %1035 = vmatpush2.bf16.msra.mxu0 0
  %1036 = vmatprep.subr.bf16.mxu0 0
  %1037 = vmatpush2.bf16.msra.mxu0 0
  %1038 = vmatprep.subr.bf16.mxu0 0
  %1039 = vmatpush2.bf16.msra.mxu0 0
  %1040 = vmatprep.subr.bf16.mxu0 0
  %1041 = vmatpush2.bf16.msra.mxu0 0
  %1042 = vmatprep.subr.bf16.mxu0 0
  %1043 = vmatpush2.bf16.msra.mxu0 0
  %1044 = vmatprep.subr.bf16.mxu0 0
  %1045 = vmatpush2.bf16.msra.mxu0 0
  %1046 = vmatprep.mubr.bf16.mxu0 0
  %1047 = vmatmul.mubr.bf16.gmra.mxu0 %v1012
  %v1048 = vpop.f32.mrf.mxu0
  %v1049 = vadd.f32 0.0, %v1048
  %v1050 = vpop.f32.mrf.mxu0
  %v1051 = vadd.f32 0.0, %v1050
  %v1052 = vpop.f32.mrf.mxu0
  %v1053 = vadd.f32 0.0, %v1052
  %v1054 = vpop.f32.mrf.mxu0
  %v1055 = vadd.f32 0.0, %v1054
  %1056 = vdwg.mxu0
  %1057 = vmatprep.subr.bf16.mxu0 0
  %1058 = vmatpush1.bf16.msra.mxu0 0
  %1059 = vmatprep.subr.bf16.mxu0 0
  %1060 = vmatpush1.bf16.msra.mxu0 0
  %1061 = vmatprep.subr.bf16.mxu0 0
  %1062 = vmatpush1.bf16.msra.mxu0 0
  %1063 = vmatprep.subr.bf16.mxu0 0
  %1064 = vmatpush1.bf16.msra.mxu0 0
  %1065 = vmatprep.subr.bf16.mxu0 0
  %1066 = vmatpush1.bf16.msra.mxu0 0
  %1067 = vmatprep.subr.bf16.mxu0 0
  %1068 = vmatpush1.bf16.msra.mxu0 0
  %1069 = vmatprep.subr.bf16.mxu0 0
  %1070 = vmatpush1.bf16.msra.mxu0 0
  %1071 = vmatprep.subr.bf16.mxu0 %v1002
  %1072 = vmatpush1.bf16.msra.mxu0 %v1001
  %1073 = vmatprep.subr.bf16.mxu0 0
  %1074 = vmatpush2.bf16.msra.mxu0 0
  %1075 = vmatprep.subr.bf16.mxu0 0
  %1076 = vmatpush2.bf16.msra.mxu0 0
  %1077 = vmatprep.subr.bf16.mxu0 0
  %1078 = vmatpush2.bf16.msra.mxu0 0
  %1079 = vmatprep.subr.bf16.mxu0 0
  %1080 = vmatpush2.bf16.msra.mxu0 0
  %1081 = vmatprep.subr.bf16.mxu0 0
  %1082 = vmatpush2.bf16.msra.mxu0 0
  %1083 = vmatprep.subr.bf16.mxu0 0
  %1084 = vmatpush2.bf16.msra.mxu0 0
  %1085 = vmatprep.subr.bf16.mxu0 0
  %1086 = vmatpush2.bf16.msra.mxu0 0
  %1087 = vmatprep.subr.bf16.mxu0 0
  %1088 = vmatpush2.bf16.msra.mxu0 0
  %1089 = vmatprep.mubr.bf16.mxu0 0
  %1090 = vmatmul.mubr.bf16.gmra.mxu0 %v1012
  %v1091 = vpop.f32.mrf.mxu0
  %v1092 = vadd.f32 0.0, %v1091
  %v1093 = vpop.f32.mrf.mxu0
  %v1094 = vadd.f32 0.0, %v1093
  %v1095 = vpop.f32.mrf.mxu0
  %v1096 = vadd.f32 0.0, %v1095
  %v1097 = vpop.f32.mrf.mxu0
  %v1098 = vadd.f32 0.0, %v1097
  %1099 = vdwg.mxu0
  %1100 = vmatprep.subr.bf16.mxu0 0
  %1101 = vmatpush1.bf16.msra.mxu0 0
  %1102 = vmatprep.subr.bf16.mxu0 0
  %1103 = vmatpush1.bf16.msra.mxu0 0
  %1104 = vmatprep.subr.bf16.mxu0 0
  %1105 = vmatpush1.bf16.msra.mxu0 0
  %1106 = vmatprep.subr.bf16.mxu0 0
  %1107 = vmatpush1.bf16.msra.mxu0 0
  %1108 = vmatprep.subr.bf16.mxu0 0
  %1109 = vmatpush1.bf16.msra.mxu0 0
  %1110 = vmatprep.subr.bf16.mxu0 0
  %1111 = vmatpush1.bf16.msra.mxu0 0
  %1112 = vmatprep.subr.bf16.mxu0 0
  %1113 = vmatpush1.bf16.msra.mxu0 0
  %1114 = vmatprep.subr.bf16.mxu0 %v1004
  %1115 = vmatpush1.bf16.msra.mxu0 %v1003
  %1116 = vmatprep.subr.bf16.mxu0 0
  %1117 = vmatpush2.bf16.msra.mxu0 0
  %1118 = vmatprep.subr.bf16.mxu0 0
  %1119 = vmatpush2.bf16.msra.mxu0 0
  %1120 = vmatprep.subr.bf16.mxu0 0
  %1121 = vmatpush2.bf16.msra.mxu0 0
  %1122 = vmatprep.subr.bf16.mxu0 0
  %1123 = vmatpush2.bf16.msra.mxu0 0
  %1124 = vmatprep.subr.bf16.mxu0 0
  %1125 = vmatpush2.bf16.msra.mxu0 0
  %1126 = vmatprep.subr.bf16.mxu0 0
  %1127 = vmatpush2.bf16.msra.mxu0 0
  %1128 = vmatprep.subr.bf16.mxu0 0
  %1129 = vmatpush2.bf16.msra.mxu0 0
  %1130 = vmatprep.subr.bf16.mxu0 0
  %1131 = vmatpush2.bf16.msra.mxu0 0
  %1132 = vmatprep.mubr.bf16.mxu0 0
  %1133 = vmatmul.mubr.bf16.gmra.mxu0 %v1012
  %v1134 = vpop.f32.mrf.mxu0
  %v1135 = vadd.f32 0.0, %v1134
  %v1136 = vpop.f32.mrf.mxu0
  %v1137 = vadd.f32 0.0, %v1136
  %v1138 = vpop.f32.mrf.mxu0
  %v1139 = vadd.f32 0.0, %v1138
  %v1140 = vpop.f32.mrf.mxu0
  %v1141 = vadd.f32 0.0, %v1140
  %1142 = vdwg.mxu0
  %v1143 = vadd.f32 %v928, %v1049
  %v1144 = vadd.f32 %v929, %v1051
  %v1145 = vadd.f32 %v930, %v1092
  %v1146 = vadd.f32 %v931, %v1094
  %v1147 = vadd.f32 %v932, %v1135
  %v1148 = vadd.f32 %v933, %v1137
  %v1149 = vadd.f32 %v934, %v1053
  %v1150 = vadd.f32 %v935, %v1055
  %v1151 = vadd.f32 %v936, %v1096
  %v1152 = vadd.f32 %v937, %v1098
  %v1153 = vadd.f32 %v938, %v1139
  %v1154 = vadd.f32 %v939, %v1141
  %v1155 = vld [vmem:[%s2 + $0x30] sm:$0xf]
  %v1156 = vld [vmem:[%s2 + $0x34] sm:$0xf]
  %v1159 = vunpack.c.l.b16 %v1155
  %v1160 = vunpack.c.l.b16 %v1156
  %v1161 = vpack.c.b16 %v1160, %v1159
  %1162 = vrot.lane.b32.xlu0 %v977, 111
  %v1163 = vpop.permute.xlu0 %1162
  %1164 = vrot.lane.b32.xlu0 %v978, 111
  %v1165 = vpop.permute.xlu0 %1164
  %1166 = vrot.lane.b32.xlu0 %v979, 111
  %v1167 = vpop.permute.xlu0 %1166
  %1168 = vrot.lane.b32.xlu0 %v980, 111
  %v1169 = vpop.permute.xlu0 %1168
  %1170 = vrot.lane.b32.xlu0 %v981, 111
  %v1171 = vpop.permute.xlu0 %1170
  %1172 = vrot.lane.b32.xlu0 %v982, 111
  %v1173 = vpop.permute.xlu0 %1172
  %1174 = vrot.lane.b32.xlu0 %v983, 111
  %v1175 = vpop.permute.xlu0 %1174
  %vm1176 = vcmask 908288
  %v1177 = vsel %vm1176, %v1163, %v1165
  %v1178 = vsel %vm1176, %v1165, %v1167
  %v1179 = vsel %vm1176, %v1167, %v1169
  %v1180 = vsel %vm1176, %v1169, %v1171
  %v1181 = vsel %vm1176, %v1171, %v1173
  %v1182 = vsel %vm1176, %v1173, %v1175
  %v1190 = vsel %vm100, %v1161, 0
  %1192 = vmatprep.subr.bf16.mxu0 0
  %1193 = vmatpush1.bf16.msra.mxu0 0
  %1194 = vmatprep.subr.bf16.mxu0 0
  %1195 = vmatpush1.bf16.msra.mxu0 0
  %1196 = vmatprep.subr.bf16.mxu0 0
  %1197 = vmatpush1.bf16.msra.mxu0 0
  %1198 = vmatprep.subr.bf16.mxu0 0
  %1199 = vmatpush1.bf16.msra.mxu0 0
  %1200 = vmatprep.subr.bf16.mxu0 0
  %1201 = vmatpush1.bf16.msra.mxu0 0
  %1202 = vmatprep.subr.bf16.mxu0 0
  %1203 = vmatpush1.bf16.msra.mxu0 0
  %1204 = vmatprep.subr.bf16.mxu0 0
  %1205 = vmatpush1.bf16.msra.mxu0 0
  %1206 = vmatprep.subr.bf16.mxu0 %v1178
  %1207 = vmatpush1.bf16.msra.mxu0 %v1177
  %1208 = vmatprep.subr.bf16.mxu0 0
  %1209 = vmatpush2.bf16.msra.mxu0 0
  %1210 = vmatprep.subr.bf16.mxu0 0
  %1211 = vmatpush2.bf16.msra.mxu0 0
  %1212 = vmatprep.subr.bf16.mxu0 0
  %1213 = vmatpush2.bf16.msra.mxu0 0
  %1214 = vmatprep.subr.bf16.mxu0 0
  %1215 = vmatpush2.bf16.msra.mxu0 0
  %1216 = vmatprep.subr.bf16.mxu0 0
  %1217 = vmatpush2.bf16.msra.mxu0 0
  %1218 = vmatprep.subr.bf16.mxu0 0
  %1219 = vmatpush2.bf16.msra.mxu0 0
  %1220 = vmatprep.subr.bf16.mxu0 0
  %1221 = vmatpush2.bf16.msra.mxu0 0
  %1222 = vmatprep.subr.bf16.mxu0 0
  %1223 = vmatpush2.bf16.msra.mxu0 0
  %1224 = vmatprep.mubr.bf16.mxu0 0
  %1225 = vmatmul.mubr.bf16.gmra.mxu0 %v1190
  %v1226 = vpop.f32.mrf.mxu0
  %v1227 = vadd.f32 0.0, %v1226
  %v1228 = vpop.f32.mrf.mxu0
  %v1229 = vadd.f32 0.0, %v1228
  %v1230 = vpop.f32.mrf.mxu0
  %v1231 = vadd.f32 0.0, %v1230
  %v1232 = vpop.f32.mrf.mxu0
  %v1233 = vadd.f32 0.0, %v1232
  %1234 = vdwg.mxu0
  %1235 = vmatprep.subr.bf16.mxu0 0
  %1236 = vmatpush1.bf16.msra.mxu0 0
  %1237 = vmatprep.subr.bf16.mxu0 0
  %1238 = vmatpush1.bf16.msra.mxu0 0
  %1239 = vmatprep.subr.bf16.mxu0 0
  %1240 = vmatpush1.bf16.msra.mxu0 0
  %1241 = vmatprep.subr.bf16.mxu0 0
  %1242 = vmatpush1.bf16.msra.mxu0 0
  %1243 = vmatprep.subr.bf16.mxu0 0
  %1244 = vmatpush1.bf16.msra.mxu0 0
  %1245 = vmatprep.subr.bf16.mxu0 0
  %1246 = vmatpush1.bf16.msra.mxu0 0
  %1247 = vmatprep.subr.bf16.mxu0 0
  %1248 = vmatpush1.bf16.msra.mxu0 0
  %1249 = vmatprep.subr.bf16.mxu0 %v1180
  %1250 = vmatpush1.bf16.msra.mxu0 %v1179
  %1251 = vmatprep.subr.bf16.mxu0 0
  %1252 = vmatpush2.bf16.msra.mxu0 0
  %1253 = vmatprep.subr.bf16.mxu0 0
  %1254 = vmatpush2.bf16.msra.mxu0 0
  %1255 = vmatprep.subr.bf16.mxu0 0
  %1256 = vmatpush2.bf16.msra.mxu0 0
  %1257 = vmatprep.subr.bf16.mxu0 0
  %1258 = vmatpush2.bf16.msra.mxu0 0
  %1259 = vmatprep.subr.bf16.mxu0 0
  %1260 = vmatpush2.bf16.msra.mxu0 0
  %1261 = vmatprep.subr.bf16.mxu0 0
  %1262 = vmatpush2.bf16.msra.mxu0 0
  %1263 = vmatprep.subr.bf16.mxu0 0
  %1264 = vmatpush2.bf16.msra.mxu0 0
  %1265 = vmatprep.subr.bf16.mxu0 0
  %1266 = vmatpush2.bf16.msra.mxu0 0
  %1267 = vmatprep.mubr.bf16.mxu0 0
  %1268 = vmatmul.mubr.bf16.gmra.mxu0 %v1190
  %v1269 = vpop.f32.mrf.mxu0
  %v1270 = vadd.f32 0.0, %v1269
  %v1271 = vpop.f32.mrf.mxu0
  %v1272 = vadd.f32 0.0, %v1271
  %v1273 = vpop.f32.mrf.mxu0
  %v1274 = vadd.f32 0.0, %v1273
  %v1275 = vpop.f32.mrf.mxu0
  %v1276 = vadd.f32 0.0, %v1275
  %1277 = vdwg.mxu0
  %1278 = vmatprep.subr.bf16.mxu0 0
  %1279 = vmatpush1.bf16.msra.mxu0 0
  %1280 = vmatprep.subr.bf16.mxu0 0
  %1281 = vmatpush1.bf16.msra.mxu0 0
  %1282 = vmatprep.subr.bf16.mxu0 0
  %1283 = vmatpush1.bf16.msra.mxu0 0
  %1284 = vmatprep.subr.bf16.mxu0 0
  %1285 = vmatpush1.bf16.msra.mxu0 0
  %1286 = vmatprep.subr.bf16.mxu0 0
  %1287 = vmatpush1.bf16.msra.mxu0 0
  %1288 = vmatprep.subr.bf16.mxu0 0
  %1289 = vmatpush1.bf16.msra.mxu0 0
  %1290 = vmatprep.subr.bf16.mxu0 0
  %1291 = vmatpush1.bf16.msra.mxu0 0
  %1292 = vmatprep.subr.bf16.mxu0 %v1182
  %1293 = vmatpush1.bf16.msra.mxu0 %v1181
  %1294 = vmatprep.subr.bf16.mxu0 0
  %1295 = vmatpush2.bf16.msra.mxu0 0
  %1296 = vmatprep.subr.bf16.mxu0 0
  %1297 = vmatpush2.bf16.msra.mxu0 0
  %1298 = vmatprep.subr.bf16.mxu0 0
  %1299 = vmatpush2.bf16.msra.mxu0 0
  %1300 = vmatprep.subr.bf16.mxu0 0
  %1301 = vmatpush2.bf16.msra.mxu0 0
  %1302 = vmatprep.subr.bf16.mxu0 0
  %1303 = vmatpush2.bf16.msra.mxu0 0
  %1304 = vmatprep.subr.bf16.mxu0 0
  %1305 = vmatpush2.bf16.msra.mxu0 0
  %1306 = vmatprep.subr.bf16.mxu0 0
  %1307 = vmatpush2.bf16.msra.mxu0 0
  %1308 = vmatprep.subr.bf16.mxu0 0
  %1309 = vmatpush2.bf16.msra.mxu0 0
  %1310 = vmatprep.mubr.bf16.mxu0 0
  %1311 = vmatmul.mubr.bf16.gmra.mxu0 %v1190
  %v1312 = vpop.f32.mrf.mxu0
  %v1313 = vadd.f32 0.0, %v1312
  %v1314 = vpop.f32.mrf.mxu0
  %v1315 = vadd.f32 0.0, %v1314
  %v1316 = vpop.f32.mrf.mxu0
  %v1317 = vadd.f32 0.0, %v1316
  %v1318 = vpop.f32.mrf.mxu0
  %v1319 = vadd.f32 0.0, %v1318
  %1320 = vdwg.mxu0
  %v1321 = vadd.f32 %v1143, %v1227
  %v1322 = vadd.f32 %v1144, %v1229
  %v1323 = vadd.f32 %v1145, %v1270
  %v1324 = vadd.f32 %v1146, %v1272
  %v1325 = vadd.f32 %v1147, %v1313
  %v1326 = vadd.f32 %v1148, %v1315
  %v1327 = vadd.f32 %v1149, %v1231
  %v1328 = vadd.f32 %v1150, %v1233
  %v1329 = vadd.f32 %v1151, %v1274
  %v1330 = vadd.f32 %v1152, %v1276
  %v1331 = vadd.f32 %v1153, %v1317
  %v1332 = vadd.f32 %v1154, %v1319
  %v1333 = vld [vmem:[%s2 + $0x38] sm:$0xf]
  %v1334 = vld [vmem:[%s2 + $0x3c] sm:$0xf]
  %v1337 = vunpack.c.l.b16 %v1333
  %v1338 = vunpack.c.l.b16 %v1334
  %v1339 = vpack.c.b16 %v1338, %v1337
  %1340 = vrot.lane.b32.xlu0 %v977, 110
  %v1341 = vpop.permute.xlu0 %1340
  %1342 = vrot.lane.b32.xlu0 %v978, 110
  %v1343 = vpop.permute.xlu0 %1342
  %1344 = vrot.lane.b32.xlu0 %v979, 110
  %v1345 = vpop.permute.xlu0 %1344
  %1346 = vrot.lane.b32.xlu0 %v980, 110
  %v1347 = vpop.permute.xlu0 %1346
  %1348 = vrot.lane.b32.xlu0 %v981, 110
  %v1349 = vpop.permute.xlu0 %1348
  %1350 = vrot.lane.b32.xlu0 %v982, 110
  %v1351 = vpop.permute.xlu0 %1350
  %1352 = vrot.lane.b32.xlu0 %v983, 110
  %v1353 = vpop.permute.xlu0 %1352
  %vm1354 = vcmask 900096
  %v1355 = vsel %vm1354, %v1341, %v1343
  %v1356 = vsel %vm1354, %v1343, %v1345
  %v1357 = vsel %vm1354, %v1345, %v1347
  %v1358 = vsel %vm1354, %v1347, %v1349
  %v1359 = vsel %vm1354, %v1349, %v1351
  %v1360 = vsel %vm1354, %v1351, %v1353
  %v1368 = vsel %vm100, %v1339, 0
  %1370 = vmatprep.subr.bf16.mxu0 0
  %1371 = vmatpush1.bf16.msra.mxu0 0
  %1372 = vmatprep.subr.bf16.mxu0 0
  %1373 = vmatpush1.bf16.msra.mxu0 0
  %1374 = vmatprep.subr.bf16.mxu0 0
  %1375 = vmatpush1.bf16.msra.mxu0 0
  %1376 = vmatprep.subr.bf16.mxu0 0
  %1377 = vmatpush1.bf16.msra.mxu0 0
  %1378 = vmatprep.subr.bf16.mxu0 0
  %1379 = vmatpush1.bf16.msra.mxu0 0
  %1380 = vmatprep.subr.bf16.mxu0 0
  %1381 = vmatpush1.bf16.msra.mxu0 0
  %1382 = vmatprep.subr.bf16.mxu0 0
  %1383 = vmatpush1.bf16.msra.mxu0 0
  %1384 = vmatprep.subr.bf16.mxu0 %v1356
  %1385 = vmatpush1.bf16.msra.mxu0 %v1355
  %1386 = vmatprep.subr.bf16.mxu0 0
  %1387 = vmatpush2.bf16.msra.mxu0 0
  %1388 = vmatprep.subr.bf16.mxu0 0
  %1389 = vmatpush2.bf16.msra.mxu0 0
  %1390 = vmatprep.subr.bf16.mxu0 0
  %1391 = vmatpush2.bf16.msra.mxu0 0
  %1392 = vmatprep.subr.bf16.mxu0 0
  %1393 = vmatpush2.bf16.msra.mxu0 0
  %1394 = vmatprep.subr.bf16.mxu0 0
  %1395 = vmatpush2.bf16.msra.mxu0 0
  %1396 = vmatprep.subr.bf16.mxu0 0
  %1397 = vmatpush2.bf16.msra.mxu0 0
  %1398 = vmatprep.subr.bf16.mxu0 0
  %1399 = vmatpush2.bf16.msra.mxu0 0
  %1400 = vmatprep.subr.bf16.mxu0 0
  %1401 = vmatpush2.bf16.msra.mxu0 0
  %1402 = vmatprep.mubr.bf16.mxu0 0
  %1403 = vmatmul.mubr.bf16.gmra.mxu0 %v1368
  %v1404 = vpop.f32.mrf.mxu0
  %v1405 = vadd.f32 0.0, %v1404
  %v1406 = vpop.f32.mrf.mxu0
  %v1407 = vadd.f32 0.0, %v1406
  %v1408 = vpop.f32.mrf.mxu0
  %v1409 = vadd.f32 0.0, %v1408
  %v1410 = vpop.f32.mrf.mxu0
  %v1411 = vadd.f32 0.0, %v1410
  %1412 = vdwg.mxu0
  %1413 = vmatprep.subr.bf16.mxu0 0
  %1414 = vmatpush1.bf16.msra.mxu0 0
  %1415 = vmatprep.subr.bf16.mxu0 0
  %1416 = vmatpush1.bf16.msra.mxu0 0
  %1417 = vmatprep.subr.bf16.mxu0 0
  %1418 = vmatpush1.bf16.msra.mxu0 0
  %1419 = vmatprep.subr.bf16.mxu0 0
  %1420 = vmatpush1.bf16.msra.mxu0 0
  %1421 = vmatprep.subr.bf16.mxu0 0
  %1422 = vmatpush1.bf16.msra.mxu0 0
  %1423 = vmatprep.subr.bf16.mxu0 0
  %1424 = vmatpush1.bf16.msra.mxu0 0
  %1425 = vmatprep.subr.bf16.mxu0 0
  %1426 = vmatpush1.bf16.msra.mxu0 0
  %1427 = vmatprep.subr.bf16.mxu0 %v1358
  %1428 = vmatpush1.bf16.msra.mxu0 %v1357
  %1429 = vmatprep.subr.bf16.mxu0 0
  %1430 = vmatpush2.bf16.msra.mxu0 0
  %1431 = vmatprep.subr.bf16.mxu0 0
  %1432 = vmatpush2.bf16.msra.mxu0 0
  %1433 = vmatprep.subr.bf16.mxu0 0
  %1434 = vmatpush2.bf16.msra.mxu0 0
  %1435 = vmatprep.subr.bf16.mxu0 0
  %1436 = vmatpush2.bf16.msra.mxu0 0
  %1437 = vmatprep.subr.bf16.mxu0 0
  %1438 = vmatpush2.bf16.msra.mxu0 0
  %1439 = vmatprep.subr.bf16.mxu0 0
  %1440 = vmatpush2.bf16.msra.mxu0 0
  %1441 = vmatprep.subr.bf16.mxu0 0
  %1442 = vmatpush2.bf16.msra.mxu0 0
  %1443 = vmatprep.subr.bf16.mxu0 0
  %1444 = vmatpush2.bf16.msra.mxu0 0
  %1445 = vmatprep.mubr.bf16.mxu0 0
  %1446 = vmatmul.mubr.bf16.gmra.mxu0 %v1368
  %v1447 = vpop.f32.mrf.mxu0
  %v1448 = vadd.f32 0.0, %v1447
  %v1449 = vpop.f32.mrf.mxu0
  %v1450 = vadd.f32 0.0, %v1449
  %v1451 = vpop.f32.mrf.mxu0
  %v1452 = vadd.f32 0.0, %v1451
  %v1453 = vpop.f32.mrf.mxu0
  %v1454 = vadd.f32 0.0, %v1453
  %1455 = vdwg.mxu0
  %1456 = vmatprep.subr.bf16.mxu0 0
  %1457 = vmatpush1.bf16.msra.mxu0 0
  %1458 = vmatprep.subr.bf16.mxu0 0
  %1459 = vmatpush1.bf16.msra.mxu0 0
  %1460 = vmatprep.subr.bf16.mxu0 0
  %1461 = vmatpush1.bf16.msra.mxu0 0
  %1462 = vmatprep.subr.bf16.mxu0 0
  %1463 = vmatpush1.bf16.msra.mxu0 0
  %1464 = vmatprep.subr.bf16.mxu0 0
  %1465 = vmatpush1.bf16.msra.mxu0 0
  %1466 = vmatprep.subr.bf16.mxu0 0
  %1467 = vmatpush1.bf16.msra.mxu0 0
  %1468 = vmatprep.subr.bf16.mxu0 0
  %1469 = vmatpush1.bf16.msra.mxu0 0
  %1470 = vmatprep.subr.bf16.mxu0 %v1360
  %1471 = vmatpush1.bf16.msra.mxu0 %v1359
  %1472 = vmatprep.subr.bf16.mxu0 0
  %1473 = vmatpush2.bf16.msra.mxu0 0
  %1474 = vmatprep.subr.bf16.mxu0 0
  %1475 = vmatpush2.bf16.msra.mxu0 0
  %1476 = vmatprep.subr.bf16.mxu0 0
  %1477 = vmatpush2.bf16.msra.mxu0 0
  %1478 = vmatprep.subr.bf16.mxu0 0
  %1479 = vmatpush2.bf16.msra.mxu0 0
  %1480 = vmatprep.subr.bf16.mxu0 0
  %1481 = vmatpush2.bf16.msra.mxu0 0
  %1482 = vmatprep.subr.bf16.mxu0 0
  %1483 = vmatpush2.bf16.msra.mxu0 0
  %1484 = vmatprep.subr.bf16.mxu0 0
  %1485 = vmatpush2.bf16.msra.mxu0 0
  %1486 = vmatprep.subr.bf16.mxu0 0
  %1487 = vmatpush2.bf16.msra.mxu0 0
  %1488 = vmatprep.mubr.bf16.mxu0 0
  %1489 = vmatmul.mubr.bf16.gmra.mxu0 %v1368
  %v1490 = vpop.f32.mrf.mxu0
  %v1491 = vadd.f32 0.0, %v1490
  %v1492 = vpop.f32.mrf.mxu0
  %v1493 = vadd.f32 0.0, %v1492
  %v1494 = vpop.f32.mrf.mxu0
  %v1495 = vadd.f32 0.0, %v1494
  %v1496 = vpop.f32.mrf.mxu0
  %v1497 = vadd.f32 0.0, %v1496
  %1498 = vdwg.mxu0
  %v1499 = vadd.f32 %v1321, %v1405
  %v1500 = vadd.f32 %v1322, %v1407
  %v1501 = vadd.f32 %v1323, %v1448
  %v1502 = vadd.f32 %v1324, %v1450
  %v1503 = vadd.f32 %v1325, %v1491
  %v1504 = vadd.f32 %v1326, %v1493
  %v1505 = vadd.f32 %v1327, %v1409
  %v1506 = vadd.f32 %v1328, %v1411
  %v1507 = vadd.f32 %v1329, %v1452
  %v1508 = vadd.f32 %v1330, %v1454
  %v1509 = vadd.f32 %v1331, %v1495
  %v1510 = vadd.f32 %v1332, %v1497
  %v1511 = vld [vmem:[%s2 + $0x40] sm:$0xf]
  %v1512 = vld [vmem:[%s2 + $0x44] sm:$0xf]
  %v1515 = vunpack.c.l.b16 %v1511
  %v1516 = vunpack.c.l.b16 %v1512
  %v1517 = vpack.c.b16 %v1516, %v1515
  %1518 = vrot.lane.b32.xlu0 %v977, 109
  %v1519 = vpop.permute.xlu0 %1518
  %1520 = vrot.lane.b32.xlu0 %v978, 109
  %v1521 = vpop.permute.xlu0 %1520
  %1522 = vrot.lane.b32.xlu0 %v979, 109
  %v1523 = vpop.permute.xlu0 %1522
  %1524 = vrot.lane.b32.xlu0 %v980, 109
  %v1525 = vpop.permute.xlu0 %1524
  %1526 = vrot.lane.b32.xlu0 %v981, 109
  %v1527 = vpop.permute.xlu0 %1526
  %1528 = vrot.lane.b32.xlu0 %v982, 109
  %v1529 = vpop.permute.xlu0 %1528
  %1530 = vrot.lane.b32.xlu0 %v983, 109
  %v1531 = vpop.permute.xlu0 %1530
  %vm1532 = vcmask 891904
  %v1533 = vsel %vm1532, %v1519, %v1521
  %v1534 = vsel %vm1532, %v1521, %v1523
  %v1535 = vsel %vm1532, %v1523, %v1525
  %v1536 = vsel %vm1532, %v1525, %v1527
  %v1537 = vsel %vm1532, %v1527, %v1529
  %v1538 = vsel %vm1532, %v1529, %v1531
  %v1546 = vsel %vm100, %v1517, 0
  %1548 = vmatprep.subr.bf16.mxu0 0
  %1549 = vmatpush1.bf16.msra.mxu0 0
  %1550 = vmatprep.subr.bf16.mxu0 0
  %1551 = vmatpush1.bf16.msra.mxu0 0
  %1552 = vmatprep.subr.bf16.mxu0 0
  %1553 = vmatpush1.bf16.msra.mxu0 0
  %1554 = vmatprep.subr.bf16.mxu0 0
  %1555 = vmatpush1.bf16.msra.mxu0 0
  %1556 = vmatprep.subr.bf16.mxu0 0
  %1557 = vmatpush1.bf16.msra.mxu0 0
  %1558 = vmatprep.subr.bf16.mxu0 0
  %1559 = vmatpush1.bf16.msra.mxu0 0
  %1560 = vmatprep.subr.bf16.mxu0 0
  %1561 = vmatpush1.bf16.msra.mxu0 0
  %1562 = vmatprep.subr.bf16.mxu0 %v1534
  %1563 = vmatpush1.bf16.msra.mxu0 %v1533
  %1564 = vmatprep.subr.bf16.mxu0 0
  %1565 = vmatpush2.bf16.msra.mxu0 0
  %1566 = vmatprep.subr.bf16.mxu0 0
  %1567 = vmatpush2.bf16.msra.mxu0 0
  %1568 = vmatprep.subr.bf16.mxu0 0
  %1569 = vmatpush2.bf16.msra.mxu0 0
  %1570 = vmatprep.subr.bf16.mxu0 0
  %1571 = vmatpush2.bf16.msra.mxu0 0
  %1572 = vmatprep.subr.bf16.mxu0 0
  %1573 = vmatpush2.bf16.msra.mxu0 0
  %1574 = vmatprep.subr.bf16.mxu0 0
  %1575 = vmatpush2.bf16.msra.mxu0 0
  %1576 = vmatprep.subr.bf16.mxu0 0
  %1577 = vmatpush2.bf16.msra.mxu0 0
  %1578 = vmatprep.subr.bf16.mxu0 0
  %1579 = vmatpush2.bf16.msra.mxu0 0
  %1580 = vmatprep.mubr.bf16.mxu0 0
  %1581 = vmatmul.mubr.bf16.gmra.mxu0 %v1546
  %v1582 = vpop.f32.mrf.mxu0
  %v1583 = vadd.f32 0.0, %v1582
  %v1584 = vpop.f32.mrf.mxu0
  %v1585 = vadd.f32 0.0, %v1584
  %v1586 = vpop.f32.mrf.mxu0
  %v1587 = vadd.f32 0.0, %v1586
  %v1588 = vpop.f32.mrf.mxu0
  %v1589 = vadd.f32 0.0, %v1588
  %1590 = vdwg.mxu0
  %1591 = vmatprep.subr.bf16.mxu0 0
  %1592 = vmatpush1.bf16.msra.mxu0 0
  %1593 = vmatprep.subr.bf16.mxu0 0
  %1594 = vmatpush1.bf16.msra.mxu0 0
  %1595 = vmatprep.subr.bf16.mxu0 0
  %1596 = vmatpush1.bf16.msra.mxu0 0
  %1597 = vmatprep.subr.bf16.mxu0 0
  %1598 = vmatpush1.bf16.msra.mxu0 0
  %1599 = vmatprep.subr.bf16.mxu0 0
  %1600 = vmatpush1.bf16.msra.mxu0 0
  %1601 = vmatprep.subr.bf16.mxu0 0
  %1602 = vmatpush1.bf16.msra.mxu0 0
  %1603 = vmatprep.subr.bf16.mxu0 0
  %1604 = vmatpush1.bf16.msra.mxu0 0
  %1605 = vmatprep.subr.bf16.mxu0 %v1536
  %1606 = vmatpush1.bf16.msra.mxu0 %v1535
  %1607 = vmatprep.subr.bf16.mxu0 0
  %1608 = vmatpush2.bf16.msra.mxu0 0
  %1609 = vmatprep.subr.bf16.mxu0 0
  %1610 = vmatpush2.bf16.msra.mxu0 0
  %1611 = vmatprep.subr.bf16.mxu0 0
  %1612 = vmatpush2.bf16.msra.mxu0 0
  %1613 = vmatprep.subr.bf16.mxu0 0
  %1614 = vmatpush2.bf16.msra.mxu0 0
  %1615 = vmatprep.subr.bf16.mxu0 0
  %1616 = vmatpush2.bf16.msra.mxu0 0
  %1617 = vmatprep.subr.bf16.mxu0 0
  %1618 = vmatpush2.bf16.msra.mxu0 0
  %1619 = vmatprep.subr.bf16.mxu0 0
  %1620 = vmatpush2.bf16.msra.mxu0 0
  %1621 = vmatprep.subr.bf16.mxu0 0
  %1622 = vmatpush2.bf16.msra.mxu0 0
  %1623 = vmatprep.mubr.bf16.mxu0 0
  %1624 = vmatmul.mubr.bf16.gmra.mxu0 %v1546
  %v1625 = vpop.f32.mrf.mxu0
  %v1626 = vadd.f32 0.0, %v1625
  %v1627 = vpop.f32.mrf.mxu0
  %v1628 = vadd.f32 0.0, %v1627
  %v1629 = vpop.f32.mrf.mxu0
  %v1630 = vadd.f32 0.0, %v1629
  %v1631 = vpop.f32.mrf.mxu0
  %v1632 = vadd.f32 0.0, %v1631
  %1633 = vdwg.mxu0
  %1634 = vmatprep.subr.bf16.mxu0 0
  %1635 = vmatpush1.bf16.msra.mxu0 0
  %1636 = vmatprep.subr.bf16.mxu0 0
  %1637 = vmatpush1.bf16.msra.mxu0 0
  %1638 = vmatprep.subr.bf16.mxu0 0
  %1639 = vmatpush1.bf16.msra.mxu0 0
  %1640 = vmatprep.subr.bf16.mxu0 0
  %1641 = vmatpush1.bf16.msra.mxu0 0
  %1642 = vmatprep.subr.bf16.mxu0 0
  %1643 = vmatpush1.bf16.msra.mxu0 0
  %1644 = vmatprep.subr.bf16.mxu0 0
  %1645 = vmatpush1.bf16.msra.mxu0 0
  %1646 = vmatprep.subr.bf16.mxu0 0
  %1647 = vmatpush1.bf16.msra.mxu0 0
  %1648 = vmatprep.subr.bf16.mxu0 %v1538
  %1649 = vmatpush1.bf16.msra.mxu0 %v1537
  %1650 = vmatprep.subr.bf16.mxu0 0
  %1651 = vmatpush2.bf16.msra.mxu0 0
  %1652 = vmatprep.subr.bf16.mxu0 0
  %1653 = vmatpush2.bf16.msra.mxu0 0
  %1654 = vmatprep.subr.bf16.mxu0 0
  %1655 = vmatpush2.bf16.msra.mxu0 0
  %1656 = vmatprep.subr.bf16.mxu0 0
  %1657 = vmatpush2.bf16.msra.mxu0 0
  %1658 = vmatprep.subr.bf16.mxu0 0
  %1659 = vmatpush2.bf16.msra.mxu0 0
  %1660 = vmatprep.subr.bf16.mxu0 0
  %1661 = vmatpush2.bf16.msra.mxu0 0
  %1662 = vmatprep.subr.bf16.mxu0 0
  %1663 = vmatpush2.bf16.msra.mxu0 0
  %1664 = vmatprep.subr.bf16.mxu0 0
  %1665 = vmatpush2.bf16.msra.mxu0 0
  %1666 = vmatprep.mubr.bf16.mxu0 0
  %1667 = vmatmul.mubr.bf16.gmra.mxu0 %v1546
  %v1668 = vpop.f32.mrf.mxu0
  %v1669 = vadd.f32 0.0, %v1668
  %v1670 = vpop.f32.mrf.mxu0
  %v1671 = vadd.f32 0.0, %v1670
  %v1672 = vpop.f32.mrf.mxu0
  %v1673 = vadd.f32 0.0, %v1672
  %v1674 = vpop.f32.mrf.mxu0
  %v1675 = vadd.f32 0.0, %v1674
  %1676 = vdwg.mxu0
  %v1677 = vadd.f32 %v1499, %v1583
  %v1678 = vadd.f32 %v1500, %v1585
  %v1679 = vadd.f32 %v1501, %v1626
  %v1680 = vadd.f32 %v1502, %v1628
  %v1681 = vadd.f32 %v1503, %v1669
  %v1682 = vadd.f32 %v1504, %v1671
  %v1683 = vadd.f32 %v1505, %v1587
  %v1684 = vadd.f32 %v1506, %v1589
  %v1685 = vadd.f32 %v1507, %v1630
  %v1686 = vadd.f32 %v1508, %v1632
  %v1687 = vadd.f32 %v1509, %v1673
  %v1688 = vadd.f32 %v1510, %v1675
  %v1689 = vld [vmem:[%s3] sm:$0xff]
  %v1690 = vld [vmem:[%s3 + $0x8] sm:$0xff]
  %1692 = vset.pattern.permute.xlu0 0
  %1693 = vperm.xlu0 %1692, %v1689
  %v1694 = vpop.permute.xlu0 %1693
  %1697 = vset.pattern.permute.xlu0 0
  %1698 = vperm.xlu0 %1697, %v1690
  %v1699 = vpop.permute.xlu0 %1698
  %v1701 = vadd.f32 %v1677, %v1694
  %v1702 = vadd.f32 %v1678, %v1694
  %v1703 = vadd.f32 %v1679, %v1694
  %v1704 = vadd.f32 %v1680, %v1694
  %v1705 = vadd.f32 %v1681, %v1694
  %v1706 = vadd.f32 %v1682, %v1694
  %v1707 = vadd.f32 %v1683, %v1699
  %v1708 = vadd.f32 %v1684, %v1699
  %v1709 = vadd.f32 %v1685, %v1699
  %v1710 = vadd.f32 %v1686, %v1699
  %v1711 = vadd.f32 %v1687, %v1699
  %v1712 = vadd.f32 %v1688, %v1699
  %v1713 = vmul.f32 %v1701, 0.2
  %v1714 = vmul.f32 %v1702, 0.2
  %v1715 = vmul.f32 %v1703, 0.2
  %v1716 = vmul.f32 %v1704, 0.2
  %v1717 = vmul.f32 %v1705, 0.2
  %v1718 = vmul.f32 %v1706, 0.2
  %v1719 = vmul.f32 %v1707, 0.2
  %v1720 = vmul.f32 %v1708, 0.2
  %v1721 = vmul.f32 %v1709, 0.2
  %v1722 = vmul.f32 %v1710, 0.2
  %v1723 = vmul.f32 %v1711, 0.2
  %v1724 = vmul.f32 %v1712, 0.2
  %v1725 = vmax.f32 %v1701, %v1713
  %v1726 = vmax.f32 %v1702, %v1714
  %v1727 = vmax.f32 %v1703, %v1715
  %v1728 = vmax.f32 %v1704, %v1716
  %v1729 = vmax.f32 %v1705, %v1717
  %v1730 = vmax.f32 %v1706, %v1718
  %v1731 = vmax.f32 %v1707, %v1719
  %v1732 = vmax.f32 %v1708, %v1720
  %v1733 = vmax.f32 %v1709, %v1721
  %v1734 = vmax.f32 %v1710, %v1722
  %v1735 = vmax.f32 %v1711, %v1723
  %v1736 = vmax.f32 %v1712, %v1724
  %v1737 = vld [vmem:[%s1] sm:$0x3f]
  %v1739 = vlaneseq
  %v1740 = vshrl.u32 %v1739, 7
  %v1741 = vsub.s32 0, %v1740
  %v1742 = vrot.slane %v1737, %v1741
  %v1743 = vlaneseq
  %v1744 = vshrl.u32 %v1743, 7
  %v1745 = vsub.s32 1, %v1744
  %v1746 = vrot.slane %v1737, %v1745
  %v1747 = vlaneseq
  %v1748 = vshrl.u32 %v1747, 7
  %v1749 = vsub.s32 2, %v1748
  %v1750 = vrot.slane %v1737, %v1749
  %v1751 = vlaneseq
  %v1752 = vshrl.u32 %v1751, 7
  %v1753 = vsub.s32 3, %v1752
  %v1754 = vrot.slane %v1737, %v1753
  %v1755 = vlaneseq
  %v1756 = vshrl.u32 %v1755, 7
  %v1757 = vsub.s32 4, %v1756
  %v1758 = vrot.slane %v1737, %v1757
  %v1759 = vlaneseq
  %v1760 = vshrl.u32 %v1759, 7
  %v1761 = vsub.s32 5, %v1760
  %v1762 = vrot.slane %v1737, %v1761
  %v1769 = vmul.f32 %v1725, %v1742
  %v1770 = vmul.f32 %v1726, %v1746
  %v1771 = vmul.f32 %v1727, %v1750
  %v1772 = vmul.f32 %v1728, %v1754
  %v1773 = vmul.f32 %v1729, %v1758
  %v1774 = vmul.f32 %v1730, %v1762
  %v1775 = vmul.f32 %v1731, %v1742
  %v1776 = vmul.f32 %v1732, %v1746
  %v1777 = vmul.f32 %v1733, %v1750
  %v1778 = vmul.f32 %v1734, %v1754
  %v1779 = vmul.f32 %v1735, %v1758
  %v1780 = vmul.f32 %v1736, %v1762
  %1781 = vst [vmem:[#allocation2] sm:$0xf] 0
  %1782 = vst [vmem:[#allocation2 + $0x20] sm:$0xf] 0
  %1783 = vst [vmem:[#allocation2 + $0x1c] sm:$0xf] 0
  %1784 = vst [vmem:[#allocation2 + $0x3c] sm:$0xf] 0
  %v1785 = vpack.c.bf16 %v1775, %v1769
  %v1786 = vpack.c.bf16 %v1776, %v1770
  %v1787 = vpack.c.bf16 %v1777, %v1771
  %v1788 = vpack.c.bf16 %v1778, %v1772
  %v1789 = vpack.c.bf16 %v1779, %v1773
  %v1790 = vpack.c.bf16 %v1780, %v1774
  %v1797 = vunpack.c.l.b16 %v1785
  %v1798 = vunpack.c.l.b16 %v1786
  %v1799 = vunpack.c.l.b16 %v1787
  %v1800 = vunpack.c.l.b16 %v1788
  %v1801 = vunpack.c.l.b16 %v1789
  %v1802 = vunpack.c.l.b16 %v1790
  %v1803 = vunpack.c.h.b16 %v1785
  %v1804 = vunpack.c.h.b16 %v1786
  %v1805 = vunpack.c.h.b16 %v1787
  %v1806 = vunpack.c.h.b16 %v1788
  %v1807 = vunpack.c.h.b16 %v1789
  %v1808 = vunpack.c.h.b16 %v1790
  %v1809 = vpack.c.b16 %v1798, %v1797
  %v1810 = vpack.c.b16 %v1800, %v1799
  %v1811 = vpack.c.b16 %v1802, %v1801
  %v1812 = vpack.c.b16 %v1804, %v1803
  %v1813 = vpack.c.b16 %v1806, %v1805
  %v1814 = vpack.c.b16 %v1808, %v1807
  %1821 = vst [vmem:[#allocation2 + $0x4] sm:$0xff] %v1809
  %1822 = vst [vmem:[#allocation2 + $0xc] sm:$0xff] %v1810
  %1823 = vst [vmem:[#allocation2 + $0x14] sm:$0xff] %v1811
  %1824 = vst [vmem:[#allocation2 + $0x24] sm:$0xff] %v1812
  %1825 = vst [vmem:[#allocation2 + $0x2c] sm:$0xff] %v1813
  %1826 = vst [vmem:[#allocation2 + $0x34] sm:$0xff] %v1814
  %v1827 = vld [vmem:[%s4] sm:$0xf]
  %v1828 = vld [vmem:[%s4 + $0x4] sm:$0xf]
  %v1829 = vld [vmem:[#allocation2] sm:$0xff]
  %v1830 = vld [vmem:[#allocation2 + $0x8] sm:$0xff]
  %v1831 = vld [vmem:[#allocation2 + $0x10] sm:$0xff]
  %v1832 = vld [vmem:[#allocation2 + $0x18] sm:$0xf]
  %v1833 = vld [vmem:[#allocation2 + $0x20] sm:$0xff]
  %v1834 = vld [vmem:[#allocation2 + $0x28] sm:$0xff]
  %v1835 = vld [vmem:[#allocation2 + $0x30] sm:$0xff]
  %v1836 = vld [vmem:[#allocation2 + $0x38] sm:$0xf]
  %v1837 = vld [vmem:[%s4 + $0x8] sm:$0xf]
  %v1838 = vld [vmem:[%s4 + $0xc] sm:$0xf]
  %v1841 = vunpack.c.l.b16 %v1837
  %v1842 = vunpack.c.l.b16 %v1838
  %v1843 = vpack.c.b16 %v1842, %v1841
  %v1852 = vunpack.c.l.b16 %v1829
  %v1853 = vunpack.c.h.b16 %v1829
  %v1854 = vunpack.c.l.b16 %v1830
  %v1855 = vunpack.c.h.b16 %v1830
  %v1856 = vunpack.c.l.b16 %v1831
  %v1857 = vunpack.c.h.b16 %v1831
  %v1858 = vunpack.c.l.b16 %v1832
  %v1859 = vunpack.c.l.b16 %v1833
  %v1860 = vunpack.c.h.b16 %v1833
  %v1861 = vunpack.c.l.b16 %v1834
  %v1862 = vunpack.c.h.b16 %v1834
  %v1863 = vunpack.c.l.b16 %v1835
  %v1864 = vunpack.c.h.b16 %v1835
  %v1865 = vunpack.c.l.b16 %v1836
  %v1866 = vpack.c.b16 %v1859, %v1852
  %v1867 = vpack.c.b16 %v1860, %v1853
  %v1868 = vpack.c.b16 %v1861, %v1854
  %v1869 = vpack.c.b16 %v1862, %v1855
  %v1870 = vpack.c.b16 %v1863, %v1856
  %v1871 = vpack.c.b16 %v1864, %v1857
  %v1872 = vpack.c.b16 %v1865, %v1858
  %1873 = vrot.lane.b32.xlu0 %v1866, 18
  %v1874 = vpop.permute.xlu0 %1873
  %1875 = vrot.lane.b32.xlu0 %v1867, 18
  %v1876 = vpop.permute.xlu0 %1875
  %1877 = vrot.lane.b32.xlu0 %v1868, 18
  %v1878 = vpop.permute.xlu0 %1877
  %1879 = vrot.lane.b32.xlu0 %v1869, 18
  %v1880 = vpop.permute.xlu0 %1879
  %1881 = vrot.lane.b32.xlu0 %v1870, 18
  %v1882 = vpop.permute.xlu0 %1881
  %1883 = vrot.lane.b32.xlu0 %v1871, 18
  %v1884 = vpop.permute.xlu0 %1883
  %1885 = vrot.lane.b32.xlu0 %v1872, 18
  %v1886 = vpop.permute.xlu0 %1885
  %v1887 = vsel %vm87, %v1874, %v1876
  %v1888 = vsel %vm87, %v1876, %v1878
  %v1889 = vsel %vm87, %v1878, %v1880
  %v1890 = vsel %vm87, %v1880, %v1882
  %v1891 = vsel %vm87, %v1882, %v1884
  %v1892 = vsel %vm87, %v1884, %v1886
  %v1900 = vsel %vm100, %v1843, 0
  %1902 = vmatprep.subr.bf16.mxu0 0
  %1903 = vmatpush1.bf16.msra.mxu0 0
  %1904 = vmatprep.subr.bf16.mxu0 0
  %1905 = vmatpush1.bf16.msra.mxu0 0
  %1906 = vmatprep.subr.bf16.mxu0 0
  %1907 = vmatpush1.bf16.msra.mxu0 0
  %1908 = vmatprep.subr.bf16.mxu0 0
  %1909 = vmatpush1.bf16.msra.mxu0 0
  %1910 = vmatprep.subr.bf16.mxu0 0
  %1911 = vmatpush1.bf16.msra.mxu0 0
  %1912 = vmatprep.subr.bf16.mxu0 0
  %1913 = vmatpush1.bf16.msra.mxu0 0
  %1914 = vmatprep.subr.bf16.mxu0 0
  %1915 = vmatpush1.bf16.msra.mxu0 0
  %1916 = vmatprep.subr.bf16.mxu0 %v1888
  %1917 = vmatpush1.bf16.msra.mxu0 %v1887
  %1918 = vmatprep.subr.bf16.mxu0 0
  %1919 = vmatpush2.bf16.msra.mxu0 0
  %1920 = vmatprep.subr.bf16.mxu0 0
  %1921 = vmatpush2.bf16.msra.mxu0 0
  %1922 = vmatprep.subr.bf16.mxu0 0
  %1923 = vmatpush2.bf16.msra.mxu0 0
  %1924 = vmatprep.subr.bf16.mxu0 0
  %1925 = vmatpush2.bf16.msra.mxu0 0
  %1926 = vmatprep.subr.bf16.mxu0 0
  %1927 = vmatpush2.bf16.msra.mxu0 0
  %1928 = vmatprep.subr.bf16.mxu0 0
  %1929 = vmatpush2.bf16.msra.mxu0 0
  %1930 = vmatprep.subr.bf16.mxu0 0
  %1931 = vmatpush2.bf16.msra.mxu0 0
  %1932 = vmatprep.subr.bf16.mxu0 0
  %1933 = vmatpush2.bf16.msra.mxu0 0
  %1934 = vmatprep.mubr.bf16.mxu0 0
  %1935 = vmatmul.mubr.bf16.gmra.mxu0 %v1900
  %v1936 = vpop.f32.mrf.mxu0
  %v1937 = vadd.f32 0.0, %v1936
  %v1938 = vpop.f32.mrf.mxu0
  %v1939 = vadd.f32 0.0, %v1938
  %v1940 = vpop.f32.mrf.mxu0
  %v1941 = vadd.f32 0.0, %v1940
  %v1942 = vpop.f32.mrf.mxu0
  %v1943 = vadd.f32 0.0, %v1942
  %1944 = vdwg.mxu0
  %1945 = vmatprep.subr.bf16.mxu0 0
  %1946 = vmatpush1.bf16.msra.mxu0 0
  %1947 = vmatprep.subr.bf16.mxu0 0
  %1948 = vmatpush1.bf16.msra.mxu0 0
  %1949 = vmatprep.subr.bf16.mxu0 0
  %1950 = vmatpush1.bf16.msra.mxu0 0
  %1951 = vmatprep.subr.bf16.mxu0 0
  %1952 = vmatpush1.bf16.msra.mxu0 0
  %1953 = vmatprep.subr.bf16.mxu0 0
  %1954 = vmatpush1.bf16.msra.mxu0 0
  %1955 = vmatprep.subr.bf16.mxu0 0
  %1956 = vmatpush1.bf16.msra.mxu0 0
  %1957 = vmatprep.subr.bf16.mxu0 0
  %1958 = vmatpush1.bf16.msra.mxu0 0
  %1959 = vmatprep.subr.bf16.mxu0 %v1890
  %1960 = vmatpush1.bf16.msra.mxu0 %v1889
  %1961 = vmatprep.subr.bf16.mxu0 0
  %1962 = vmatpush2.bf16.msra.mxu0 0
  %1963 = vmatprep.subr.bf16.mxu0 0
  %1964 = vmatpush2.bf16.msra.mxu0 0
  %1965 = vmatprep.subr.bf16.mxu0 0
  %1966 = vmatpush2.bf16.msra.mxu0 0
  %1967 = vmatprep.subr.bf16.mxu0 0
  %1968 = vmatpush2.bf16.msra.mxu0 0
  %1969 = vmatprep.subr.bf16.mxu0 0
  %1970 = vmatpush2.bf16.msra.mxu0 0
  %1971 = vmatprep.subr.bf16.mxu0 0
  %1972 = vmatpush2.bf16.msra.mxu0 0
  %1973 = vmatprep.subr.bf16.mxu0 0
  %1974 = vmatpush2.bf16.msra.mxu0 0
  %1975 = vmatprep.subr.bf16.mxu0 0
  %1976 = vmatpush2.bf16.msra.mxu0 0
  %1977 = vmatprep.mubr.bf16.mxu0 0
  %1978 = vmatmul.mubr.bf16.gmra.mxu0 %v1900
  %v1979 = vpop.f32.mrf.mxu0
  %v1980 = vadd.f32 0.0, %v1979
  %v1981 = vpop.f32.mrf.mxu0
  %v1982 = vadd.f32 0.0, %v1981
  %v1983 = vpop.f32.mrf.mxu0
  %v1984 = vadd.f32 0.0, %v1983
  %v1985 = vpop.f32.mrf.mxu0
  %v1986 = vadd.f32 0.0, %v1985
  %1987 = vdwg.mxu0
  %1988 = vmatprep.subr.bf16.mxu0 0
  %1989 = vmatpush1.bf16.msra.mxu0 0
  %1990 = vmatprep.subr.bf16.mxu0 0
  %1991 = vmatpush1.bf16.msra.mxu0 0
  %1992 = vmatprep.subr.bf16.mxu0 0
  %1993 = vmatpush1.bf16.msra.mxu0 0
  %1994 = vmatprep.subr.bf16.mxu0 0
  %1995 = vmatpush1.bf16.msra.mxu0 0
  %1996 = vmatprep.subr.bf16.mxu0 0
  %1997 = vmatpush1.bf16.msra.mxu0 0
  %1998 = vmatprep.subr.bf16.mxu0 0
  %1999 = vmatpush1.bf16.msra.mxu0 0
  %2000 = vmatprep.subr.bf16.mxu0 0
  %2001 = vmatpush1.bf16.msra.mxu0 0
  %2002 = vmatprep.subr.bf16.mxu0 %v1892
  %2003 = vmatpush1.bf16.msra.mxu0 %v1891
  %2004 = vmatprep.subr.bf16.mxu0 0
  %2005 = vmatpush2.bf16.msra.mxu0 0
  %2006 = vmatprep.subr.bf16.mxu0 0
  %2007 = vmatpush2.bf16.msra.mxu0 0
  %2008 = vmatprep.subr.bf16.mxu0 0
  %2009 = vmatpush2.bf16.msra.mxu0 0
  %2010 = vmatprep.subr.bf16.mxu0 0
  %2011 = vmatpush2.bf16.msra.mxu0 0
  %2012 = vmatprep.subr.bf16.mxu0 0
  %2013 = vmatpush2.bf16.msra.mxu0 0
  %2014 = vmatprep.subr.bf16.mxu0 0
  %2015 = vmatpush2.bf16.msra.mxu0 0
  %2016 = vmatprep.subr.bf16.mxu0 0
  %2017 = vmatpush2.bf16.msra.mxu0 0
  %2018 = vmatprep.subr.bf16.mxu0 0
  %2019 = vmatpush2.bf16.msra.mxu0 0
  %2020 = vmatprep.mubr.bf16.mxu0 0
  %2021 = vmatmul.mubr.bf16.gmra.mxu0 %v1900
  %v2022 = vpop.f32.mrf.mxu0
  %v2023 = vadd.f32 0.0, %v2022
  %v2024 = vpop.f32.mrf.mxu0
  %v2025 = vadd.f32 0.0, %v2024
  %v2026 = vpop.f32.mrf.mxu0
  %v2027 = vadd.f32 0.0, %v2026
  %v2028 = vpop.f32.mrf.mxu0
  %v2029 = vadd.f32 0.0, %v2028
  %2030 = vdwg.mxu0
  %v2033 = vunpack.c.l.b16 %v1827
  %v2034 = vunpack.c.l.b16 %v1828
  %v2035 = vpack.c.b16 %v2034, %v2033
  %2036 = vrot.lane.b32.xlu0 %v1866, 19
  %v2037 = vpop.permute.xlu0 %2036
  %2038 = vrot.lane.b32.xlu0 %v1867, 19
  %v2039 = vpop.permute.xlu0 %2038
  %2040 = vrot.lane.b32.xlu0 %v1868, 19
  %v2041 = vpop.permute.xlu0 %2040
  %2042 = vrot.lane.b32.xlu0 %v1869, 19
  %v2043 = vpop.permute.xlu0 %2042
  %2044 = vrot.lane.b32.xlu0 %v1870, 19
  %v2045 = vpop.permute.xlu0 %2044
  %2046 = vrot.lane.b32.xlu0 %v1871, 19
  %v2047 = vpop.permute.xlu0 %2046
  %2048 = vrot.lane.b32.xlu0 %v1872, 19
  %v2049 = vpop.permute.xlu0 %2048
  %v2050 = vsel %vm252, %v2037, %v2039
  %v2051 = vsel %vm252, %v2039, %v2041
  %v2052 = vsel %vm252, %v2041, %v2043
  %v2053 = vsel %vm252, %v2043, %v2045
  %v2054 = vsel %vm252, %v2045, %v2047
  %v2055 = vsel %vm252, %v2047, %v2049
  %v2063 = vsel %vm100, %v2035, 0
  %2065 = vmatprep.subr.bf16.mxu0 0
  %2066 = vmatpush1.bf16.msra.mxu0 0
  %2067 = vmatprep.subr.bf16.mxu0 0
  %2068 = vmatpush1.bf16.msra.mxu0 0
  %2069 = vmatprep.subr.bf16.mxu0 0
  %2070 = vmatpush1.bf16.msra.mxu0 0
  %2071 = vmatprep.subr.bf16.mxu0 0
  %2072 = vmatpush1.bf16.msra.mxu0 0
  %2073 = vmatprep.subr.bf16.mxu0 0
  %2074 = vmatpush1.bf16.msra.mxu0 0
  %2075 = vmatprep.subr.bf16.mxu0 0
  %2076 = vmatpush1.bf16.msra.mxu0 0
  %2077 = vmatprep.subr.bf16.mxu0 0
  %2078 = vmatpush1.bf16.msra.mxu0 0
  %2079 = vmatprep.subr.bf16.mxu0 %v2051
  %2080 = vmatpush1.bf16.msra.mxu0 %v2050
  %2081 = vmatprep.subr.bf16.mxu0 0
  %2082 = vmatpush2.bf16.msra.mxu0 0
  %2083 = vmatprep.subr.bf16.mxu0 0
  %2084 = vmatpush2.bf16.msra.mxu0 0
  %2085 = vmatprep.subr.bf16.mxu0 0
  %2086 = vmatpush2.bf16.msra.mxu0 0
  %2087 = vmatprep.subr.bf16.mxu0 0
  %2088 = vmatpush2.bf16.msra.mxu0 0
  %2089 = vmatprep.subr.bf16.mxu0 0
  %2090 = vmatpush2.bf16.msra.mxu0 0
  %2091 = vmatprep.subr.bf16.mxu0 0
  %2092 = vmatpush2.bf16.msra.mxu0 0
  %2093 = vmatprep.subr.bf16.mxu0 0
  %2094 = vmatpush2.bf16.msra.mxu0 0
  %2095 = vmatprep.subr.bf16.mxu0 0
  %2096 = vmatpush2.bf16.msra.mxu0 0
  %2097 = vmatprep.mubr.bf16.mxu0 0
  %2098 = vmatmul.mubr.bf16.gmra.mxu0 %v2063
  %v2099 = vpop.f32.mrf.mxu0
  %v2100 = vadd.f32 %v1937, %v2099
  %v2101 = vpop.f32.mrf.mxu0
  %v2102 = vadd.f32 %v1939, %v2101
  %v2103 = vpop.f32.mrf.mxu0
  %v2104 = vadd.f32 %v1941, %v2103
  %v2105 = vpop.f32.mrf.mxu0
  %v2106 = vadd.f32 %v1943, %v2105
  %2107 = vdwg.mxu0
  %2108 = vmatprep.subr.bf16.mxu0 0
  %2109 = vmatpush1.bf16.msra.mxu0 0
  %2110 = vmatprep.subr.bf16.mxu0 0
  %2111 = vmatpush1.bf16.msra.mxu0 0
  %2112 = vmatprep.subr.bf16.mxu0 0
  %2113 = vmatpush1.bf16.msra.mxu0 0
  %2114 = vmatprep.subr.bf16.mxu0 0
  %2115 = vmatpush1.bf16.msra.mxu0 0
  %2116 = vmatprep.subr.bf16.mxu0 0
  %2117 = vmatpush1.bf16.msra.mxu0 0
  %2118 = vmatprep.subr.bf16.mxu0 0
  %2119 = vmatpush1.bf16.msra.mxu0 0
  %2120 = vmatprep.subr.bf16.mxu0 0
  %2121 = vmatpush1.bf16.msra.mxu0 0
  %2122 = vmatprep.subr.bf16.mxu0 %v2053
  %2123 = vmatpush1.bf16.msra.mxu0 %v2052
  %2124 = vmatprep.subr.bf16.mxu0 0
  %2125 = vmatpush2.bf16.msra.mxu0 0
  %2126 = vmatprep.subr.bf16.mxu0 0
  %2127 = vmatpush2.bf16.msra.mxu0 0
  %2128 = vmatprep.subr.bf16.mxu0 0
  %2129 = vmatpush2.bf16.msra.mxu0 0
  %2130 = vmatprep.subr.bf16.mxu0 0
  %2131 = vmatpush2.bf16.msra.mxu0 0
  %2132 = vmatprep.subr.bf16.mxu0 0
  %2133 = vmatpush2.bf16.msra.mxu0 0
  %2134 = vmatprep.subr.bf16.mxu0 0
  %2135 = vmatpush2.bf16.msra.mxu0 0
  %2136 = vmatprep.subr.bf16.mxu0 0
  %2137 = vmatpush2.bf16.msra.mxu0 0
  %2138 = vmatprep.subr.bf16.mxu0 0
  %2139 = vmatpush2.bf16.msra.mxu0 0
  %2140 = vmatprep.mubr.bf16.mxu0 0
  %2141 = vmatmul.mubr.bf16.gmra.mxu0 %v2063
  %v2142 = vpop.f32.mrf.mxu0
  %v2143 = vadd.f32 %v1980, %v2142
  %v2144 = vpop.f32.mrf.mxu0
  %v2145 = vadd.f32 %v1982, %v2144
  %v2146 = vpop.f32.mrf.mxu0
  %v2147 = vadd.f32 %v1984, %v2146
  %v2148 = vpop.f32.mrf.mxu0
  %v2149 = vadd.f32 %v1986, %v2148
  %2150 = vdwg.mxu0
  %2151 = vmatprep.subr.bf16.mxu0 0
  %2152 = vmatpush1.bf16.msra.mxu0 0
  %2153 = vmatprep.subr.bf16.mxu0 0
  %2154 = vmatpush1.bf16.msra.mxu0 0
  %2155 = vmatprep.subr.bf16.mxu0 0
  %2156 = vmatpush1.bf16.msra.mxu0 0
  %2157 = vmatprep.subr.bf16.mxu0 0
  %2158 = vmatpush1.bf16.msra.mxu0 0
  %2159 = vmatprep.subr.bf16.mxu0 0
  %2160 = vmatpush1.bf16.msra.mxu0 0
  %2161 = vmatprep.subr.bf16.mxu0 0
  %2162 = vmatpush1.bf16.msra.mxu0 0
  %2163 = vmatprep.subr.bf16.mxu0 0
  %2164 = vmatpush1.bf16.msra.mxu0 0
  %2165 = vmatprep.subr.bf16.mxu0 %v2055
  %2166 = vmatpush1.bf16.msra.mxu0 %v2054
  %2167 = vmatprep.subr.bf16.mxu0 0
  %2168 = vmatpush2.bf16.msra.mxu0 0
  %2169 = vmatprep.subr.bf16.mxu0 0
  %2170 = vmatpush2.bf16.msra.mxu0 0
  %2171 = vmatprep.subr.bf16.mxu0 0
  %2172 = vmatpush2.bf16.msra.mxu0 0
  %2173 = vmatprep.subr.bf16.mxu0 0
  %2174 = vmatpush2.bf16.msra.mxu0 0
  %2175 = vmatprep.subr.bf16.mxu0 0
  %2176 = vmatpush2.bf16.msra.mxu0 0
  %2177 = vmatprep.subr.bf16.mxu0 0
  %2178 = vmatpush2.bf16.msra.mxu0 0
  %2179 = vmatprep.subr.bf16.mxu0 0
  %2180 = vmatpush2.bf16.msra.mxu0 0
  %2181 = vmatprep.subr.bf16.mxu0 0
  %2182 = vmatpush2.bf16.msra.mxu0 0
  %2183 = vmatprep.mubr.bf16.mxu0 0
  %2184 = vmatmul.mubr.bf16.gmra.mxu0 %v2063
  %v2185 = vpop.f32.mrf.mxu0
  %v2186 = vadd.f32 %v2023, %v2185
  %v2187 = vpop.f32.mrf.mxu0
  %v2188 = vadd.f32 %v2025, %v2187
  %v2189 = vpop.f32.mrf.mxu0
  %v2190 = vadd.f32 %v2027, %v2189
  %v2191 = vpop.f32.mrf.mxu0
  %v2192 = vadd.f32 %v2029, %v2191
  %2193 = vdwg.mxu0
  %v2194 = vld [vmem:[%s4 + $0x10] sm:$0xf]
  %v2195 = vld [vmem:[%s4 + $0x14] sm:$0xf]
  %v2198 = vunpack.c.l.b16 %v2194
  %v2199 = vunpack.c.l.b16 %v2195
  %v2200 = vpack.c.b16 %v2199, %v2198
  %2201 = vrot.lane.b32.xlu0 %v1866, 17
  %v2202 = vpop.permute.xlu0 %2201
  %2203 = vrot.lane.b32.xlu0 %v1867, 17
  %v2204 = vpop.permute.xlu0 %2203
  %2205 = vrot.lane.b32.xlu0 %v1868, 17
  %v2206 = vpop.permute.xlu0 %2205
  %2207 = vrot.lane.b32.xlu0 %v1869, 17
  %v2208 = vpop.permute.xlu0 %2207
  %2209 = vrot.lane.b32.xlu0 %v1870, 17
  %v2210 = vpop.permute.xlu0 %2209
  %2211 = vrot.lane.b32.xlu0 %v1871, 17
  %v2212 = vpop.permute.xlu0 %2211
  %2213 = vrot.lane.b32.xlu0 %v1872, 17
  %v2214 = vpop.permute.xlu0 %2213
  %v2215 = vsel %vm418, %v2202, %v2204
  %v2216 = vsel %vm418, %v2204, %v2206
  %v2217 = vsel %vm418, %v2206, %v2208
  %v2218 = vsel %vm418, %v2208, %v2210
  %v2219 = vsel %vm418, %v2210, %v2212
  %v2220 = vsel %vm418, %v2212, %v2214
  %v2228 = vsel %vm100, %v2200, 0
  %2230 = vmatprep.subr.bf16.mxu0 0
  %2231 = vmatpush1.bf16.msra.mxu0 0
  %2232 = vmatprep.subr.bf16.mxu0 0
  %2233 = vmatpush1.bf16.msra.mxu0 0
  %2234 = vmatprep.subr.bf16.mxu0 0
  %2235 = vmatpush1.bf16.msra.mxu0 0
  %2236 = vmatprep.subr.bf16.mxu0 0
  %2237 = vmatpush1.bf16.msra.mxu0 0
  %2238 = vmatprep.subr.bf16.mxu0 0
  %2239 = vmatpush1.bf16.msra.mxu0 0
  %2240 = vmatprep.subr.bf16.mxu0 0
  %2241 = vmatpush1.bf16.msra.mxu0 0
  %2242 = vmatprep.subr.bf16.mxu0 0
  %2243 = vmatpush1.bf16.msra.mxu0 0
  %2244 = vmatprep.subr.bf16.mxu0 %v2216
  %2245 = vmatpush1.bf16.msra.mxu0 %v2215
  %2246 = vmatprep.subr.bf16.mxu0 0
  %2247 = vmatpush2.bf16.msra.mxu0 0
  %2248 = vmatprep.subr.bf16.mxu0 0
  %2249 = vmatpush2.bf16.msra.mxu0 0
  %2250 = vmatprep.subr.bf16.mxu0 0
  %2251 = vmatpush2.bf16.msra.mxu0 0
  %2252 = vmatprep.subr.bf16.mxu0 0
  %2253 = vmatpush2.bf16.msra.mxu0 0
  %2254 = vmatprep.subr.bf16.mxu0 0
  %2255 = vmatpush2.bf16.msra.mxu0 0
  %2256 = vmatprep.subr.bf16.mxu0 0
  %2257 = vmatpush2.bf16.msra.mxu0 0
  %2258 = vmatprep.subr.bf16.mxu0 0
  %2259 = vmatpush2.bf16.msra.mxu0 0
  %2260 = vmatprep.subr.bf16.mxu0 0
  %2261 = vmatpush2.bf16.msra.mxu0 0
  %2262 = vmatprep.mubr.bf16.mxu0 0
  %2263 = vmatmul.mubr.bf16.gmra.mxu0 %v2228
  %v2264 = vpop.f32.mrf.mxu0
  %v2265 = vadd.f32 0.0, %v2264
  %v2266 = vpop.f32.mrf.mxu0
  %v2267 = vadd.f32 0.0, %v2266
  %v2268 = vpop.f32.mrf.mxu0
  %v2269 = vadd.f32 0.0, %v2268
  %v2270 = vpop.f32.mrf.mxu0
  %v2271 = vadd.f32 0.0, %v2270
  %2272 = vdwg.mxu0
  %2273 = vmatprep.subr.bf16.mxu0 0
  %2274 = vmatpush1.bf16.msra.mxu0 0
  %2275 = vmatprep.subr.bf16.mxu0 0
  %2276 = vmatpush1.bf16.msra.mxu0 0
  %2277 = vmatprep.subr.bf16.mxu0 0
  %2278 = vmatpush1.bf16.msra.mxu0 0
  %2279 = vmatprep.subr.bf16.mxu0 0
  %2280 = vmatpush1.bf16.msra.mxu0 0
  %2281 = vmatprep.subr.bf16.mxu0 0
  %2282 = vmatpush1.bf16.msra.mxu0 0
  %2283 = vmatprep.subr.bf16.mxu0 0
  %2284 = vmatpush1.bf16.msra.mxu0 0
  %2285 = vmatprep.subr.bf16.mxu0 0
  %2286 = vmatpush1.bf16.msra.mxu0 0
  %2287 = vmatprep.subr.bf16.mxu0 %v2218
  %2288 = vmatpush1.bf16.msra.mxu0 %v2217
  %2289 = vmatprep.subr.bf16.mxu0 0
  %2290 = vmatpush2.bf16.msra.mxu0 0
  %2291 = vmatprep.subr.bf16.mxu0 0
  %2292 = vmatpush2.bf16.msra.mxu0 0
  %2293 = vmatprep.subr.bf16.mxu0 0
  %2294 = vmatpush2.bf16.msra.mxu0 0
  %2295 = vmatprep.subr.bf16.mxu0 0
  %2296 = vmatpush2.bf16.msra.mxu0 0
  %2297 = vmatprep.subr.bf16.mxu0 0
  %2298 = vmatpush2.bf16.msra.mxu0 0
  %2299 = vmatprep.subr.bf16.mxu0 0
  %2300 = vmatpush2.bf16.msra.mxu0 0
  %2301 = vmatprep.subr.bf16.mxu0 0
  %2302 = vmatpush2.bf16.msra.mxu0 0
  %2303 = vmatprep.subr.bf16.mxu0 0
  %2304 = vmatpush2.bf16.msra.mxu0 0
  %2305 = vmatprep.mubr.bf16.mxu0 0
  %2306 = vmatmul.mubr.bf16.gmra.mxu0 %v2228
  %v2307 = vpop.f32.mrf.mxu0
  %v2308 = vadd.f32 0.0, %v2307
  %v2309 = vpop.f32.mrf.mxu0
  %v2310 = vadd.f32 0.0, %v2309
  %v2311 = vpop.f32.mrf.mxu0
  %v2312 = vadd.f32 0.0, %v2311
  %v2313 = vpop.f32.mrf.mxu0
  %v2314 = vadd.f32 0.0, %v2313
  %2315 = vdwg.mxu0
  %2316 = vmatprep.subr.bf16.mxu0 0
  %2317 = vmatpush1.bf16.msra.mxu0 0
  %2318 = vmatprep.subr.bf16.mxu0 0
  %2319 = vmatpush1.bf16.msra.mxu0 0
  %2320 = vmatprep.subr.bf16.mxu0 0
  %2321 = vmatpush1.bf16.msra.mxu0 0
  %2322 = vmatprep.subr.bf16.mxu0 0
  %2323 = vmatpush1.bf16.msra.mxu0 0
  %2324 = vmatprep.subr.bf16.mxu0 0
  %2325 = vmatpush1.bf16.msra.mxu0 0
  %2326 = vmatprep.subr.bf16.mxu0 0
  %2327 = vmatpush1.bf16.msra.mxu0 0
  %2328 = vmatprep.subr.bf16.mxu0 0
  %2329 = vmatpush1.bf16.msra.mxu0 0
  %2330 = vmatprep.subr.bf16.mxu0 %v2220
  %2331 = vmatpush1.bf16.msra.mxu0 %v2219
  %2332 = vmatprep.subr.bf16.mxu0 0
  %2333 = vmatpush2.bf16.msra.mxu0 0
  %2334 = vmatprep.subr.bf16.mxu0 0
  %2335 = vmatpush2.bf16.msra.mxu0 0
  %2336 = vmatprep.subr.bf16.mxu0 0
  %2337 = vmatpush2.bf16.msra.mxu0 0
  %2338 = vmatprep.subr.bf16.mxu0 0
  %2339 = vmatpush2.bf16.msra.mxu0 0
  %2340 = vmatprep.subr.bf16.mxu0 0
  %2341 = vmatpush2.bf16.msra.mxu0 0
  %2342 = vmatprep.subr.bf16.mxu0 0
  %2343 = vmatpush2.bf16.msra.mxu0 0
  %2344 = vmatprep.subr.bf16.mxu0 0
  %2345 = vmatpush2.bf16.msra.mxu0 0
  %2346 = vmatprep.subr.bf16.mxu0 0
  %2347 = vmatpush2.bf16.msra.mxu0 0
  %2348 = vmatprep.mubr.bf16.mxu0 0
  %2349 = vmatmul.mubr.bf16.gmra.mxu0 %v2228
  %v2350 = vpop.f32.mrf.mxu0
  %v2351 = vadd.f32 0.0, %v2350
  %v2352 = vpop.f32.mrf.mxu0
  %v2353 = vadd.f32 0.0, %v2352
  %v2354 = vpop.f32.mrf.mxu0
  %v2355 = vadd.f32 0.0, %v2354
  %v2356 = vpop.f32.mrf.mxu0
  %v2357 = vadd.f32 0.0, %v2356
  %2358 = vdwg.mxu0
  %v2359 = vadd.f32 %v2100, %v2265
  %v2360 = vadd.f32 %v2102, %v2267
  %v2361 = vadd.f32 %v2143, %v2308
  %v2362 = vadd.f32 %v2145, %v2310
  %v2363 = vadd.f32 %v2186, %v2351
  %v2364 = vadd.f32 %v2188, %v2353
  %v2365 = vadd.f32 %v2104, %v2269
  %v2366 = vadd.f32 %v2106, %v2271
  %v2367 = vadd.f32 %v2147, %v2312
  %v2368 = vadd.f32 %v2149, %v2314
  %v2369 = vadd.f32 %v2190, %v2355
  %v2370 = vadd.f32 %v2192, %v2357
  %v2371 = vld [vmem:[%s4 + $0x18] sm:$0xf]
  %v2372 = vld [vmem:[%s4 + $0x1c] sm:$0xf]
  %v2375 = vunpack.c.l.b16 %v2371
  %v2376 = vunpack.c.l.b16 %v2372
  %v2377 = vpack.c.b16 %v2376, %v2375
  %2378 = vrot.lane.b32.xlu0 %v1866, 1
  %v2379 = vpop.permute.xlu0 %2378
  %2380 = vrot.lane.b32.xlu0 %v1867, 1
  %v2381 = vpop.permute.xlu0 %2380
  %2382 = vrot.lane.b32.xlu0 %v1868, 1
  %v2383 = vpop.permute.xlu0 %2382
  %2384 = vrot.lane.b32.xlu0 %v1869, 1
  %v2385 = vpop.permute.xlu0 %2384
  %2386 = vrot.lane.b32.xlu0 %v1870, 1
  %v2387 = vpop.permute.xlu0 %2386
  %2388 = vrot.lane.b32.xlu0 %v1871, 1
  %v2389 = vpop.permute.xlu0 %2388
  %2390 = vrot.lane.b32.xlu0 %v1872, 1
  %v2391 = vpop.permute.xlu0 %2390
  %v2392 = vsel %vm596, %v2379, %v2381
  %v2393 = vsel %vm596, %v2381, %v2383
  %v2394 = vsel %vm596, %v2383, %v2385
  %v2395 = vsel %vm596, %v2385, %v2387
  %v2396 = vsel %vm596, %v2387, %v2389
  %v2397 = vsel %vm596, %v2389, %v2391
  %v2405 = vsel %vm100, %v2377, 0
  %2407 = vmatprep.subr.bf16.mxu0 0
  %2408 = vmatpush1.bf16.msra.mxu0 0
  %2409 = vmatprep.subr.bf16.mxu0 0
  %2410 = vmatpush1.bf16.msra.mxu0 0
  %2411 = vmatprep.subr.bf16.mxu0 0
  %2412 = vmatpush1.bf16.msra.mxu0 0
  %2413 = vmatprep.subr.bf16.mxu0 0
  %2414 = vmatpush1.bf16.msra.mxu0 0
  %2415 = vmatprep.subr.bf16.mxu0 0
  %2416 = vmatpush1.bf16.msra.mxu0 0
  %2417 = vmatprep.subr.bf16.mxu0 0
  %2418 = vmatpush1.bf16.msra.mxu0 0
  %2419 = vmatprep.subr.bf16.mxu0 0
  %2420 = vmatpush1.bf16.msra.mxu0 0
  %2421 = vmatprep.subr.bf16.mxu0 %v2393
  %2422 = vmatpush1.bf16.msra.mxu0 %v2392
  %2423 = vmatprep.subr.bf16.mxu0 0
  %2424 = vmatpush2.bf16.msra.mxu0 0
  %2425 = vmatprep.subr.bf16.mxu0 0
  %2426 = vmatpush2.bf16.msra.mxu0 0
  %2427 = vmatprep.subr.bf16.mxu0 0
  %2428 = vmatpush2.bf16.msra.mxu0 0
  %2429 = vmatprep.subr.bf16.mxu0 0
  %2430 = vmatpush2.bf16.msra.mxu0 0
  %2431 = vmatprep.subr.bf16.mxu0 0
  %2432 = vmatpush2.bf16.msra.mxu0 0
  %2433 = vmatprep.subr.bf16.mxu0 0
  %2434 = vmatpush2.bf16.msra.mxu0 0
  %2435 = vmatprep.subr.bf16.mxu0 0
  %2436 = vmatpush2.bf16.msra.mxu0 0
  %2437 = vmatprep.subr.bf16.mxu0 0
  %2438 = vmatpush2.bf16.msra.mxu0 0
  %2439 = vmatprep.mubr.bf16.mxu0 0
  %2440 = vmatmul.mubr.bf16.gmra.mxu0 %v2405
  %v2441 = vpop.f32.mrf.mxu0
  %v2442 = vadd.f32 0.0, %v2441
  %v2443 = vpop.f32.mrf.mxu0
  %v2444 = vadd.f32 0.0, %v2443
  %v2445 = vpop.f32.mrf.mxu0
  %v2446 = vadd.f32 0.0, %v2445
  %v2447 = vpop.f32.mrf.mxu0
  %v2448 = vadd.f32 0.0, %v2447
  %2449 = vdwg.mxu0
  %2450 = vmatprep.subr.bf16.mxu0 0
  %2451 = vmatpush1.bf16.msra.mxu0 0
  %2452 = vmatprep.subr.bf16.mxu0 0
  %2453 = vmatpush1.bf16.msra.mxu0 0
  %2454 = vmatprep.subr.bf16.mxu0 0
  %2455 = vmatpush1.bf16.msra.mxu0 0
  %2456 = vmatprep.subr.bf16.mxu0 0
  %2457 = vmatpush1.bf16.msra.mxu0 0
  %2458 = vmatprep.subr.bf16.mxu0 0
  %2459 = vmatpush1.bf16.msra.mxu0 0
  %2460 = vmatprep.subr.bf16.mxu0 0
  %2461 = vmatpush1.bf16.msra.mxu0 0
  %2462 = vmatprep.subr.bf16.mxu0 0
  %2463 = vmatpush1.bf16.msra.mxu0 0
  %2464 = vmatprep.subr.bf16.mxu0 %v2395
  %2465 = vmatpush1.bf16.msra.mxu0 %v2394
  %2466 = vmatprep.subr.bf16.mxu0 0
  %2467 = vmatpush2.bf16.msra.mxu0 0
  %2468 = vmatprep.subr.bf16.mxu0 0
  %2469 = vmatpush2.bf16.msra.mxu0 0
  %2470 = vmatprep.subr.bf16.mxu0 0
  %2471 = vmatpush2.bf16.msra.mxu0 0
  %2472 = vmatprep.subr.bf16.mxu0 0
  %2473 = vmatpush2.bf16.msra.mxu0 0
  %2474 = vmatprep.subr.bf16.mxu0 0
  %2475 = vmatpush2.bf16.msra.mxu0 0
  %2476 = vmatprep.subr.bf16.mxu0 0
  %2477 = vmatpush2.bf16.msra.mxu0 0
  %2478 = vmatprep.subr.bf16.mxu0 0
  %2479 = vmatpush2.bf16.msra.mxu0 0
  %2480 = vmatprep.subr.bf16.mxu0 0
  %2481 = vmatpush2.bf16.msra.mxu0 0
  %2482 = vmatprep.mubr.bf16.mxu0 0
  %2483 = vmatmul.mubr.bf16.gmra.mxu0 %v2405
  %v2484 = vpop.f32.mrf.mxu0
  %v2485 = vadd.f32 0.0, %v2484
  %v2486 = vpop.f32.mrf.mxu0
  %v2487 = vadd.f32 0.0, %v2486
  %v2488 = vpop.f32.mrf.mxu0
  %v2489 = vadd.f32 0.0, %v2488
  %v2490 = vpop.f32.mrf.mxu0
  %v2491 = vadd.f32 0.0, %v2490
  %2492 = vdwg.mxu0
  %2493 = vmatprep.subr.bf16.mxu0 0
  %2494 = vmatpush1.bf16.msra.mxu0 0
  %2495 = vmatprep.subr.bf16.mxu0 0
  %2496 = vmatpush1.bf16.msra.mxu0 0
  %2497 = vmatprep.subr.bf16.mxu0 0
  %2498 = vmatpush1.bf16.msra.mxu0 0
  %2499 = vmatprep.subr.bf16.mxu0 0
  %2500 = vmatpush1.bf16.msra.mxu0 0
  %2501 = vmatprep.subr.bf16.mxu0 0
  %2502 = vmatpush1.bf16.msra.mxu0 0
  %2503 = vmatprep.subr.bf16.mxu0 0
  %2504 = vmatpush1.bf16.msra.mxu0 0
  %2505 = vmatprep.subr.bf16.mxu0 0
  %2506 = vmatpush1.bf16.msra.mxu0 0
  %2507 = vmatprep.subr.bf16.mxu0 %v2397
  %2508 = vmatpush1.bf16.msra.mxu0 %v2396
  %2509 = vmatprep.subr.bf16.mxu0 0
  %2510 = vmatpush2.bf16.msra.mxu0 0
  %2511 = vmatprep.subr.bf16.mxu0 0
  %2512 = vmatpush2.bf16.msra.mxu0 0
  %2513 = vmatprep.subr.bf16.mxu0 0
  %2514 = vmatpush2.bf16.msra.mxu0 0
  %2515 = vmatprep.subr.bf16.mxu0 0
  %2516 = vmatpush2.bf16.msra.mxu0 0
  %2517 = vmatprep.subr.bf16.mxu0 0
  %2518 = vmatpush2.bf16.msra.mxu0 0
  %2519 = vmatprep.subr.bf16.mxu0 0
  %2520 = vmatpush2.bf16.msra.mxu0 0
  %2521 = vmatprep.subr.bf16.mxu0 0
  %2522 = vmatpush2.bf16.msra.mxu0 0
  %2523 = vmatprep.subr.bf16.mxu0 0
  %2524 = vmatpush2.bf16.msra.mxu0 0
  %2525 = vmatprep.mubr.bf16.mxu0 0
  %2526 = vmatmul.mubr.bf16.gmra.mxu0 %v2405
  %v2527 = vpop.f32.mrf.mxu0
  %v2528 = vadd.f32 0.0, %v2527
  %v2529 = vpop.f32.mrf.mxu0
  %v2530 = vadd.f32 0.0, %v2529
  %v2531 = vpop.f32.mrf.mxu0
  %v2532 = vadd.f32 0.0, %v2531
  %v2533 = vpop.f32.mrf.mxu0
  %v2534 = vadd.f32 0.0, %v2533
  %2535 = vdwg.mxu0
  %v2536 = vadd.f32 %v2359, %v2442
  %v2537 = vadd.f32 %v2360, %v2444
  %v2538 = vadd.f32 %v2361, %v2485
  %v2539 = vadd.f32 %v2362, %v2487
  %v2540 = vadd.f32 %v2363, %v2528
  %v2541 = vadd.f32 %v2364, %v2530
  %v2542 = vadd.f32 %v2365, %v2446
  %v2543 = vadd.f32 %v2366, %v2448
  %v2544 = vadd.f32 %v2367, %v2489
  %v2545 = vadd.f32 %v2368, %v2491
  %v2546 = vadd.f32 %v2369, %v2532
  %v2547 = vadd.f32 %v2370, %v2534
  %v2548 = vld [vmem:[%s4 + $0x20] sm:$0xf]
  %v2549 = vld [vmem:[%s4 + $0x24] sm:$0xf]
  %v2550 = vld [vmem:[#allocation2 + $0x4] sm:$0xff]
  %v2551 = vld [vmem:[#allocation2 + $0xc] sm:$0xff]
  %v2552 = vld [vmem:[#allocation2 + $0x14] sm:$0xff]
  %v2553 = vld [vmem:[#allocation2 + $0x24] sm:$0xff]
  %v2554 = vld [vmem:[#allocation2 + $0x2c] sm:$0xff]
  %v2555 = vld [vmem:[#allocation2 + $0x34] sm:$0xff]
  %v2558 = vunpack.c.l.b16 %v2548
  %v2559 = vunpack.c.l.b16 %v2549
  %v2560 = vpack.c.b16 %v2559, %v2558
  %v2567 = vunpack.c.l.b16 %v2550
  %v2568 = vunpack.c.h.b16 %v2550
  %v2569 = vunpack.c.l.b16 %v2551
  %v2570 = vunpack.c.h.b16 %v2551
  %v2571 = vunpack.c.l.b16 %v2552
  %v2572 = vunpack.c.h.b16 %v2552
  %v2573 = vunpack.c.l.b16 %v2553
  %v2574 = vunpack.c.h.b16 %v2553
  %v2575 = vunpack.c.l.b16 %v2554
  %v2576 = vunpack.c.h.b16 %v2554
  %v2577 = vunpack.c.l.b16 %v2555
  %v2578 = vunpack.c.h.b16 %v2555
  %v2579 = vpack.c.b16 %v2573, %v2567
  %v2580 = vpack.c.b16 %v2574, %v2568
  %v2581 = vpack.c.b16 %v2575, %v2569
  %v2582 = vpack.c.b16 %v2576, %v2570
  %v2583 = vpack.c.b16 %v2577, %v2571
  %v2584 = vpack.c.b16 %v2578, %v2572
  %v2592 = vsel %vm100, %v2560, 0
  %2594 = vmatprep.subr.bf16.mxu0 0
  %2595 = vmatpush1.bf16.msra.mxu0 0
  %2596 = vmatprep.subr.bf16.mxu0 0
  %2597 = vmatpush1.bf16.msra.mxu0 0
  %2598 = vmatprep.subr.bf16.mxu0 0
  %2599 = vmatpush1.bf16.msra.mxu0 0
  %2600 = vmatprep.subr.bf16.mxu0 0
  %2601 = vmatpush1.bf16.msra.mxu0 0
  %2602 = vmatprep.subr.bf16.mxu0 0
  %2603 = vmatpush1.bf16.msra.mxu0 0
  %2604 = vmatprep.subr.bf16.mxu0 0
  %2605 = vmatpush1.bf16.msra.mxu0 0
  %2606 = vmatprep.subr.bf16.mxu0 0
  %2607 = vmatpush1.bf16.msra.mxu0 0
  %2608 = vmatprep.subr.bf16.mxu0 %v2580
  %2609 = vmatpush1.bf16.msra.mxu0 %v2579
  %2610 = vmatprep.subr.bf16.mxu0 0
  %2611 = vmatpush2.bf16.msra.mxu0 0
  %2612 = vmatprep.subr.bf16.mxu0 0
  %2613 = vmatpush2.bf16.msra.mxu0 0
  %2614 = vmatprep.subr.bf16.mxu0 0
  %2615 = vmatpush2.bf16.msra.mxu0 0
  %2616 = vmatprep.subr.bf16.mxu0 0
  %2617 = vmatpush2.bf16.msra.mxu0 0
  %2618 = vmatprep.subr.bf16.mxu0 0
  %2619 = vmatpush2.bf16.msra.mxu0 0
  %2620 = vmatprep.subr.bf16.mxu0 0
  %2621 = vmatpush2.bf16.msra.mxu0 0
  %2622 = vmatprep.subr.bf16.mxu0 0
  %2623 = vmatpush2.bf16.msra.mxu0 0
  %2624 = vmatprep.subr.bf16.mxu0 0
  %2625 = vmatpush2.bf16.msra.mxu0 0
  %2626 = vmatprep.mubr.bf16.mxu0 0
  %2627 = vmatmul.mubr.bf16.gmra.mxu0 %v2592
  %v2628 = vpop.f32.mrf.mxu0
  %v2629 = vadd.f32 0.0, %v2628
  %v2630 = vpop.f32.mrf.mxu0
  %v2631 = vadd.f32 0.0, %v2630
  %v2632 = vpop.f32.mrf.mxu0
  %v2633 = vadd.f32 0.0, %v2632
  %v2634 = vpop.f32.mrf.mxu0
  %v2635 = vadd.f32 0.0, %v2634
  %2636 = vdwg.mxu0
  %2637 = vmatprep.subr.bf16.mxu0 0
  %2638 = vmatpush1.bf16.msra.mxu0 0
  %2639 = vmatprep.subr.bf16.mxu0 0
  %2640 = vmatpush1.bf16.msra.mxu0 0
  %2641 = vmatprep.subr.bf16.mxu0 0
  %2642 = vmatpush1.bf16.msra.mxu0 0
  %2643 = vmatprep.subr.bf16.mxu0 0
  %2644 = vmatpush1.bf16.msra.mxu0 0
  %2645 = vmatprep.subr.bf16.mxu0 0
  %2646 = vmatpush1.bf16.msra.mxu0 0
  %2647 = vmatprep.subr.bf16.mxu0 0
  %2648 = vmatpush1.bf16.msra.mxu0 0
  %2649 = vmatprep.subr.bf16.mxu0 0
  %2650 = vmatpush1.bf16.msra.mxu0 0
  %2651 = vmatprep.subr.bf16.mxu0 %v2582
  %2652 = vmatpush1.bf16.msra.mxu0 %v2581
  %2653 = vmatprep.subr.bf16.mxu0 0
  %2654 = vmatpush2.bf16.msra.mxu0 0
  %2655 = vmatprep.subr.bf16.mxu0 0
  %2656 = vmatpush2.bf16.msra.mxu0 0
  %2657 = vmatprep.subr.bf16.mxu0 0
  %2658 = vmatpush2.bf16.msra.mxu0 0
  %2659 = vmatprep.subr.bf16.mxu0 0
  %2660 = vmatpush2.bf16.msra.mxu0 0
  %2661 = vmatprep.subr.bf16.mxu0 0
  %2662 = vmatpush2.bf16.msra.mxu0 0
  %2663 = vmatprep.subr.bf16.mxu0 0
  %2664 = vmatpush2.bf16.msra.mxu0 0
  %2665 = vmatprep.subr.bf16.mxu0 0
  %2666 = vmatpush2.bf16.msra.mxu0 0
  %2667 = vmatprep.subr.bf16.mxu0 0
  %2668 = vmatpush2.bf16.msra.mxu0 0
  %2669 = vmatprep.mubr.bf16.mxu0 0
  %2670 = vmatmul.mubr.bf16.gmra.mxu0 %v2592
  %v2671 = vpop.f32.mrf.mxu0
  %v2672 = vadd.f32 0.0, %v2671
  %v2673 = vpop.f32.mrf.mxu0
  %v2674 = vadd.f32 0.0, %v2673
  %v2675 = vpop.f32.mrf.mxu0
  %v2676 = vadd.f32 0.0, %v2675
  %v2677 = vpop.f32.mrf.mxu0
  %v2678 = vadd.f32 0.0, %v2677
  %2679 = vdwg.mxu0
  %2680 = vmatprep.subr.bf16.mxu0 0
  %2681 = vmatpush1.bf16.msra.mxu0 0
  %2682 = vmatprep.subr.bf16.mxu0 0
  %2683 = vmatpush1.bf16.msra.mxu0 0
  %2684 = vmatprep.subr.bf16.mxu0 0
  %2685 = vmatpush1.bf16.msra.mxu0 0
  %2686 = vmatprep.subr.bf16.mxu0 0
  %2687 = vmatpush1.bf16.msra.mxu0 0
  %2688 = vmatprep.subr.bf16.mxu0 0
  %2689 = vmatpush1.bf16.msra.mxu0 0
  %2690 = vmatprep.subr.bf16.mxu0 0
  %2691 = vmatpush1.bf16.msra.mxu0 0
  %2692 = vmatprep.subr.bf16.mxu0 0
  %2693 = vmatpush1.bf16.msra.mxu0 0
  %2694 = vmatprep.subr.bf16.mxu0 %v2584
  %2695 = vmatpush1.bf16.msra.mxu0 %v2583
  %2696 = vmatprep.subr.bf16.mxu0 0
  %2697 = vmatpush2.bf16.msra.mxu0 0
  %2698 = vmatprep.subr.bf16.mxu0 0
  %2699 = vmatpush2.bf16.msra.mxu0 0
  %2700 = vmatprep.subr.bf16.mxu0 0
  %2701 = vmatpush2.bf16.msra.mxu0 0
  %2702 = vmatprep.subr.bf16.mxu0 0
  %2703 = vmatpush2.bf16.msra.mxu0 0
  %2704 = vmatprep.subr.bf16.mxu0 0
  %2705 = vmatpush2.bf16.msra.mxu0 0
  %2706 = vmatprep.subr.bf16.mxu0 0
  %2707 = vmatpush2.bf16.msra.mxu0 0
  %2708 = vmatprep.subr.bf16.mxu0 0
  %2709 = vmatpush2.bf16.msra.mxu0 0
  %2710 = vmatprep.subr.bf16.mxu0 0
  %2711 = vmatpush2.bf16.msra.mxu0 0
  %2712 = vmatprep.mubr.bf16.mxu0 0
  %2713 = vmatmul.mubr.bf16.gmra.mxu0 %v2592
  %v2714 = vpop.f32.mrf.mxu0
  %v2715 = vadd.f32 0.0, %v2714
  %v2716 = vpop.f32.mrf.mxu0
  %v2717 = vadd.f32 0.0, %v2716
  %v2718 = vpop.f32.mrf.mxu0
  %v2719 = vadd.f32 0.0, %v2718
  %v2720 = vpop.f32.mrf.mxu0
  %v2721 = vadd.f32 0.0, %v2720
  %2722 = vdwg.mxu0
  %v2723 = vadd.f32 %v2536, %v2629
  %v2724 = vadd.f32 %v2537, %v2631
  %v2725 = vadd.f32 %v2538, %v2672
  %v2726 = vadd.f32 %v2539, %v2674
  %v2727 = vadd.f32 %v2540, %v2715
  %v2728 = vadd.f32 %v2541, %v2717
  %v2729 = vadd.f32 %v2542, %v2633
  %v2730 = vadd.f32 %v2543, %v2635
  %v2731 = vadd.f32 %v2544, %v2676
  %v2732 = vadd.f32 %v2545, %v2678
  %v2733 = vadd.f32 %v2546, %v2719
  %v2734 = vadd.f32 %v2547, %v2721
  %v2735 = vld [vmem:[%s4 + $0x28] sm:$0xf]
  %v2736 = vld [vmem:[%s4 + $0x2c] sm:$0xf]
  %v2737 = vld [vmem:[#allocation2 + $0x4] sm:$0xff]
  %v2738 = vld [vmem:[#allocation2 + $0xc] sm:$0xff]
  %v2739 = vld [vmem:[#allocation2 + $0x14] sm:$0xff]
  %v2740 = vld [vmem:[#allocation2 + $0x1c] sm:$0xf]
  %v2741 = vld [vmem:[#allocation2 + $0x24] sm:$0xff]
  %v2742 = vld [vmem:[#allocation2 + $0x2c] sm:$0xff]
  %v2743 = vld [vmem:[#allocation2 + $0x34] sm:$0xff]
  %v2744 = vld [vmem:[#allocation2 + $0x3c] sm:$0xf]
  %v2747 = vunpack.c.l.b16 %v2735
  %v2748 = vunpack.c.l.b16 %v2736
  %v2749 = vpack.c.b16 %v2748, %v2747
  %v2758 = vunpack.c.l.b16 %v2737
  %v2759 = vunpack.c.h.b16 %v2737
  %v2760 = vunpack.c.l.b16 %v2738
  %v2761 = vunpack.c.h.b16 %v2738
  %v2762 = vunpack.c.l.b16 %v2739
  %v2763 = vunpack.c.h.b16 %v2739
  %v2764 = vunpack.c.l.b16 %v2740
  %v2765 = vunpack.c.l.b16 %v2741
  %v2766 = vunpack.c.h.b16 %v2741
  %v2767 = vunpack.c.l.b16 %v2742
  %v2768 = vunpack.c.h.b16 %v2742
  %v2769 = vunpack.c.l.b16 %v2743
  %v2770 = vunpack.c.h.b16 %v2743
  %v2771 = vunpack.c.l.b16 %v2744
  %v2772 = vpack.c.b16 %v2765, %v2758
  %v2773 = vpack.c.b16 %v2766, %v2759
  %v2774 = vpack.c.b16 %v2767, %v2760
  %v2775 = vpack.c.b16 %v2768, %v2761
  %v2776 = vpack.c.b16 %v2769, %v2762
  %v2777 = vpack.c.b16 %v2770, %v2763
  %v2778 = vpack.c.b16 %v2771, %v2764
  %2779 = vrot.lane.b32.xlu0 %v2772, 127
  %v2780 = vpop.permute.xlu0 %2779
  %2781 = vrot.lane.b32.xlu0 %v2773, 127
  %v2782 = vpop.permute.xlu0 %2781
  %2783 = vrot.lane.b32.xlu0 %v2774, 127
  %v2784 = vpop.permute.xlu0 %2783
  %2785 = vrot.lane.b32.xlu0 %v2775, 127
  %v2786 = vpop.permute.xlu0 %2785
  %2787 = vrot.lane.b32.xlu0 %v2776, 127
  %v2788 = vpop.permute.xlu0 %2787
  %2789 = vrot.lane.b32.xlu0 %v2777, 127
  %v2790 = vpop.permute.xlu0 %2789
  %2791 = vrot.lane.b32.xlu0 %v2778, 127
  %v2792 = vpop.permute.xlu0 %2791
  %v2793 = vsel %vm998, %v2780, %v2782
  %v2794 = vsel %vm998, %v2782, %v2784
  %v2795 = vsel %vm998, %v2784, %v2786
  %v2796 = vsel %vm998, %v2786, %v2788
  %v2797 = vsel %vm998, %v2788, %v2790
  %v2798 = vsel %vm998, %v2790, %v2792
  %v2806 = vsel %vm100, %v2749, 0
  %2808 = vmatprep.subr.bf16.mxu0 0
  %2809 = vmatpush1.bf16.msra.mxu0 0
  %2810 = vmatprep.subr.bf16.mxu0 0
  %2811 = vmatpush1.bf16.msra.mxu0 0
  %2812 = vmatprep.subr.bf16.mxu0 0
  %2813 = vmatpush1.bf16.msra.mxu0 0
  %2814 = vmatprep.subr.bf16.mxu0 0
  %2815 = vmatpush1.bf16.msra.mxu0 0
  %2816 = vmatprep.subr.bf16.mxu0 0
  %2817 = vmatpush1.bf16.msra.mxu0 0
  %2818 = vmatprep.subr.bf16.mxu0 0
  %2819 = vmatpush1.bf16.msra.mxu0 0
  %2820 = vmatprep.subr.bf16.mxu0 0
  %2821 = vmatpush1.bf16.msra.mxu0 0
  %2822 = vmatprep.subr.bf16.mxu0 %v2794
  %2823 = vmatpush1.bf16.msra.mxu0 %v2793
  %2824 = vmatprep.subr.bf16.mxu0 0
  %2825 = vmatpush2.bf16.msra.mxu0 0
  %2826 = vmatprep.subr.bf16.mxu0 0
  %2827 = vmatpush2.bf16.msra.mxu0 0
  %2828 = vmatprep.subr.bf16.mxu0 0
  %2829 = vmatpush2.bf16.msra.mxu0 0
  %2830 = vmatprep.subr.bf16.mxu0 0
  %2831 = vmatpush2.bf16.msra.mxu0 0
  %2832 = vmatprep.subr.bf16.mxu0 0
  %2833 = vmatpush2.bf16.msra.mxu0 0
  %2834 = vmatprep.subr.bf16.mxu0 0
  %2835 = vmatpush2.bf16.msra.mxu0 0
  %2836 = vmatprep.subr.bf16.mxu0 0
  %2837 = vmatpush2.bf16.msra.mxu0 0
  %2838 = vmatprep.subr.bf16.mxu0 0
  %2839 = vmatpush2.bf16.msra.mxu0 0
  %2840 = vmatprep.mubr.bf16.mxu0 0
  %2841 = vmatmul.mubr.bf16.gmra.mxu0 %v2806
  %v2842 = vpop.f32.mrf.mxu0
  %v2843 = vadd.f32 0.0, %v2842
  %v2844 = vpop.f32.mrf.mxu0
  %v2845 = vadd.f32 0.0, %v2844
  %v2846 = vpop.f32.mrf.mxu0
  %v2847 = vadd.f32 0.0, %v2846
  %v2848 = vpop.f32.mrf.mxu0
  %v2849 = vadd.f32 0.0, %v2848
  %2850 = vdwg.mxu0
  %2851 = vmatprep.subr.bf16.mxu0 0
  %2852 = vmatpush1.bf16.msra.mxu0 0
  %2853 = vmatprep.subr.bf16.mxu0 0
  %2854 = vmatpush1.bf16.msra.mxu0 0
  %2855 = vmatprep.subr.bf16.mxu0 0
  %2856 = vmatpush1.bf16.msra.mxu0 0
  %2857 = vmatprep.subr.bf16.mxu0 0
  %2858 = vmatpush1.bf16.msra.mxu0 0
  %2859 = vmatprep.subr.bf16.mxu0 0
  %2860 = vmatpush1.bf16.msra.mxu0 0
  %2861 = vmatprep.subr.bf16.mxu0 0
  %2862 = vmatpush1.bf16.msra.mxu0 0
  %2863 = vmatprep.subr.bf16.mxu0 0
  %2864 = vmatpush1.bf16.msra.mxu0 0
  %2865 = vmatprep.subr.bf16.mxu0 %v2796
  %2866 = vmatpush1.bf16.msra.mxu0 %v2795
  %2867 = vmatprep.subr.bf16.mxu0 0
  %2868 = vmatpush2.bf16.msra.mxu0 0
  %2869 = vmatprep.subr.bf16.mxu0 0
  %2870 = vmatpush2.bf16.msra.mxu0 0
  %2871 = vmatprep.subr.bf16.mxu0 0
  %2872 = vmatpush2.bf16.msra.mxu0 0
  %2873 = vmatprep.subr.bf16.mxu0 0
  %2874 = vmatpush2.bf16.msra.mxu0 0
  %2875 = vmatprep.subr.bf16.mxu0 0
  %2876 = vmatpush2.bf16.msra.mxu0 0
  %2877 = vmatprep.subr.bf16.mxu0 0
  %2878 = vmatpush2.bf16.msra.mxu0 0
  %2879 = vmatprep.subr.bf16.mxu0 0
  %2880 = vmatpush2.bf16.msra.mxu0 0
  %2881 = vmatprep.subr.bf16.mxu0 0
  %2882 = vmatpush2.bf16.msra.mxu0 0
  %2883 = vmatprep.mubr.bf16.mxu0 0
  %2884 = vmatmul.mubr.bf16.gmra.mxu0 %v2806
  %v2885 = vpop.f32.mrf.mxu0
  %v2886 = vadd.f32 0.0, %v2885
  %v2887 = vpop.f32.mrf.mxu0
  %v2888 = vadd.f32 0.0, %v2887
  %v2889 = vpop.f32.mrf.mxu0
  %v2890 = vadd.f32 0.0, %v2889
  %v2891 = vpop.f32.mrf.mxu0
  %v2892 = vadd.f32 0.0, %v2891
  %2893 = vdwg.mxu0
  %2894 = vmatprep.subr.bf16.mxu0 0
  %2895 = vmatpush1.bf16.msra.mxu0 0
  %2896 = vmatprep.subr.bf16.mxu0 0
  %2897 = vmatpush1.bf16.msra.mxu0 0
  %2898 = vmatprep.subr.bf16.mxu0 0
  %2899 = vmatpush1.bf16.msra.mxu0 0
  %2900 = vmatprep.subr.bf16.mxu0 0
  %2901 = vmatpush1.bf16.msra.mxu0 0
  %2902 = vmatprep.subr.bf16.mxu0 0
  %2903 = vmatpush1.bf16.msra.mxu0 0
  %2904 = vmatprep.subr.bf16.mxu0 0
  %2905 = vmatpush1.bf16.msra.mxu0 0
  %2906 = vmatprep.subr.bf16.mxu0 0
  %2907 = vmatpush1.bf16.msra.mxu0 0
  %2908 = vmatprep.subr.bf16.mxu0 %v2798
  %2909 = vmatpush1.bf16.msra.mxu0 %v2797
  %2910 = vmatprep.subr.bf16.mxu0 0
  %2911 = vmatpush2.bf16.msra.mxu0 0
  %2912 = vmatprep.subr.bf16.mxu0 0
  %2913 = vmatpush2.bf16.msra.mxu0 0
  %2914 = vmatprep.subr.bf16.mxu0 0
  %2915 = vmatpush2.bf16.msra.mxu0 0
  %2916 = vmatprep.subr.bf16.mxu0 0
  %2917 = vmatpush2.bf16.msra.mxu0 0
  %2918 = vmatprep.subr.bf16.mxu0 0
  %2919 = vmatpush2.bf16.msra.mxu0 0
  %2920 = vmatprep.subr.bf16.mxu0 0
  %2921 = vmatpush2.bf16.msra.mxu0 0
  %2922 = vmatprep.subr.bf16.mxu0 0
  %2923 = vmatpush2.bf16.msra.mxu0 0
  %2924 = vmatprep.subr.bf16.mxu0 0
  %2925 = vmatpush2.bf16.msra.mxu0 0
  %2926 = vmatprep.mubr.bf16.mxu0 0
  %2927 = vmatmul.mubr.bf16.gmra.mxu0 %v2806
  %v2928 = vpop.f32.mrf.mxu0
  %v2929 = vadd.f32 0.0, %v2928
  %v2930 = vpop.f32.mrf.mxu0
  %v2931 = vadd.f32 0.0, %v2930
  %v2932 = vpop.f32.mrf.mxu0
  %v2933 = vadd.f32 0.0, %v2932
  %v2934 = vpop.f32.mrf.mxu0
  %v2935 = vadd.f32 0.0, %v2934
  %2936 = vdwg.mxu0
  %v2937 = vadd.f32 %v2723, %v2843
  %v2938 = vadd.f32 %v2724, %v2845
  %v2939 = vadd.f32 %v2725, %v2886
  %v2940 = vadd.f32 %v2726, %v2888
  %v2941 = vadd.f32 %v2727, %v2929
  %v2942 = vadd.f32 %v2728, %v2931
  %v2943 = vadd.f32 %v2729, %v2847
  %v2944 = vadd.f32 %v2730, %v2849
  %v2945 = vadd.f32 %v2731, %v2890
  %v2946 = vadd.f32 %v2732, %v2892
  %v2947 = vadd.f32 %v2733, %v2933
  %v2948 = vadd.f32 %v2734, %v2935
  %v2949 = vld [vmem:[%s4 + $0x30] sm:$0xf]
  %v2950 = vld [vmem:[%s4 + $0x34] sm:$0xf]
  %v2953 = vunpack.c.l.b16 %v2949
  %v2954 = vunpack.c.l.b16 %v2950
  %v2955 = vpack.c.b16 %v2954, %v2953
  %2956 = vrot.lane.b32.xlu0 %v2772, 111
  %v2957 = vpop.permute.xlu0 %2956
  %2958 = vrot.lane.b32.xlu0 %v2773, 111
  %v2959 = vpop.permute.xlu0 %2958
  %2960 = vrot.lane.b32.xlu0 %v2774, 111
  %v2961 = vpop.permute.xlu0 %2960
  %2962 = vrot.lane.b32.xlu0 %v2775, 111
  %v2963 = vpop.permute.xlu0 %2962
  %2964 = vrot.lane.b32.xlu0 %v2776, 111
  %v2965 = vpop.permute.xlu0 %2964
  %2966 = vrot.lane.b32.xlu0 %v2777, 111
  %v2967 = vpop.permute.xlu0 %2966
  %2968 = vrot.lane.b32.xlu0 %v2778, 111
  %v2969 = vpop.permute.xlu0 %2968
  %v2970 = vsel %vm1176, %v2957, %v2959
  %v2971 = vsel %vm1176, %v2959, %v2961
  %v2972 = vsel %vm1176, %v2961, %v2963
  %v2973 = vsel %vm1176, %v2963, %v2965
  %v2974 = vsel %vm1176, %v2965, %v2967
  %v2975 = vsel %vm1176, %v2967, %v2969
  %v2983 = vsel %vm100, %v2955, 0
  %2985 = vmatprep.subr.bf16.mxu0 0
  %2986 = vmatpush1.bf16.msra.mxu0 0
  %2987 = vmatprep.subr.bf16.mxu0 0
  %2988 = vmatpush1.bf16.msra.mxu0 0
  %2989 = vmatprep.subr.bf16.mxu0 0
  %2990 = vmatpush1.bf16.msra.mxu0 0
  %2991 = vmatprep.subr.bf16.mxu0 0
  %2992 = vmatpush1.bf16.msra.mxu0 0
  %2993 = vmatprep.subr.bf16.mxu0 0
  %2994 = vmatpush1.bf16.msra.mxu0 0
  %2995 = vmatprep.subr.bf16.mxu0 0
  %2996 = vmatpush1.bf16.msra.mxu0 0
  %2997 = vmatprep.subr.bf16.mxu0 0
  %2998 = vmatpush1.bf16.msra.mxu0 0
  %2999 = vmatprep.subr.bf16.mxu0 %v2971
  %3000 = vmatpush1.bf16.msra.mxu0 %v2970
  %3001 = vmatprep.subr.bf16.mxu0 0
  %3002 = vmatpush2.bf16.msra.mxu0 0
  %3003 = vmatprep.subr.bf16.mxu0 0
  %3004 = vmatpush2.bf16.msra.mxu0 0
  %3005 = vmatprep.subr.bf16.mxu0 0
  %3006 = vmatpush2.bf16.msra.mxu0 0
  %3007 = vmatprep.subr.bf16.mxu0 0
  %3008 = vmatpush2.bf16.msra.mxu0 0
  %3009 = vmatprep.subr.bf16.mxu0 0
  %3010 = vmatpush2.bf16.msra.mxu0 0
  %3011 = vmatprep.subr.bf16.mxu0 0
  %3012 = vmatpush2.bf16.msra.mxu0 0
  %3013 = vmatprep.subr.bf16.mxu0 0
  %3014 = vmatpush2.bf16.msra.mxu0 0
  %3015 = vmatprep.subr.bf16.mxu0 0
  %3016 = vmatpush2.bf16.msra.mxu0 0
  %3017 = vmatprep.mubr.bf16.mxu0 0
  %3018 = vmatmul.mubr.bf16.gmra.mxu0 %v2983
  %v3019 = vpop.f32.mrf.mxu0
  %v3020 = vadd.f32 0.0, %v3019
  %v3021 = vpop.f32.mrf.mxu0
  %v3022 = vadd.f32 0.0, %v3021
  %v3023 = vpop.f32.mrf.mxu0
  %v3024 = vadd.f32 0.0, %v3023
  %v3025 = vpop.f32.mrf.mxu0
  %v3026 = vadd.f32 0.0, %v3025
  %3027 = vdwg.mxu0
  %3028 = vmatprep.subr.bf16.mxu0 0
  %3029 = vmatpush1.bf16.msra.mxu0 0
  %3030 = vmatprep.subr.bf16.mxu0 0
  %3031 = vmatpush1.bf16.msra.mxu0 0
  %3032 = vmatprep.subr.bf16.mxu0 0
  %3033 = vmatpush1.bf16.msra.mxu0 0
  %3034 = vmatprep.subr.bf16.mxu0 0
  %3035 = vmatpush1.bf16.msra.mxu0 0
  %3036 = vmatprep.subr.bf16.mxu0 0
  %3037 = vmatpush1.bf16.msra.mxu0 0
  %3038 = vmatprep.subr.bf16.mxu0 0
  %3039 = vmatpush1.bf16.msra.mxu0 0
  %3040 = vmatprep.subr.bf16.mxu0 0
  %3041 = vmatpush1.bf16.msra.mxu0 0
  %3042 = vmatprep.subr.bf16.mxu0 %v2973
  %3043 = vmatpush1.bf16.msra.mxu0 %v2972
  %3044 = vmatprep.subr.bf16.mxu0 0
  %3045 = vmatpush2.bf16.msra.mxu0 0
  %3046 = vmatprep.subr.bf16.mxu0 0
  %3047 = vmatpush2.bf16.msra.mxu0 0
  %3048 = vmatprep.subr.bf16.mxu0 0
  %3049 = vmatpush2.bf16.msra.mxu0 0
  %3050 = vmatprep.subr.bf16.mxu0 0
  %3051 = vmatpush2.bf16.msra.mxu0 0
  %3052 = vmatprep.subr.bf16.mxu0 0
  %3053 = vmatpush2.bf16.msra.mxu0 0
  %3054 = vmatprep.subr.bf16.mxu0 0
  %3055 = vmatpush2.bf16.msra.mxu0 0
  %3056 = vmatprep.subr.bf16.mxu0 0
  %3057 = vmatpush2.bf16.msra.mxu0 0
  %3058 = vmatprep.subr.bf16.mxu0 0
  %3059 = vmatpush2.bf16.msra.mxu0 0
  %3060 = vmatprep.mubr.bf16.mxu0 0
  %3061 = vmatmul.mubr.bf16.gmra.mxu0 %v2983
  %v3062 = vpop.f32.mrf.mxu0
  %v3063 = vadd.f32 0.0, %v3062
  %v3064 = vpop.f32.mrf.mxu0
  %v3065 = vadd.f32 0.0, %v3064
  %v3066 = vpop.f32.mrf.mxu0
  %v3067 = vadd.f32 0.0, %v3066
  %v3068 = vpop.f32.mrf.mxu0
  %v3069 = vadd.f32 0.0, %v3068
  %3070 = vdwg.mxu0
  %3071 = vmatprep.subr.bf16.mxu0 0
  %3072 = vmatpush1.bf16.msra.mxu0 0
  %3073 = vmatprep.subr.bf16.mxu0 0
  %3074 = vmatpush1.bf16.msra.mxu0 0
  %3075 = vmatprep.subr.bf16.mxu0 0
  %3076 = vmatpush1.bf16.msra.mxu0 0
  %3077 = vmatprep.subr.bf16.mxu0 0
  %3078 = vmatpush1.bf16.msra.mxu0 0
  %3079 = vmatprep.subr.bf16.mxu0 0
  %3080 = vmatpush1.bf16.msra.mxu0 0
  %3081 = vmatprep.subr.bf16.mxu0 0
  %3082 = vmatpush1.bf16.msra.mxu0 0
  %3083 = vmatprep.subr.bf16.mxu0 0
  %3084 = vmatpush1.bf16.msra.mxu0 0
  %3085 = vmatprep.subr.bf16.mxu0 %v2975
  %3086 = vmatpush1.bf16.msra.mxu0 %v2974
  %3087 = vmatprep.subr.bf16.mxu0 0
  %3088 = vmatpush2.bf16.msra.mxu0 0
  %3089 = vmatprep.subr.bf16.mxu0 0
  %3090 = vmatpush2.bf16.msra.mxu0 0
  %3091 = vmatprep.subr.bf16.mxu0 0
  %3092 = vmatpush2.bf16.msra.mxu0 0
  %3093 = vmatprep.subr.bf16.mxu0 0
  %3094 = vmatpush2.bf16.msra.mxu0 0
  %3095 = vmatprep.subr.bf16.mxu0 0
  %3096 = vmatpush2.bf16.msra.mxu0 0
  %3097 = vmatprep.subr.bf16.mxu0 0
  %3098 = vmatpush2.bf16.msra.mxu0 0
  %3099 = vmatprep.subr.bf16.mxu0 0
  %3100 = vmatpush2.bf16.msra.mxu0 0
  %3101 = vmatprep.subr.bf16.mxu0 0
  %3102 = vmatpush2.bf16.msra.mxu0 0
  %3103 = vmatprep.mubr.bf16.mxu0 0
  %3104 = vmatmul.mubr.bf16.gmra.mxu0 %v2983
  %v3105 = vpop.f32.mrf.mxu0
  %v3106 = vadd.f32 0.0, %v3105
  %v3107 = vpop.f32.mrf.mxu0
  %v3108 = vadd.f32 0.0, %v3107
  %v3109 = vpop.f32.mrf.mxu0
  %v3110 = vadd.f32 0.0, %v3109
  %v3111 = vpop.f32.mrf.mxu0
  %v3112 = vadd.f32 0.0, %v3111
  %3113 = vdwg.mxu0
  %v3114 = vadd.f32 %v2937, %v3020
  %v3115 = vadd.f32 %v2938, %v3022
  %v3116 = vadd.f32 %v2939, %v3063
  %v3117 = vadd.f32 %v2940, %v3065
  %v3118 = vadd.f32 %v2941, %v3106
  %v3119 = vadd.f32 %v2942, %v3108
  %v3120 = vadd.f32 %v2943, %v3024
  %v3121 = vadd.f32 %v2944, %v3026
  %v3122 = vadd.f32 %v2945, %v3067
  %v3123 = vadd.f32 %v2946, %v3069
  %v3124 = vadd.f32 %v2947, %v3110
  %v3125 = vadd.f32 %v2948, %v3112
  %v3126 = vld [vmem:[%s4 + $0x38] sm:$0xf]
  %v3127 = vld [vmem:[%s4 + $0x3c] sm:$0xf]
  %v3130 = vunpack.c.l.b16 %v3126
  %v3131 = vunpack.c.l.b16 %v3127
  %v3132 = vpack.c.b16 %v3131, %v3130
  %3133 = vrot.lane.b32.xlu0 %v2772, 110
  %v3134 = vpop.permute.xlu0 %3133
  %3135 = vrot.lane.b32.xlu0 %v2773, 110
  %v3136 = vpop.permute.xlu0 %3135
  %3137 = vrot.lane.b32.xlu0 %v2774, 110
  %v3138 = vpop.permute.xlu0 %3137
  %3139 = vrot.lane.b32.xlu0 %v2775, 110
  %v3140 = vpop.permute.xlu0 %3139
  %3141 = vrot.lane.b32.xlu0 %v2776, 110
  %v3142 = vpop.permute.xlu0 %3141
  %3143 = vrot.lane.b32.xlu0 %v2777, 110
  %v3144 = vpop.permute.xlu0 %3143
  %3145 = vrot.lane.b32.xlu0 %v2778, 110
  %v3146 = vpop.permute.xlu0 %3145
  %v3147 = vsel %vm1354, %v3134, %v3136
  %v3148 = vsel %vm1354, %v3136, %v3138
  %v3149 = vsel %vm1354, %v3138, %v3140
  %v3150 = vsel %vm1354, %v3140, %v3142
  %v3151 = vsel %vm1354, %v3142, %v3144
  %v3152 = vsel %vm1354, %v3144, %v3146
  %v3160 = vsel %vm100, %v3132, 0
  %3162 = vmatprep.subr.bf16.mxu0 0
  %3163 = vmatpush1.bf16.msra.mxu0 0
  %3164 = vmatprep.subr.bf16.mxu0 0
  %3165 = vmatpush1.bf16.msra.mxu0 0
  %3166 = vmatprep.subr.bf16.mxu0 0
  %3167 = vmatpush1.bf16.msra.mxu0 0
  %3168 = vmatprep.subr.bf16.mxu0 0
  %3169 = vmatpush1.bf16.msra.mxu0 0
  %3170 = vmatprep.subr.bf16.mxu0 0
  %3171 = vmatpush1.bf16.msra.mxu0 0
  %3172 = vmatprep.subr.bf16.mxu0 0
  %3173 = vmatpush1.bf16.msra.mxu0 0
  %3174 = vmatprep.subr.bf16.mxu0 0
  %3175 = vmatpush1.bf16.msra.mxu0 0
  %3176 = vmatprep.subr.bf16.mxu0 %v3148
  %3177 = vmatpush1.bf16.msra.mxu0 %v3147
  %3178 = vmatprep.subr.bf16.mxu0 0
  %3179 = vmatpush2.bf16.msra.mxu0 0
  %3180 = vmatprep.subr.bf16.mxu0 0
  %3181 = vmatpush2.bf16.msra.mxu0 0
  %3182 = vmatprep.subr.bf16.mxu0 0
  %3183 = vmatpush2.bf16.msra.mxu0 0
  %3184 = vmatprep.subr.bf16.mxu0 0
  %3185 = vmatpush2.bf16.msra.mxu0 0
  %3186 = vmatprep.subr.bf16.mxu0 0
  %3187 = vmatpush2.bf16.msra.mxu0 0
  %3188 = vmatprep.subr.bf16.mxu0 0
  %3189 = vmatpush2.bf16.msra.mxu0 0
  %3190 = vmatprep.subr.bf16.mxu0 0
  %3191 = vmatpush2.bf16.msra.mxu0 0
  %3192 = vmatprep.subr.bf16.mxu0 0
  %3193 = vmatpush2.bf16.msra.mxu0 0
  %3194 = vmatprep.mubr.bf16.mxu0 0
  %3195 = vmatmul.mubr.bf16.gmra.mxu0 %v3160
  %v3196 = vpop.f32.mrf.mxu0
  %v3197 = vadd.f32 0.0, %v3196
  %v3198 = vpop.f32.mrf.mxu0
  %v3199 = vadd.f32 0.0, %v3198
  %v3200 = vpop.f32.mrf.mxu0
  %v3201 = vadd.f32 0.0, %v3200
  %v3202 = vpop.f32.mrf.mxu0
  %v3203 = vadd.f32 0.0, %v3202
  %3204 = vdwg.mxu0
  %3205 = vmatprep.subr.bf16.mxu0 0
  %3206 = vmatpush1.bf16.msra.mxu0 0
  %3207 = vmatprep.subr.bf16.mxu0 0
  %3208 = vmatpush1.bf16.msra.mxu0 0
  %3209 = vmatprep.subr.bf16.mxu0 0
  %3210 = vmatpush1.bf16.msra.mxu0 0
  %3211 = vmatprep.subr.bf16.mxu0 0
  %3212 = vmatpush1.bf16.msra.mxu0 0
  %3213 = vmatprep.subr.bf16.mxu0 0
  %3214 = vmatpush1.bf16.msra.mxu0 0
  %3215 = vmatprep.subr.bf16.mxu0 0
  %3216 = vmatpush1.bf16.msra.mxu0 0
  %3217 = vmatprep.subr.bf16.mxu0 0
  %3218 = vmatpush1.bf16.msra.mxu0 0
  %3219 = vmatprep.subr.bf16.mxu0 %v3150
  %3220 = vmatpush1.bf16.msra.mxu0 %v3149
  %3221 = vmatprep.subr.bf16.mxu0 0
  %3222 = vmatpush2.bf16.msra.mxu0 0
  %3223 = vmatprep.subr.bf16.mxu0 0
  %3224 = vmatpush2.bf16.msra.mxu0 0
  %3225 = vmatprep.subr.bf16.mxu0 0
  %3226 = vmatpush2.bf16.msra.mxu0 0
  %3227 = vmatprep.subr.bf16.mxu0 0
  %3228 = vmatpush2.bf16.msra.mxu0 0
  %3229 = vmatprep.subr.bf16.mxu0 0
  %3230 = vmatpush2.bf16.msra.mxu0 0
  %3231 = vmatprep.subr.bf16.mxu0 0
  %3232 = vmatpush2.bf16.msra.mxu0 0
  %3233 = vmatprep.subr.bf16.mxu0 0
  %3234 = vmatpush2.bf16.msra.mxu0 0
  %3235 = vmatprep.subr.bf16.mxu0 0
  %3236 = vmatpush2.bf16.msra.mxu0 0
  %3237 = vmatprep.mubr.bf16.mxu0 0
  %3238 = vmatmul.mubr.bf16.gmra.mxu0 %v3160
  %v3239 = vpop.f32.mrf.mxu0
  %v3240 = vadd.f32 0.0, %v3239
  %v3241 = vpop.f32.mrf.mxu0
  %v3242 = vadd.f32 0.0, %v3241
  %v3243 = vpop.f32.mrf.mxu0
  %v3244 = vadd.f32 0.0, %v3243
  %v3245 = vpop.f32.mrf.mxu0
  %v3246 = vadd.f32 0.0, %v3245
  %3247 = vdwg.mxu0
  %3248 = vmatprep.subr.bf16.mxu0 0
  %3249 = vmatpush1.bf16.msra.mxu0 0
  %3250 = vmatprep.subr.bf16.mxu0 0
  %3251 = vmatpush1.bf16.msra.mxu0 0
  %3252 = vmatprep.subr.bf16.mxu0 0
  %3253 = vmatpush1.bf16.msra.mxu0 0
  %3254 = vmatprep.subr.bf16.mxu0 0
  %3255 = vmatpush1.bf16.msra.mxu0 0
  %3256 = vmatprep.subr.bf16.mxu0 0
  %3257 = vmatpush1.bf16.msra.mxu0 0
  %3258 = vmatprep.subr.bf16.mxu0 0
  %3259 = vmatpush1.bf16.msra.mxu0 0
  %3260 = vmatprep.subr.bf16.mxu0 0
  %3261 = vmatpush1.bf16.msra.mxu0 0
  %3262 = vmatprep.subr.bf16.mxu0 %v3152
  %3263 = vmatpush1.bf16.msra.mxu0 %v3151
  %3264 = vmatprep.subr.bf16.mxu0 0
  %3265 = vmatpush2.bf16.msra.mxu0 0
  %3266 = vmatprep.subr.bf16.mxu0 0
  %3267 = vmatpush2.bf16.msra.mxu0 0
  %3268 = vmatprep.subr.bf16.mxu0 0
  %3269 = vmatpush2.bf16.msra.mxu0 0
  %3270 = vmatprep.subr.bf16.mxu0 0
  %3271 = vmatpush2.bf16.msra.mxu0 0
  %3272 = vmatprep.subr.bf16.mxu0 0
  %3273 = vmatpush2.bf16.msra.mxu0 0
  %3274 = vmatprep.subr.bf16.mxu0 0
  %3275 = vmatpush2.bf16.msra.mxu0 0
  %3276 = vmatprep.subr.bf16.mxu0 0
  %3277 = vmatpush2.bf16.msra.mxu0 0
  %3278 = vmatprep.subr.bf16.mxu0 0
  %3279 = vmatpush2.bf16.msra.mxu0 0
  %3280 = vmatprep.mubr.bf16.mxu0 0
  %3281 = vmatmul.mubr.bf16.gmra.mxu0 %v3160
  %v3282 = vpop.f32.mrf.mxu0
  %v3283 = vadd.f32 0.0, %v3282
  %v3284 = vpop.f32.mrf.mxu0
  %v3285 = vadd.f32 0.0, %v3284
  %v3286 = vpop.f32.mrf.mxu0
  %v3287 = vadd.f32 0.0, %v3286
  %v3288 = vpop.f32.mrf.mxu0
  %v3289 = vadd.f32 0.0, %v3288
  %3290 = vdwg.mxu0
  %v3291 = vadd.f32 %v3114, %v3197
  %v3292 = vadd.f32 %v3115, %v3199
  %v3293 = vadd.f32 %v3116, %v3240
  %v3294 = vadd.f32 %v3117, %v3242
  %v3295 = vadd.f32 %v3118, %v3283
  %v3296 = vadd.f32 %v3119, %v3285
  %v3297 = vadd.f32 %v3120, %v3201
  %v3298 = vadd.f32 %v3121, %v3203
  %v3299 = vadd.f32 %v3122, %v3244
  %v3300 = vadd.f32 %v3123, %v3246
  %v3301 = vadd.f32 %v3124, %v3287
  %v3302 = vadd.f32 %v3125, %v3289
  %v3303 = vld [vmem:[%s4 + $0x40] sm:$0xf]
  %v3304 = vld [vmem:[%s4 + $0x44] sm:$0xf]
  %v3307 = vunpack.c.l.b16 %v3303
  %v3308 = vunpack.c.l.b16 %v3304
  %v3309 = vpack.c.b16 %v3308, %v3307
  %3310 = vrot.lane.b32.xlu0 %v2772, 109
  %v3311 = vpop.permute.xlu0 %3310
  %3312 = vrot.lane.b32.xlu0 %v2773, 109
  %v3313 = vpop.permute.xlu0 %3312
  %3314 = vrot.lane.b32.xlu0 %v2774, 109
  %v3315 = vpop.permute.xlu0 %3314
  %3316 = vrot.lane.b32.xlu0 %v2775, 109
  %v3317 = vpop.permute.xlu0 %3316
  %3318 = vrot.lane.b32.xlu0 %v2776, 109
  %v3319 = vpop.permute.xlu0 %3318
  %3320 = vrot.lane.b32.xlu0 %v2777, 109
  %v3321 = vpop.permute.xlu0 %3320
  %3322 = vrot.lane.b32.xlu0 %v2778, 109
  %v3323 = vpop.permute.xlu0 %3322
  %v3324 = vsel %vm1532, %v3311, %v3313
  %v3325 = vsel %vm1532, %v3313, %v3315
  %v3326 = vsel %vm1532, %v3315, %v3317
  %v3327 = vsel %vm1532, %v3317, %v3319
  %v3328 = vsel %vm1532, %v3319, %v3321
  %v3329 = vsel %vm1532, %v3321, %v3323
  %v3337 = vsel %vm100, %v3309, 0
  %3339 = vmatprep.subr.bf16.mxu0 0
  %3340 = vmatpush1.bf16.msra.mxu0 0
  %3341 = vmatprep.subr.bf16.mxu0 0
  %3342 = vmatpush1.bf16.msra.mxu0 0
  %3343 = vmatprep.subr.bf16.mxu0 0
  %3344 = vmatpush1.bf16.msra.mxu0 0
  %3345 = vmatprep.subr.bf16.mxu0 0
  %3346 = vmatpush1.bf16.msra.mxu0 0
  %3347 = vmatprep.subr.bf16.mxu0 0
  %3348 = vmatpush1.bf16.msra.mxu0 0
  %3349 = vmatprep.subr.bf16.mxu0 0
  %3350 = vmatpush1.bf16.msra.mxu0 0
  %3351 = vmatprep.subr.bf16.mxu0 0
  %3352 = vmatpush1.bf16.msra.mxu0 0
  %3353 = vmatprep.subr.bf16.mxu0 %v3325
  %3354 = vmatpush1.bf16.msra.mxu0 %v3324
  %3355 = vmatprep.subr.bf16.mxu0 0
  %3356 = vmatpush2.bf16.msra.mxu0 0
  %3357 = vmatprep.subr.bf16.mxu0 0
  %3358 = vmatpush2.bf16.msra.mxu0 0
  %3359 = vmatprep.subr.bf16.mxu0 0
  %3360 = vmatpush2.bf16.msra.mxu0 0
  %3361 = vmatprep.subr.bf16.mxu0 0
  %3362 = vmatpush2.bf16.msra.mxu0 0
  %3363 = vmatprep.subr.bf16.mxu0 0
  %3364 = vmatpush2.bf16.msra.mxu0 0
  %3365 = vmatprep.subr.bf16.mxu0 0
  %3366 = vmatpush2.bf16.msra.mxu0 0
  %3367 = vmatprep.subr.bf16.mxu0 0
  %3368 = vmatpush2.bf16.msra.mxu0 0
  %3369 = vmatprep.subr.bf16.mxu0 0
  %3370 = vmatpush2.bf16.msra.mxu0 0
  %3371 = vmatprep.mubr.bf16.mxu0 0
  %3372 = vmatmul.mubr.bf16.gmra.mxu0 %v3337
  %v3373 = vpop.f32.mrf.mxu0
  %v3374 = vadd.f32 0.0, %v3373
  %v3375 = vpop.f32.mrf.mxu0
  %v3376 = vadd.f32 0.0, %v3375
  %v3377 = vpop.f32.mrf.mxu0
  %v3378 = vadd.f32 0.0, %v3377
  %v3379 = vpop.f32.mrf.mxu0
  %v3380 = vadd.f32 0.0, %v3379
  %3381 = vdwg.mxu0
  %3382 = vmatprep.subr.bf16.mxu0 0
  %3383 = vmatpush1.bf16.msra.mxu0 0
  %3384 = vmatprep.subr.bf16.mxu0 0
  %3385 = vmatpush1.bf16.msra.mxu0 0
  %3386 = vmatprep.subr.bf16.mxu0 0
  %3387 = vmatpush1.bf16.msra.mxu0 0
  %3388 = vmatprep.subr.bf16.mxu0 0
  %3389 = vmatpush1.bf16.msra.mxu0 0
  %3390 = vmatprep.subr.bf16.mxu0 0
  %3391 = vmatpush1.bf16.msra.mxu0 0
  %3392 = vmatprep.subr.bf16.mxu0 0
  %3393 = vmatpush1.bf16.msra.mxu0 0
  %3394 = vmatprep.subr.bf16.mxu0 0
  %3395 = vmatpush1.bf16.msra.mxu0 0
  %3396 = vmatprep.subr.bf16.mxu0 %v3327
  %3397 = vmatpush1.bf16.msra.mxu0 %v3326
  %3398 = vmatprep.subr.bf16.mxu0 0
  %3399 = vmatpush2.bf16.msra.mxu0 0
  %3400 = vmatprep.subr.bf16.mxu0 0
  %3401 = vmatpush2.bf16.msra.mxu0 0
  %3402 = vmatprep.subr.bf16.mxu0 0
  %3403 = vmatpush2.bf16.msra.mxu0 0
  %3404 = vmatprep.subr.bf16.mxu0 0
  %3405 = vmatpush2.bf16.msra.mxu0 0
  %3406 = vmatprep.subr.bf16.mxu0 0
  %3407 = vmatpush2.bf16.msra.mxu0 0
  %3408 = vmatprep.subr.bf16.mxu0 0
  %3409 = vmatpush2.bf16.msra.mxu0 0
  %3410 = vmatprep.subr.bf16.mxu0 0
  %3411 = vmatpush2.bf16.msra.mxu0 0
  %3412 = vmatprep.subr.bf16.mxu0 0
  %3413 = vmatpush2.bf16.msra.mxu0 0
  %3414 = vmatprep.mubr.bf16.mxu0 0
  %3415 = vmatmul.mubr.bf16.gmra.mxu0 %v3337
  %v3416 = vpop.f32.mrf.mxu0
  %v3417 = vadd.f32 0.0, %v3416
  %v3418 = vpop.f32.mrf.mxu0
  %v3419 = vadd.f32 0.0, %v3418
  %v3420 = vpop.f32.mrf.mxu0
  %v3421 = vadd.f32 0.0, %v3420
  %v3422 = vpop.f32.mrf.mxu0
  %v3423 = vadd.f32 0.0, %v3422
  %3424 = vdwg.mxu0
  %3425 = vmatprep.subr.bf16.mxu0 0
  %3426 = vmatpush1.bf16.msra.mxu0 0
  %3427 = vmatprep.subr.bf16.mxu0 0
  %3428 = vmatpush1.bf16.msra.mxu0 0
  %3429 = vmatprep.subr.bf16.mxu0 0
  %3430 = vmatpush1.bf16.msra.mxu0 0
  %3431 = vmatprep.subr.bf16.mxu0 0
  %3432 = vmatpush1.bf16.msra.mxu0 0
  %3433 = vmatprep.subr.bf16.mxu0 0
  %3434 = vmatpush1.bf16.msra.mxu0 0
  %3435 = vmatprep.subr.bf16.mxu0 0
  %3436 = vmatpush1.bf16.msra.mxu0 0
  %3437 = vmatprep.subr.bf16.mxu0 0
  %3438 = vmatpush1.bf16.msra.mxu0 0
  %3439 = vmatprep.subr.bf16.mxu0 %v3329
  %3440 = vmatpush1.bf16.msra.mxu0 %v3328
  %3441 = vmatprep.subr.bf16.mxu0 0
  %3442 = vmatpush2.bf16.msra.mxu0 0
  %3443 = vmatprep.subr.bf16.mxu0 0
  %3444 = vmatpush2.bf16.msra.mxu0 0
  %3445 = vmatprep.subr.bf16.mxu0 0
  %3446 = vmatpush2.bf16.msra.mxu0 0
  %3447 = vmatprep.subr.bf16.mxu0 0
  %3448 = vmatpush2.bf16.msra.mxu0 0
  %3449 = vmatprep.subr.bf16.mxu0 0
  %3450 = vmatpush2.bf16.msra.mxu0 0
  %3451 = vmatprep.subr.bf16.mxu0 0
  %3452 = vmatpush2.bf16.msra.mxu0 0
  %3453 = vmatprep.subr.bf16.mxu0 0
  %3454 = vmatpush2.bf16.msra.mxu0 0
  %3455 = vmatprep.subr.bf16.mxu0 0
  %3456 = vmatpush2.bf16.msra.mxu0 0
  %3457 = vmatprep.mubr.bf16.mxu0 0
  %3458 = vmatmul.mubr.bf16.gmra.mxu0 %v3337
  %v3459 = vpop.f32.mrf.mxu0
  %v3460 = vadd.f32 0.0, %v3459
  %v3461 = vpop.f32.mrf.mxu0
  %v3462 = vadd.f32 0.0, %v3461
  %v3463 = vpop.f32.mrf.mxu0
  %v3464 = vadd.f32 0.0, %v3463
  %v3465 = vpop.f32.mrf.mxu0
  %v3466 = vadd.f32 0.0, %v3465
  %3467 = vdwg.mxu0
  %v3468 = vadd.f32 %v3291, %v3374
  %v3469 = vadd.f32 %v3292, %v3376
  %v3470 = vadd.f32 %v3293, %v3417
  %v3471 = vadd.f32 %v3294, %v3419
  %v3472 = vadd.f32 %v3295, %v3460
  %v3473 = vadd.f32 %v3296, %v3462
  %v3474 = vadd.f32 %v3297, %v3378
  %v3475 = vadd.f32 %v3298, %v3380
  %v3476 = vadd.f32 %v3299, %v3421
  %v3477 = vadd.f32 %v3300, %v3423
  %v3478 = vadd.f32 %v3301, %v3464
  %v3479 = vadd.f32 %v3302, %v3466
  %v3480 = vld [vmem:[%s6] sm:$0xf]
  %v3481 = vld [vmem:[%s6 + $0x4] sm:$0xf]
  %v3482 = vld [vmem:[%s0 + $0x4] sm:$0xff]
  %v3483 = vld [vmem:[%s0 + $0xc] sm:$0xff]
  %v3484 = vld [vmem:[%s0 + $0x14] sm:$0xff]
  %v3485 = vld [vmem:[%s0 + $0x24] sm:$0xff]
  %v3486 = vld [vmem:[%s0 + $0x2c] sm:$0xff]
  %v3487 = vld [vmem:[%s0 + $0x34] sm:$0xff]
  %v3490 = vunpack.c.l.b16 %v3480
  %v3491 = vunpack.c.l.b16 %v3481
  %v3492 = vpack.c.b16 %v3491, %v3490
  %v3499 = vunpack.c.l.b16 %v3482
  %v3500 = vunpack.c.h.b16 %v3482
  %v3501 = vunpack.c.l.b16 %v3483
  %v3502 = vunpack.c.h.b16 %v3483
  %v3503 = vunpack.c.l.b16 %v3484
  %v3504 = vunpack.c.h.b16 %v3484
  %v3505 = vunpack.c.l.b16 %v3485
  %v3506 = vunpack.c.h.b16 %v3485
  %v3507 = vunpack.c.l.b16 %v3486
  %v3508 = vunpack.c.h.b16 %v3486
  %v3509 = vunpack.c.l.b16 %v3487
  %v3510 = vunpack.c.h.b16 %v3487
  %v3511 = vpack.c.b16 %v3505, %v3499
  %v3512 = vpack.c.b16 %v3506, %v3500
  %v3513 = vpack.c.b16 %v3507, %v3501
  %v3514 = vpack.c.b16 %v3508, %v3502
  %v3515 = vpack.c.b16 %v3509, %v3503
  %v3516 = vpack.c.b16 %v3510, %v3504
  %v3524 = vsel %vm100, %v3492, 0
  %3526 = vmatprep.subr.bf16.mxu0 0
  %3527 = vmatpush1.bf16.msra.mxu0 0
  %3528 = vmatprep.subr.bf16.mxu0 0
  %3529 = vmatpush1.bf16.msra.mxu0 0
  %3530 = vmatprep.subr.bf16.mxu0 0
  %3531 = vmatpush1.bf16.msra.mxu0 0
  %3532 = vmatprep.subr.bf16.mxu0 0
  %3533 = vmatpush1.bf16.msra.mxu0 0
  %3534 = vmatprep.subr.bf16.mxu0 0
  %3535 = vmatpush1.bf16.msra.mxu0 0
  %3536 = vmatprep.subr.bf16.mxu0 0
  %3537 = vmatpush1.bf16.msra.mxu0 0
  %3538 = vmatprep.subr.bf16.mxu0 0
  %3539 = vmatpush1.bf16.msra.mxu0 0
  %3540 = vmatprep.subr.bf16.mxu0 %v3512
  %3541 = vmatpush1.bf16.msra.mxu0 %v3511
  %3542 = vmatprep.subr.bf16.mxu0 0
  %3543 = vmatpush2.bf16.msra.mxu0 0
  %3544 = vmatprep.subr.bf16.mxu0 0
  %3545 = vmatpush2.bf16.msra.mxu0 0
  %3546 = vmatprep.subr.bf16.mxu0 0
  %3547 = vmatpush2.bf16.msra.mxu0 0
  %3548 = vmatprep.subr.bf16.mxu0 0
  %3549 = vmatpush2.bf16.msra.mxu0 0
  %3550 = vmatprep.subr.bf16.mxu0 0
  %3551 = vmatpush2.bf16.msra.mxu0 0
  %3552 = vmatprep.subr.bf16.mxu0 0
  %3553 = vmatpush2.bf16.msra.mxu0 0
  %3554 = vmatprep.subr.bf16.mxu0 0
  %3555 = vmatpush2.bf16.msra.mxu0 0
  %3556 = vmatprep.subr.bf16.mxu0 0
  %3557 = vmatpush2.bf16.msra.mxu0 0
  %3558 = vmatprep.mubr.bf16.mxu0 0
  %3559 = vmatmul.mubr.bf16.gmra.mxu0 %v3524
  %v3560 = vpop.f32.mrf.mxu0
  %v3561 = vadd.f32 0.0, %v3560
  %v3562 = vpop.f32.mrf.mxu0
  %v3563 = vadd.f32 0.0, %v3562
  %v3564 = vpop.f32.mrf.mxu0
  %v3565 = vadd.f32 0.0, %v3564
  %v3566 = vpop.f32.mrf.mxu0
  %v3567 = vadd.f32 0.0, %v3566
  %3568 = vdwg.mxu0
  %3569 = vmatprep.subr.bf16.mxu0 0
  %3570 = vmatpush1.bf16.msra.mxu0 0
  %3571 = vmatprep.subr.bf16.mxu0 0
  %3572 = vmatpush1.bf16.msra.mxu0 0
  %3573 = vmatprep.subr.bf16.mxu0 0
  %3574 = vmatpush1.bf16.msra.mxu0 0
  %3575 = vmatprep.subr.bf16.mxu0 0
  %3576 = vmatpush1.bf16.msra.mxu0 0
  %3577 = vmatprep.subr.bf16.mxu0 0
  %3578 = vmatpush1.bf16.msra.mxu0 0
  %3579 = vmatprep.subr.bf16.mxu0 0
  %3580 = vmatpush1.bf16.msra.mxu0 0
  %3581 = vmatprep.subr.bf16.mxu0 0
  %3582 = vmatpush1.bf16.msra.mxu0 0
  %3583 = vmatprep.subr.bf16.mxu0 %v3514
  %3584 = vmatpush1.bf16.msra.mxu0 %v3513
  %3585 = vmatprep.subr.bf16.mxu0 0
  %3586 = vmatpush2.bf16.msra.mxu0 0
  %3587 = vmatprep.subr.bf16.mxu0 0
  %3588 = vmatpush2.bf16.msra.mxu0 0
  %3589 = vmatprep.subr.bf16.mxu0 0
  %3590 = vmatpush2.bf16.msra.mxu0 0
  %3591 = vmatprep.subr.bf16.mxu0 0
  %3592 = vmatpush2.bf16.msra.mxu0 0
  %3593 = vmatprep.subr.bf16.mxu0 0
  %3594 = vmatpush2.bf16.msra.mxu0 0
  %3595 = vmatprep.subr.bf16.mxu0 0
  %3596 = vmatpush2.bf16.msra.mxu0 0
  %3597 = vmatprep.subr.bf16.mxu0 0
  %3598 = vmatpush2.bf16.msra.mxu0 0
  %3599 = vmatprep.subr.bf16.mxu0 0
  %3600 = vmatpush2.bf16.msra.mxu0 0
  %3601 = vmatprep.mubr.bf16.mxu0 0
  %3602 = vmatmul.mubr.bf16.gmra.mxu0 %v3524
  %v3603 = vpop.f32.mrf.mxu0
  %v3604 = vadd.f32 0.0, %v3603
  %v3605 = vpop.f32.mrf.mxu0
  %v3606 = vadd.f32 0.0, %v3605
  %v3607 = vpop.f32.mrf.mxu0
  %v3608 = vadd.f32 0.0, %v3607
  %v3609 = vpop.f32.mrf.mxu0
  %v3610 = vadd.f32 0.0, %v3609
  %3611 = vdwg.mxu0
  %3612 = vmatprep.subr.bf16.mxu0 0
  %3613 = vmatpush1.bf16.msra.mxu0 0
  %3614 = vmatprep.subr.bf16.mxu0 0
  %3615 = vmatpush1.bf16.msra.mxu0 0
  %3616 = vmatprep.subr.bf16.mxu0 0
  %3617 = vmatpush1.bf16.msra.mxu0 0
  %3618 = vmatprep.subr.bf16.mxu0 0
  %3619 = vmatpush1.bf16.msra.mxu0 0
  %3620 = vmatprep.subr.bf16.mxu0 0
  %3621 = vmatpush1.bf16.msra.mxu0 0
  %3622 = vmatprep.subr.bf16.mxu0 0
  %3623 = vmatpush1.bf16.msra.mxu0 0
  %3624 = vmatprep.subr.bf16.mxu0 0
  %3625 = vmatpush1.bf16.msra.mxu0 0
  %3626 = vmatprep.subr.bf16.mxu0 %v3516
  %3627 = vmatpush1.bf16.msra.mxu0 %v3515
  %3628 = vmatprep.subr.bf16.mxu0 0
  %3629 = vmatpush2.bf16.msra.mxu0 0
  %3630 = vmatprep.subr.bf16.mxu0 0
  %3631 = vmatpush2.bf16.msra.mxu0 0
  %3632 = vmatprep.subr.bf16.mxu0 0
  %3633 = vmatpush2.bf16.msra.mxu0 0
  %3634 = vmatprep.subr.bf16.mxu0 0
  %3635 = vmatpush2.bf16.msra.mxu0 0
  %3636 = vmatprep.subr.bf16.mxu0 0
  %3637 = vmatpush2.bf16.msra.mxu0 0
  %3638 = vmatprep.subr.bf16.mxu0 0
  %3639 = vmatpush2.bf16.msra.mxu0 0
  %3640 = vmatprep.subr.bf16.mxu0 0
  %3641 = vmatpush2.bf16.msra.mxu0 0
  %3642 = vmatprep.subr.bf16.mxu0 0
  %3643 = vmatpush2.bf16.msra.mxu0 0
  %3644 = vmatprep.mubr.bf16.mxu0 0
  %3645 = vmatmul.mubr.bf16.gmra.mxu0 %v3524
  %v3646 = vpop.f32.mrf.mxu0
  %v3647 = vadd.f32 0.0, %v3646
  %v3648 = vpop.f32.mrf.mxu0
  %v3649 = vadd.f32 0.0, %v3648
  %v3650 = vpop.f32.mrf.mxu0
  %v3651 = vadd.f32 0.0, %v3650
  %v3652 = vpop.f32.mrf.mxu0
  %v3653 = vadd.f32 0.0, %v3652
  %3654 = vdwg.mxu0
  %v3655 = vadd.f32 %v3468, %v3561
  %v3656 = vadd.f32 %v3469, %v3563
  %v3657 = vadd.f32 %v3470, %v3604
  %v3658 = vadd.f32 %v3471, %v3606
  %v3659 = vadd.f32 %v3472, %v3647
  %v3660 = vadd.f32 %v3473, %v3649
  %v3661 = vadd.f32 %v3474, %v3565
  %v3662 = vadd.f32 %v3475, %v3567
  %v3663 = vadd.f32 %v3476, %v3608
  %v3664 = vadd.f32 %v3477, %v3610
  %v3665 = vadd.f32 %v3478, %v3651
  %v3666 = vadd.f32 %v3479, %v3653
  %v3667 = vld [vmem:[%s5] sm:$0xff]
  %v3668 = vld [vmem:[%s5 + $0x8] sm:$0xff]
  %3670 = vset.pattern.permute.xlu0 0
  %3671 = vperm.xlu0 %3670, %v3667
  %v3672 = vpop.permute.xlu0 %3671
  %3675 = vset.pattern.permute.xlu0 0
  %3676 = vperm.xlu0 %3675, %v3668
  %v3677 = vpop.permute.xlu0 %3676
  %v3679 = vadd.f32 %v3655, %v3672
  %v3680 = vadd.f32 %v3656, %v3672
  %v3681 = vadd.f32 %v3657, %v3672
  %v3682 = vadd.f32 %v3658, %v3672
  %v3683 = vadd.f32 %v3659, %v3672
  %v3684 = vadd.f32 %v3660, %v3672
  %v3685 = vadd.f32 %v3661, %v3677
  %v3686 = vadd.f32 %v3662, %v3677
  %v3687 = vadd.f32 %v3663, %v3677
  %v3688 = vadd.f32 %v3664, %v3677
  %v3689 = vadd.f32 %v3665, %v3677
  %v3690 = vadd.f32 %v3666, %v3677
  %v3691 = vmul.f32 %v3679, 0.2
  %v3692 = vmul.f32 %v3680, 0.2
  %v3693 = vmul.f32 %v3681, 0.2
  %v3694 = vmul.f32 %v3682, 0.2
  %v3695 = vmul.f32 %v3683, 0.2
  %v3696 = vmul.f32 %v3684, 0.2
  %v3697 = vmul.f32 %v3685, 0.2
  %v3698 = vmul.f32 %v3686, 0.2
  %v3699 = vmul.f32 %v3687, 0.2
  %v3700 = vmul.f32 %v3688, 0.2
  %v3701 = vmul.f32 %v3689, 0.2
  %v3702 = vmul.f32 %v3690, 0.2
  %v3703 = vmax.f32 %v3679, %v3691
  %v3704 = vmax.f32 %v3680, %v3692
  %v3705 = vmax.f32 %v3681, %v3693
  %v3706 = vmax.f32 %v3682, %v3694
  %v3707 = vmax.f32 %v3683, %v3695
  %v3708 = vmax.f32 %v3684, %v3696
  %v3709 = vmax.f32 %v3685, %v3697
  %v3710 = vmax.f32 %v3686, %v3698
  %v3711 = vmax.f32 %v3687, %v3699
  %v3712 = vmax.f32 %v3688, %v3700
  %v3713 = vmax.f32 %v3689, %v3701
  %v3714 = vmax.f32 %v3690, %v3702
  %3715 = vst [vmem:[%s7] sm:$0xff] %v3703
  %3716 = vst [vmem:[%s7 + $0x8] sm:$0xff] %v3704
  %3717 = vst [vmem:[%s7 + $0x10] sm:$0xff] %v3705
  %3718 = vst [vmem:[%s7 + $0x18] sm:$0xff] %v3706
  %3719 = vst [vmem:[%s7 + $0x20] sm:$0xff] %v3707
  %3720 = vst [vmem:[%s7 + $0x28] sm:$0xff] %v3708
  %3721 = vst [vmem:[%s7 + $0x30] sm:$0xff] %v3709
  %3722 = vst [vmem:[%s7 + $0x38] sm:$0xff] %v3710
  %3723 = vst [vmem:[%s7 + $0x40] sm:$0xff] %v3711
  %3724 = vst [vmem:[%s7 + $0x48] sm:$0xff] %v3712
  %3725 = vst [vmem:[%s7 + $0x50] sm:$0xff] %v3713
  %3726 = vst [vmem:[%s7 + $0x58] sm:$0xff] %v3714
  // Predicated region
  $region30: #{basic_block_pallas.1} parent=0 // pred_check
    _
  $region31: #{basic_block_pallas.1} parent=0 // pred_check_branch
    %3728 = sbr.rel (0) target = $region33
  $region32: #{basic_block_pallas.1} parent=0 // pred_region
    _
  $region33: #{basic_block_pallas.1} parent=0 // pred_fallthru
    _
  // Predicated region
  $region34: #{basic_block_pallas.1} parent=0 // pred_check
    _
  $region35: #{basic_block_pallas.1} parent=0 // pred_check_branch
    %3730 = sbr.rel (0) target = $region37
  $region36: #{basic_block_pallas.1} parent=0 // pred_region
    _
  $region37: #{basic_block_pallas.1} parent=0 // pred_fallthru
    _

</llo_original>
